<compile_context>
chip_gen: v6e
topology: v6e:2x2x1
jax: 0.10.0
libtpu: 0.0.40
codegen_flags: <defaults>
</compile_context>

<pallas_src>
import math
import functools

import jax
import jax.numpy as jnp
import numpy as np
from jax.experimental import pallas as pl
from jax.experimental.pallas import tpu as pltpu

LN_EPS = 1e-5
NEG_INF = -1e30


def _layer_norm(x, gamma, beta):
    mu = jnp.mean(x, axis=-1, keepdims=True)
    var = jnp.mean((x - mu) ** 2, axis=-1, keepdims=True)
    return (x - mu) * jax.lax.rsqrt(var + LN_EPS) * gamma + beta


def encoder_kernel(x_ref, mask_ref, wq_ref, bq_ref, wk_ref, bk_ref,
                   wv_ref, bv_ref, wo_ref, bo_ref, g0_ref, be0_ref,
                   w1_ref, b1_ref, w2_ref, b2_ref, g1_ref, be1_ref,
                   o_ref, *, num_heads):
    B, S, D = x_ref.shape
    Dh = D // num_heads

    # Fold batch into matmul rows for all dense layers / LayerNorms.
    x2 = x_ref[...].reshape(B * S, D)          # (B*S, D) — leading-dim merge only
    mask = mask_ref[...]                       # (S, S) additive causal bias

    # ---- multi-head attention (per-head weights prepped on host) ----
    attn = None
    for h in range(num_heads):                 # static, unrolled (H is small)
        qh = (jnp.dot(x2, wq_ref[h], preferred_element_type=jnp.float32)
              + bq_ref[h]).reshape(B, S, Dh)   # scale already folded into Wq/bq
        kh = (jnp.dot(x2, wk_ref[h], preferred_element_type=jnp.float32)
              + bk_ref[h]).reshape(B, S, Dh)
        vh = (jnp.dot(x2, wv_ref[h], preferred_element_type=jnp.float32)
              + bv_ref[h]).reshape(B, S, Dh)

        s = jnp.einsum('bqd,bkd->bqk', qh, kh,
                       preferred_element_type=jnp.float32) + mask    # (B,S,S)
        m = jnp.max(s, axis=-1, keepdims=True)
        p = jnp.exp(s - m)
        denom = jnp.sum(p, axis=-1, keepdims=True)
        r = pl.reciprocal(denom, approx=True)  # EUP slot, not VPU divide
        r = r * (2.0 - denom * r)              # one Newton step -> ~f32 exact
        p = p * r

        av = jnp.einsum('bqk,bkd->bqd', p, vh,
                        preferred_element_type=jnp.float32)          # (B,S,Dh)
        contrib = jnp.dot(av.reshape(B * S, Dh), wo_ref[h],
                          preferred_element_type=jnp.float32)        # (B*S, D)
        attn = contrib if attn is None else attn + contrib
    attn = attn + bo_ref[...]

    # ---- residual + LN0 ----
    y = _layer_norm(x2 + attn, g0_ref[...], be0_ref[...])

    # ---- FFN: Linear -> ReLU -> Linear ----
    h1 = jnp.maximum(
        jnp.dot(y, w1_ref[...], preferred_element_type=jnp.float32) + b1_ref[...],
        0.0)
    h2 = jnp.dot(h1, w2_ref[...], preferred_element_type=jnp.float32) + b2_ref[...]

    # ---- residual + LN1 ----
    out = _layer_norm(y + h2, g1_ref[...], be1_ref[...])
    o_ref[...] = out.reshape(B, S, D).astype(o_ref.dtype)


def encoder_forward(x, params, num_heads):
    """x: (B, S, D) float32. params in the 'fused' PyTorch-like layout."""
    (wqkv, bqkv, wo, bo, g0, be0, w1, b1, w2, b2, g1, be1) = params
    B, S, D = x.shape
    H = num_heads
    Dh = D // H
    scale = 1.0 / math.sqrt(Dh)

    # Host-side layout plumbing: per-head weight slabs (no in-kernel lane
    # slicing), scale folded into Q, additive causal mask precomputed.
    def per_head_w(w):          # (D, D) -> (H, D, Dh)
        return w.reshape(D, H, Dh).transpose(1, 0, 2)

    def per_head_b(b):          # (1, D) -> (H, 1, Dh)
        return b.reshape(H, Dh)[:, None, :]

    wq, wk, wv = wqkv[:, :D], wqkv[:, D:2 * D], wqkv[:, 2 * D:]
    bq, bk, bv = bqkv[:, :D], bqkv[:, D:2 * D], bqkv[:, 2 * D:]
    wq_h = per_head_w(wq * scale)
    wk_h = per_head_w(wk)
    wv_h = per_head_w(wv)
    bq_h = per_head_b(bq * scale)
    bk_h = per_head_b(bk)
    bv_h = per_head_b(bv)
    wo_h = wo.reshape(H, Dh, D)          # rows h*Dh:(h+1)*Dh of out_proj.weight.T

    mask_bias = jnp.asarray(
        np.triu(np.ones((S, S), dtype=np.float32), k=1) * NEG_INF,
        dtype=jnp.float32)

    inputs = (x, mask_bias, wq_h, bq_h, wk_h, bk_h, wv_h, bv_h,
              wo_h, bo, g0, be0, w1, b1, w2, b2, g1, be1)

    def full_spec(shape):
        n = len(shape)
        return pl.BlockSpec(shape, lambda i: (0,) * n)

    in_specs = [full_spec(a.shape) for a in inputs]

    kern = functools.partial(encoder_kernel, num_heads=H)
    return pl.pallas_call(
        kern,
        out_shape=jax.ShapeDtypeStruct((B, S, D), x.dtype),
        grid=(1,),                           # single step: whole problem fits VMEM
        in_specs=in_specs,
        out_specs=pl.BlockSpec((B, S, D), lambda i: (0, 0, 0)),
        compiler_params=pltpu.CompilerParams(
            dimension_semantics=("arbitrary",)),
    )(*inputs)


def reference_forward(x, params, num_heads):
    """Pure-JAX reference mirroring torch.nn.MultiheadAttention (eval mode)."""
    (wqkv, bqkv, wo, bo, g0, be0, w1, b1, w2, b2, g1, be1) = params
    B, S, D = x.shape
    Dh = D // num_heads
    qkv = x @ wqkv + bqkv                                  # (B,S,3D)
    q, k, v = qkv[..., :D], qkv[..., D:2 * D], qkv[..., 2 * D:]
    q = q.reshape(B, S, num_heads, Dh).transpose(0, 2, 1, 3) / math.sqrt(Dh)
    k = k.reshape(B, S, num_heads, Dh).transpose(0, 2, 1, 3)
    v = v.reshape(B, S, num_heads, Dh).transpose(0, 2, 1, 3)
    s = jnp.einsum("bhqd,bhkd->bhqk", q, k)
    mask = np.triu(np.ones((S, S)), k=1).astype(bool)
    s = jnp.where(mask[None, None], NEG_INF, s)
    p = jax.nn.softmax(s, axis=-1)
    attn = jnp.einsum("bhqk,bhkd->bhqd", p, v).transpose(0, 2, 1, 3).reshape(B, S, D)
    attn = attn @ wo + bo
    y = _layer_norm(x + attn, g0, be0)
    h = jnp.maximum(y @ w1 + b1, 0.0) @ w2 + b2
    return _layer_norm(y + h, g1, be1)


if __name__ == "__main__":
    B, S, D, H = 2, 8, 32, 4          # window_size = seq = 8, dim = 32, heads = 4
    key = jax.random.PRNGKey(0)
    keys = jax.random.split(key, 8)

    x = jax.random.normal(keys[0], (B, S, D), dtype=jnp.float32)

    # Deterministic parameter init (shapes from nn.MultiheadAttention / FFN / LayerNorm).
    sc = 0.1
    wqkv = sc * jax.random.normal(keys[1], (D, 3 * D), dtype=jnp.float32)   # in_proj_weight.T
    bqkv = sc * jax.random.normal(keys[2], (1, 3 * D), dtype=jnp.float32)   # in_proj_bias
    wo   = sc * jax.random.normal(keys[3], (D, D), dtype=jnp.float32)       # out_proj.weight.T
    bo   = sc * jax.random.normal(keys[4], (1, D), dtype=jnp.float32)
    w1   = sc * jax.random.normal(keys[5], (D, D), dtype=jnp.float32)       # FFN linear1.weight.T
    b1   = sc * jax.random.normal(keys[6], (1, D), dtype=jnp.float32)
    w2   = sc * jax.random.normal(keys[7], (D, D), dtype=jnp.float32)       # FFN linear2.weight.T
    b2   = jnp.zeros((1, D), dtype=jnp.float32)
    g0   = jnp.ones((1, D), dtype=jnp.float32)   # LayerNorm 0 weight
    be0  = jnp.zeros((1, D), dtype=jnp.float32)  # LayerNorm 0 bias
    g1   = jnp.ones((1, D), dtype=jnp.float32)   # LayerNorm 1 weight
    be1  = jnp.zeros((1, D), dtype=jnp.float32)  # LayerNorm 1 bias

    params = (wqkv, bqkv, wo, bo, g0, be0, w1, b1, w2, b2, g1, be1)

    out = encoder_forward(x, params, num_heads=H)
    out = jax.block_until_ready(out)

    ref = reference_forward(x, params, num_heads=H)
    np.testing.assert_allclose(np.asarray(out), np.asarray(ref), rtol=1e-3, atol=1e-3)

    print("KERNEL_OK")
</pallas_src>

<mosaic_0001>
module attributes {stable_mosaic.version = 11 : i64} {
  func.func @encoder_kernel(%arg0: i32, %arg1: memref<2x8x32xf32, #tpu.memory_space<vmem>>, %arg2: memref<8x8xf32, #tpu.memory_space<vmem>>, %arg3: memref<4x32x8xf32, #tpu.memory_space<vmem>>, %arg4: memref<4x1x8xf32, #tpu.memory_space<vmem>>, %arg5: memref<4x32x8xf32, #tpu.memory_space<vmem>>, %arg6: memref<4x1x8xf32, #tpu.memory_space<vmem>>, %arg7: memref<4x32x8xf32, #tpu.memory_space<vmem>>, %arg8: memref<4x1x8xf32, #tpu.memory_space<vmem>>, %arg9: memref<4x8x32xf32, #tpu.memory_space<vmem>>, %arg10: memref<1x32xf32, #tpu.memory_space<vmem>>, %arg11: memref<1x32xf32, #tpu.memory_space<vmem>>, %arg12: memref<1x32xf32, #tpu.memory_space<vmem>>, %arg13: memref<32x32xf32, #tpu.memory_space<vmem>>, %arg14: memref<1x32xf32, #tpu.memory_space<vmem>>, %arg15: memref<32x32xf32, #tpu.memory_space<vmem>>, %arg16: memref<1x32xf32, #tpu.memory_space<vmem>>, %arg17: memref<1x32xf32, #tpu.memory_space<vmem>>, %arg18: memref<1x32xf32, #tpu.memory_space<vmem>>, %arg19: memref<2x8x32xf32, #tpu.memory_space<vmem>>) attributes {dimension_semantics = [#tpu.dimension_semantics<arbitrary>], iteration_bounds = array<i64: 1>, scalar_prefetch = 0 : i64, scratch_operands = 0 : i64, tpu.core_type = #tpu.core_type<tc>, window_params = [{pipeline_mode = #tpu.pipeline_mode<synchronous>, transform_indices = @transform_0, window_bounds = array<i64: 2, 8, 32>}, {pipeline_mode = #tpu.pipeline_mode<synchronous>, transform_indices = @transform_1, window_bounds = array<i64: 8, 8>}, {pipeline_mode = #tpu.pipeline_mode<synchronous>, transform_indices = @transform_2, window_bounds = array<i64: 4, 32, 8>}, {pipeline_mode = #tpu.pipeline_mode<synchronous>, transform_indices = @transform_3, window_bounds = array<i64: 4, 1, 8>}, {pipeline_mode = #tpu.pipeline_mode<synchronous>, transform_indices = @transform_4, window_bounds = array<i64: 4, 32, 8>}, {pipeline_mode = #tpu.pipeline_mode<synchronous>, transform_indices = @transform_5, window_bounds = array<i64: 4, 1, 8>}, {pipeline_mode = #tpu.pipeline_mode<synchronous>, transform_indices = @transform_6, window_bounds = array<i64: 4, 32, 8>}, {pipeline_mode = #tpu.pipeline_mode<synchronous>, transform_indices = @transform_7, window_bounds = array<i64: 4, 1, 8>}, {pipeline_mode = #tpu.pipeline_mode<synchronous>, transform_indices = @transform_8, window_bounds = array<i64: 4, 8, 32>}, {pipeline_mode = #tpu.pipeline_mode<synchronous>, transform_indices = @transform_9, window_bounds = array<i64: 1, 32>}, {pipeline_mode = #tpu.pipeline_mode<synchronous>, transform_indices = @transform_10, window_bounds = array<i64: 1, 32>}, {pipeline_mode = #tpu.pipeline_mode<synchronous>, transform_indices = @transform_11, window_bounds = array<i64: 1, 32>}, {pipeline_mode = #tpu.pipeline_mode<synchronous>, transform_indices = @transform_12, window_bounds = array<i64: 32, 32>}, {pipeline_mode = #tpu.pipeline_mode<synchronous>, transform_indices = @transform_13, window_bounds = array<i64: 1, 32>}, {pipeline_mode = #tpu.pipeline_mode<synchronous>, transform_indices = @transform_14, window_bounds = array<i64: 32, 32>}, {pipeline_mode = #tpu.pipeline_mode<synchronous>, transform_indices = @transform_15, window_bounds = array<i64: 1, 32>}, {pipeline_mode = #tpu.pipeline_mode<synchronous>, transform_indices = @transform_16, window_bounds = array<i64: 1, 32>}, {pipeline_mode = #tpu.pipeline_mode<synchronous>, transform_indices = @transform_17, window_bounds = array<i64: 1, 32>}, {pipeline_mode = #tpu.pipeline_mode<synchronous>, transform_indices = @transform_18, window_bounds = array<i64: 2, 8, 32>}]} {
    %c0 = arith.constant 0 : index
    %c0_0 = arith.constant 0 : index
    %c0_1 = arith.constant 0 : index
    %0 = vector.load %arg1[%c0, %c0_0, %c0_1] : memref<2x8x32xf32, #tpu.memory_space<vmem>>, vector<2x8x32xf32>
    %1 = vector.shape_cast %0 : vector<2x8x32xf32> to vector<16x32xf32>
    %c0_2 = arith.constant 0 : index
    %c0_3 = arith.constant 0 : index
    %2 = vector.load %arg2[%c0_2, %c0_3] : memref<8x8xf32, #tpu.memory_space<vmem>>, vector<8x8xf32>
    %c0_4 = arith.constant 0 : index
    %c0_5 = arith.constant 0 : index
    %c0_6 = arith.constant 0 : index
    %3 = vector.load %arg3[%c0_4, %c0_5, %c0_6] : memref<4x32x8xf32, #tpu.memory_space<vmem>>, vector<1x32x8xf32>
    %4 = vector.shape_cast %3 : vector<1x32x8xf32> to vector<32x8xf32>
    %cst = arith.constant dense<0.000000e+00> : vector<16x8xf32>
    %5 = tpu.matmul %1, %4, %cst {dimension_numbers = #tpu.dot_dimension_numbers<[1], [0], [0], [1], [0, 0, 1, 1], [], []>} : vector<16x32xf32>, vector<32x8xf32>, vector<16x8xf32> -> vector<16x8xf32>
    %c0_7 = arith.constant 0 : index
    %c0_8 = arith.constant 0 : index
    %c0_9 = arith.constant 0 : index
    %6 = vector.load %arg4[%c0_7, %c0_8, %c0_9] : memref<4x1x8xf32, #tpu.memory_space<vmem>>, vector<1x1x8xf32>
    %7 = vector.shape_cast %6 : vector<1x1x8xf32> to vector<1x8xf32>
    %8 = vector.broadcast %7 : vector<1x8xf32> to vector<16x8xf32>
    %9 = arith.addf %5, %8 : vector<16x8xf32>
    %10 = vector.shape_cast %9 : vector<16x8xf32> to vector<2x8x8xf32>
    %c0_10 = arith.constant 0 : index
    %c0_11 = arith.constant 0 : index
    %c0_12 = arith.constant 0 : index
    %11 = vector.load %arg5[%c0_10, %c0_11, %c0_12] : memref<4x32x8xf32, #tpu.memory_space<vmem>>, vector<1x32x8xf32>
    %12 = vector.shape_cast %11 : vector<1x32x8xf32> to vector<32x8xf32>
    %cst_13 = arith.constant dense<0.000000e+00> : vector<16x8xf32>
    %13 = tpu.matmul %1, %12, %cst_13 {dimension_numbers = #tpu.dot_dimension_numbers<[1], [0], [0], [1], [0, 0, 1, 1], [], []>} : vector<16x32xf32>, vector<32x8xf32>, vector<16x8xf32> -> vector<16x8xf32>
    %c0_14 = arith.constant 0 : index
    %c0_15 = arith.constant 0 : index
    %c0_16 = arith.constant 0 : index
    %14 = vector.load %arg6[%c0_14, %c0_15, %c0_16] : memref<4x1x8xf32, #tpu.memory_space<vmem>>, vector<1x1x8xf32>
    %15 = vector.shape_cast %14 : vector<1x1x8xf32> to vector<1x8xf32>
    %16 = vector.broadcast %15 : vector<1x8xf32> to vector<16x8xf32>
    %17 = arith.addf %13, %16 : vector<16x8xf32>
    %18 = vector.shape_cast %17 : vector<16x8xf32> to vector<2x8x8xf32>
    %c0_17 = arith.constant 0 : index
    %c0_18 = arith.constant 0 : index
    %c0_19 = arith.constant 0 : index
    %19 = vector.load %arg7[%c0_17, %c0_18, %c0_19] : memref<4x32x8xf32, #tpu.memory_space<vmem>>, vector<1x32x8xf32>
    %20 = vector.shape_cast %19 : vector<1x32x8xf32> to vector<32x8xf32>
    %cst_20 = arith.constant dense<0.000000e+00> : vector<16x8xf32>
    %21 = tpu.matmul %1, %20, %cst_20 {dimension_numbers = #tpu.dot_dimension_numbers<[1], [0], [0], [1], [0, 0, 1, 1], [], []>} : vector<16x32xf32>, vector<32x8xf32>, vector<16x8xf32> -> vector<16x8xf32>
    %c0_21 = arith.constant 0 : index
    %c0_22 = arith.constant 0 : index
    %c0_23 = arith.constant 0 : index
    %22 = vector.load %arg8[%c0_21, %c0_22, %c0_23] : memref<4x1x8xf32, #tpu.memory_space<vmem>>, vector<1x1x8xf32>
    %23 = vector.shape_cast %22 : vector<1x1x8xf32> to vector<1x8xf32>
    %24 = vector.broadcast %23 : vector<1x8xf32> to vector<16x8xf32>
    %25 = arith.addf %21, %24 : vector<16x8xf32>
    %26 = vector.shape_cast %25 : vector<16x8xf32> to vector<2x8x8xf32>
    "tpu.trace_start"() <{level = 10 : i32, message = "bqd,bkd->bqk"}> : () -> ()
    %cst_24 = arith.constant dense<0.000000e+00> : vector<2x8x8xf32>
    %27 = tpu.matmul %10, %18, %cst_24 {dimension_numbers = #tpu.dot_dimension_numbers<[2], [2], [1], [1], [0, 0, 0, 1, 1, 1], [0], [0]>} : vector<2x8x8xf32>, vector<2x8x8xf32>, vector<2x8x8xf32> -> vector<2x8x8xf32>
    "tpu.trace_stop"() : () -> ()
    %28 = vector.shape_cast %2 : vector<8x8xf32> to vector<1x8x8xf32>
    %29 = vector.broadcast %28 : vector<1x8x8xf32> to vector<2x8x8xf32>
    %30 = arith.addf %27, %29 : vector<2x8x8xf32>
    %cst_25 = arith.constant dense<0xFF800000> : vector<2x8xf32>
    %31 = vector.multi_reduction <maximumf>, %30, %cst_25 [2] : vector<2x8x8xf32> to vector<2x8xf32>
    %32 = vector.shape_cast %31 : vector<2x8xf32> to vector<2x8x1xf32>
    %33 = vector.broadcast %32 : vector<2x8x1xf32> to vector<2x8x8xf32>
    %34 = arith.subf %30, %33 : vector<2x8x8xf32>
    %35 = math.exp %34 : vector<2x8x8xf32>
    %cst_26 = arith.constant dense<0.000000e+00> : vector<2x8xf32>
    %36 = vector.multi_reduction <add>, %35, %cst_26 [2] : vector<2x8x8xf32> to vector<2x8xf32>
    %37 = vector.shape_cast %36 : vector<2x8xf32> to vector<2x8x1xf32>
    %38 = tpu.reciprocal %37 {approx = true} : vector<2x8x1xf32> -> vector<2x8x1xf32>
    %39 = arith.mulf %37, %38 : vector<2x8x1xf32>
    %cst_27 = arith.constant 2.000000e+00 : f32
    %40 = vector.broadcast %cst_27 : f32 to vector<2x8x1xf32>
    %41 = arith.subf %40, %39 : vector<2x8x1xf32>
    %42 = arith.mulf %38, %41 : vector<2x8x1xf32>
    %43 = vector.broadcast %42 : vector<2x8x1xf32> to vector<2x8x8xf32>
    %44 = arith.mulf %35, %43 : vector<2x8x8xf32>
    "tpu.trace_start"() <{level = 10 : i32, message = "bqk,bkd->bqd"}> : () -> ()
    %cst_28 = arith.constant dense<0.000000e+00> : vector<2x8x8xf32>
    %45 = tpu.matmul %44, %26, %cst_28 {dimension_numbers = #tpu.dot_dimension_numbers<[2], [1], [1], [2], [0, 0, 0, 1, 1, 2], [0], [0]>} : vector<2x8x8xf32>, vector<2x8x8xf32>, vector<2x8x8xf32> -> vector<2x8x8xf32>
    "tpu.trace_stop"() : () -> ()
    %46 = vector.shape_cast %45 : vector<2x8x8xf32> to vector<16x8xf32>
    %c0_29 = arith.constant 0 : index
    %c0_30 = arith.constant 0 : index
    %c0_31 = arith.constant 0 : index
    %47 = vector.load %arg9[%c0_29, %c0_30, %c0_31] : memref<4x8x32xf32, #tpu.memory_space<vmem>>, vector<1x8x32xf32>
    %48 = vector.shape_cast %47 : vector<1x8x32xf32> to vector<8x32xf32>
    %cst_32 = arith.constant dense<0.000000e+00> : vector<16x32xf32>
    %49 = tpu.matmul %46, %48, %cst_32 {dimension_numbers = #tpu.dot_dimension_numbers<[1], [0], [0], [1], [0, 0, 1, 1], [], []>} : vector<16x8xf32>, vector<8x32xf32>, vector<16x32xf32> -> vector<16x32xf32>
    %c1 = arith.constant 1 : index
    %c0_33 = arith.constant 0 : index
    %c0_34 = arith.constant 0 : index
    %50 = vector.load %arg3[%c1, %c0_33, %c0_34] : memref<4x32x8xf32, #tpu.memory_space<vmem>>, vector<1x32x8xf32>
    %51 = vector.shape_cast %50 : vector<1x32x8xf32> to vector<32x8xf32>
    %cst_35 = arith.constant dense<0.000000e+00> : vector<16x8xf32>
    %52 = tpu.matmul %1, %51, %cst_35 {dimension_numbers = #tpu.dot_dimension_numbers<[1], [0], [0], [1], [0, 0, 1, 1], [], []>} : vector<16x32xf32>, vector<32x8xf32>, vector<16x8xf32> -> vector<16x8xf32>
    %c1_36 = arith.constant 1 : index
    %c0_37 = arith.constant 0 : index
    %c0_38 = arith.constant 0 : index
    %53 = vector.load %arg4[%c1_36, %c0_37, %c0_38] : memref<4x1x8xf32, #tpu.memory_space<vmem>>, vector<1x1x8xf32>
    %54 = vector.shape_cast %53 : vector<1x1x8xf32> to vector<1x8xf32>
    %55 = vector.broadcast %54 : vector<1x8xf32> to vector<16x8xf32>
    %56 = arith.addf %52, %55 : vector<16x8xf32>
    %57 = vector.shape_cast %56 : vector<16x8xf32> to vector<2x8x8xf32>
    %c1_39 = arith.constant 1 : index
    %c0_40 = arith.constant 0 : index
    %c0_41 = arith.constant 0 : index
    %58 = vector.load %arg5[%c1_39, %c0_40, %c0_41] : memref<4x32x8xf32, #tpu.memory_space<vmem>>, vector<1x32x8xf32>
    %59 = vector.shape_cast %58 : vector<1x32x8xf32> to vector<32x8xf32>
    %cst_42 = arith.constant dense<0.000000e+00> : vector<16x8xf32>
    %60 = tpu.matmul %1, %59, %cst_42 {dimension_numbers = #tpu.dot_dimension_numbers<[1], [0], [0], [1], [0, 0, 1, 1], [], []>} : vector<16x32xf32>, vector<32x8xf32>, vector<16x8xf32> -> vector<16x8xf32>
    %c1_43 = arith.constant 1 : index
    %c0_44 = arith.constant 0 : index
    %c0_45 = arith.constant 0 : index
    %61 = vector.load %arg6[%c1_43, %c0_44, %c0_45] : memref<4x1x8xf32, #tpu.memory_space<vmem>>, vector<1x1x8xf32>
    %62 = vector.shape_cast %61 : vector<1x1x8xf32> to vector<1x8xf32>
    %63 = vector.broadcast %62 : vector<1x8xf32> to vector<16x8xf32>
    %64 = arith.addf %60, %63 : vector<16x8xf32>
    %65 = vector.shape_cast %64 : vector<16x8xf32> to vector<2x8x8xf32>
    %c1_46 = arith.constant 1 : index
    %c0_47 = arith.constant 0 : index
    %c0_48 = arith.constant 0 : index
    %66 = vector.load %arg7[%c1_46, %c0_47, %c0_48] : memref<4x32x8xf32, #tpu.memory_space<vmem>>, vector<1x32x8xf32>
    %67 = vector.shape_cast %66 : vector<1x32x8xf32> to vector<32x8xf32>
    %cst_49 = arith.constant dense<0.000000e+00> : vector<16x8xf32>
    %68 = tpu.matmul %1, %67, %cst_49 {dimension_numbers = #tpu.dot_dimension_numbers<[1], [0], [0], [1], [0, 0, 1, 1], [], []>} : vector<16x32xf32>, vector<32x8xf32>, vector<16x8xf32> -> vector<16x8xf32>
    %c1_50 = arith.constant 1 : index
    %c0_51 = arith.constant 0 : index
    %c0_52 = arith.constant 0 : index
    %69 = vector.load %arg8[%c1_50, %c0_51, %c0_52] : memref<4x1x8xf32, #tpu.memory_space<vmem>>, vector<1x1x8xf32>
    %70 = vector.shape_cast %69 : vector<1x1x8xf32> to vector<1x8xf32>
    %71 = vector.broadcast %70 : vector<1x8xf32> to vector<16x8xf32>
    %72 = arith.addf %68, %71 : vector<16x8xf32>
    %73 = vector.shape_cast %72 : vector<16x8xf32> to vector<2x8x8xf32>
    "tpu.trace_start"() <{level = 10 : i32, message = "bqd,bkd->bqk"}> : () -> ()
    %cst_53 = arith.constant dense<0.000000e+00> : vector<2x8x8xf32>
    %74 = tpu.matmul %57, %65, %cst_53 {dimension_numbers = #tpu.dot_dimension_numbers<[2], [2], [1], [1], [0, 0, 0, 1, 1, 1], [0], [0]>} : vector<2x8x8xf32>, vector<2x8x8xf32>, vector<2x8x8xf32> -> vector<2x8x8xf32>
    "tpu.trace_stop"() : () -> ()
    %75 = vector.shape_cast %2 : vector<8x8xf32> to vector<1x8x8xf32>
    %76 = vector.broadcast %75 : vector<1x8x8xf32> to vector<2x8x8xf32>
    %77 = arith.addf %74, %76 : vector<2x8x8xf32>
    %cst_54 = arith.constant dense<0xFF800000> : vector<2x8xf32>
    %78 = vector.multi_reduction <maximumf>, %77, %cst_54 [2] : vector<2x8x8xf32> to vector<2x8xf32>
    %79 = vector.shape_cast %78 : vector<2x8xf32> to vector<2x8x1xf32>
    %80 = vector.broadcast %79 : vector<2x8x1xf32> to vector<2x8x8xf32>
    %81 = arith.subf %77, %80 : vector<2x8x8xf32>
    %82 = math.exp %81 : vector<2x8x8xf32>
    %cst_55 = arith.constant dense<0.000000e+00> : vector<2x8xf32>
    %83 = vector.multi_reduction <add>, %82, %cst_55 [2] : vector<2x8x8xf32> to vector<2x8xf32>
    %84 = vector.shape_cast %83 : vector<2x8xf32> to vector<2x8x1xf32>
    %85 = tpu.reciprocal %84 {approx = true} : vector<2x8x1xf32> -> vector<2x8x1xf32>
    %86 = arith.mulf %84, %85 : vector<2x8x1xf32>
    %cst_56 = arith.constant 2.000000e+00 : f32
    %87 = vector.broadcast %cst_56 : f32 to vector<2x8x1xf32>
    %88 = arith.subf %87, %86 : vector<2x8x1xf32>
    %89 = arith.mulf %85, %88 : vector<2x8x1xf32>
    %90 = vector.broadcast %89 : vector<2x8x1xf32> to vector<2x8x8xf32>
    %91 = arith.mulf %82, %90 : vector<2x8x8xf32>
    "tpu.trace_start"() <{level = 10 : i32, message = "bqk,bkd->bqd"}> : () -> ()
    %cst_57 = arith.constant dense<0.000000e+00> : vector<2x8x8xf32>
    %92 = tpu.matmul %91, %73, %cst_57 {dimension_numbers = #tpu.dot_dimension_numbers<[2], [1], [1], [2], [0, 0, 0, 1, 1, 2], [0], [0]>} : vector<2x8x8xf32>, vector<2x8x8xf32>, vector<2x8x8xf32> -> vector<2x8x8xf32>
    "tpu.trace_stop"() : () -> ()
    %93 = vector.shape_cast %92 : vector<2x8x8xf32> to vector<16x8xf32>
    %c1_58 = arith.constant 1 : index
    %c0_59 = arith.constant 0 : index
    %c0_60 = arith.constant 0 : index
    %94 = vector.load %arg9[%c1_58, %c0_59, %c0_60] : memref<4x8x32xf32, #tpu.memory_space<vmem>>, vector<1x8x32xf32>
    %95 = vector.shape_cast %94 : vector<1x8x32xf32> to vector<8x32xf32>
    %cst_61 = arith.constant dense<0.000000e+00> : vector<16x32xf32>
    %96 = tpu.matmul %93, %95, %cst_61 {dimension_numbers = #tpu.dot_dimension_numbers<[1], [0], [0], [1], [0, 0, 1, 1], [], []>} : vector<16x8xf32>, vector<8x32xf32>, vector<16x32xf32> -> vector<16x32xf32>
    %97 = arith.addf %49, %96 : vector<16x32xf32>
    %c2 = arith.constant 2 : index
    %c0_62 = arith.constant 0 : index
    %c0_63 = arith.constant 0 : index
    %98 = vector.load %arg3[%c2, %c0_62, %c0_63] : memref<4x32x8xf32, #tpu.memory_space<vmem>>, vector<1x32x8xf32>
    %99 = vector.shape_cast %98 : vector<1x32x8xf32> to vector<32x8xf32>
    %cst_64 = arith.constant dense<0.000000e+00> : vector<16x8xf32>
    %100 = tpu.matmul %1, %99, %cst_64 {dimension_numbers = #tpu.dot_dimension_numbers<[1], [0], [0], [1], [0, 0, 1, 1], [], []>} : vector<16x32xf32>, vector<32x8xf32>, vector<16x8xf32> -> vector<16x8xf32>
    %c2_65 = arith.constant 2 : index
    %c0_66 = arith.constant 0 : index
    %c0_67 = arith.constant 0 : index
    %101 = vector.load %arg4[%c2_65, %c0_66, %c0_67] : memref<4x1x8xf32, #tpu.memory_space<vmem>>, vector<1x1x8xf32>
    %102 = vector.shape_cast %101 : vector<1x1x8xf32> to vector<1x8xf32>
    %103 = vector.broadcast %102 : vector<1x8xf32> to vector<16x8xf32>
    %104 = arith.addf %100, %103 : vector<16x8xf32>
    %105 = vector.shape_cast %104 : vector<16x8xf32> to vector<2x8x8xf32>
    %c2_68 = arith.constant 2 : index
    %c0_69 = arith.constant 0 : index
    %c0_70 = arith.constant 0 : index
    %106 = vector.load %arg5[%c2_68, %c0_69, %c0_70] : memref<4x32x8xf32, #tpu.memory_space<vmem>>, vector<1x32x8xf32>
    %107 = vector.shape_cast %106 : vector<1x32x8xf32> to vector<32x8xf32>
    %cst_71 = arith.constant dense<0.000000e+00> : vector<16x8xf32>
    %108 = tpu.matmul %1, %107, %cst_71 {dimension_numbers = #tpu.dot_dimension_numbers<[1], [0], [0], [1], [0, 0, 1, 1], [], []>} : vector<16x32xf32>, vector<32x8xf32>, vector<16x8xf32> -> vector<16x8xf32>
    %c2_72 = arith.constant 2 : index
    %c0_73 = arith.constant 0 : index
    %c0_74 = arith.constant 0 : index
    %109 = vector.load %arg6[%c2_72, %c0_73, %c0_74] : memref<4x1x8xf32, #tpu.memory_space<vmem>>, vector<1x1x8xf32>
    %110 = vector.shape_cast %109 : vector<1x1x8xf32> to vector<1x8xf32>
    %111 = vector.broadcast %110 : vector<1x8xf32> to vector<16x8xf32>
    %112 = arith.addf %108, %111 : vector<16x8xf32>
    %113 = vector.shape_cast %112 : vector<16x8xf32> to vector<2x8x8xf32>
    %c2_75 = arith.constant 2 : index
    %c0_76 = arith.constant 0 : index
    %c0_77 = arith.constant 0 : index
    %114 = vector.load %arg7[%c2_75, %c0_76, %c0_77] : memref<4x32x8xf32, #tpu.memory_space<vmem>>, vector<1x32x8xf32>
    %115 = vector.shape_cast %114 : vector<1x32x8xf32> to vector<32x8xf32>
    %cst_78 = arith.constant dense<0.000000e+00> : vector<16x8xf32>
    %116 = tpu.matmul %1, %115, %cst_78 {dimension_numbers = #tpu.dot_dimension_numbers<[1], [0], [0], [1], [0, 0, 1, 1], [], []>} : vector<16x32xf32>, vector<32x8xf32>, vector<16x8xf32> -> vector<16x8xf32>
    %c2_79 = arith.constant 2 : index
    %c0_80 = arith.constant 0 : index
    %c0_81 = arith.constant 0 : index
    %117 = vector.load %arg8[%c2_79, %c0_80, %c0_81] : memref<4x1x8xf32, #tpu.memory_space<vmem>>, vector<1x1x8xf32>
    %118 = vector.shape_cast %117 : vector<1x1x8xf32> to vector<1x8xf32>
    %119 = vector.broadcast %118 : vector<1x8xf32> to vector<16x8xf32>
    %120 = arith.addf %116, %119 : vector<16x8xf32>
    %121 = vector.shape_cast %120 : vector<16x8xf32> to vector<2x8x8xf32>
    "tpu.trace_start"() <{level = 10 : i32, message = "bqd,bkd->bqk"}> : () -> ()
    %cst_82 = arith.constant dense<0.000000e+00> : vector<2x8x8xf32>
    %122 = tpu.matmul %105, %113, %cst_82 {dimension_numbers = #tpu.dot_dimension_numbers<[2], [2], [1], [1], [0, 0, 0, 1, 1, 1], [0], [0]>} : vector<2x8x8xf32>, vector<2x8x8xf32>, vector<2x8x8xf32> -> vector<2x8x8xf32>
    "tpu.trace_stop"() : () -> ()
    %123 = vector.shape_cast %2 : vector<8x8xf32> to vector<1x8x8xf32>
    %124 = vector.broadcast %123 : vector<1x8x8xf32> to vector<2x8x8xf32>
    %125 = arith.addf %122, %124 : vector<2x8x8xf32>
    %cst_83 = arith.constant dense<0xFF800000> : vector<2x8xf32>
    %126 = vector.multi_reduction <maximumf>, %125, %cst_83 [2] : vector<2x8x8xf32> to vector<2x8xf32>
    %127 = vector.shape_cast %126 : vector<2x8xf32> to vector<2x8x1xf32>
    %128 = vector.broadcast %127 : vector<2x8x1xf32> to vector<2x8x8xf32>
    %129 = arith.subf %125, %128 : vector<2x8x8xf32>
    %130 = math.exp %129 : vector<2x8x8xf32>
    %cst_84 = arith.constant dense<0.000000e+00> : vector<2x8xf32>
    %131 = vector.multi_reduction <add>, %130, %cst_84 [2] : vector<2x8x8xf32> to vector<2x8xf32>
    %132 = vector.shape_cast %131 : vector<2x8xf32> to vector<2x8x1xf32>
    %133 = tpu.reciprocal %132 {approx = true} : vector<2x8x1xf32> -> vector<2x8x1xf32>
    %134 = arith.mulf %132, %133 : vector<2x8x1xf32>
    %cst_85 = arith.constant 2.000000e+00 : f32
    %135 = vector.broadcast %cst_85 : f32 to vector<2x8x1xf32>
    %136 = arith.subf %135, %134 : vector<2x8x1xf32>
    %137 = arith.mulf %133, %136 : vector<2x8x1xf32>
    %138 = vector.broadcast %137 : vector<2x8x1xf32> to vector<2x8x8xf32>
    %139 = arith.mulf %130, %138 : vector<2x8x8xf32>
    "tpu.trace_start"() <{level = 10 : i32, message = "bqk,bkd->bqd"}> : () -> ()
    %cst_86 = arith.constant dense<0.000000e+00> : vector<2x8x8xf32>
    %140 = tpu.matmul %139, %121, %cst_86 {dimension_numbers = #tpu.dot_dimension_numbers<[2], [1], [1], [2], [0, 0, 0, 1, 1, 2], [0], [0]>} : vector<2x8x8xf32>, vector<2x8x8xf32>, vector<2x8x8xf32> -> vector<2x8x8xf32>
    "tpu.trace_stop"() : () -> ()
    %141 = vector.shape_cast %140 : vector<2x8x8xf32> to vector<16x8xf32>
    %c2_87 = arith.constant 2 : index
    %c0_88 = arith.constant 0 : index
    %c0_89 = arith.constant 0 : index
    %142 = vector.load %arg9[%c2_87, %c0_88, %c0_89] : memref<4x8x32xf32, #tpu.memory_space<vmem>>, vector<1x8x32xf32>
    %143 = vector.shape_cast %142 : vector<1x8x32xf32> to vector<8x32xf32>
    %cst_90 = arith.constant dense<0.000000e+00> : vector<16x32xf32>
    %144 = tpu.matmul %141, %143, %cst_90 {dimension_numbers = #tpu.dot_dimension_numbers<[1], [0], [0], [1], [0, 0, 1, 1], [], []>} : vector<16x8xf32>, vector<8x32xf32>, vector<16x32xf32> -> vector<16x32xf32>
    %145 = arith.addf %97, %144 : vector<16x32xf32>
    %c3 = arith.constant 3 : index
    %c0_91 = arith.constant 0 : index
    %c0_92 = arith.constant 0 : index
    %146 = vector.load %arg3[%c3, %c0_91, %c0_92] : memref<4x32x8xf32, #tpu.memory_space<vmem>>, vector<1x32x8xf32>
    %147 = vector.shape_cast %146 : vector<1x32x8xf32> to vector<32x8xf32>
    %cst_93 = arith.constant dense<0.000000e+00> : vector<16x8xf32>
    %148 = tpu.matmul %1, %147, %cst_93 {dimension_numbers = #tpu.dot_dimension_numbers<[1], [0], [0], [1], [0, 0, 1, 1], [], []>} : vector<16x32xf32>, vector<32x8xf32>, vector<16x8xf32> -> vector<16x8xf32>
    %c3_94 = arith.constant 3 : index
    %c0_95 = arith.constant 0 : index
    %c0_96 = arith.constant 0 : index
    %149 = vector.load %arg4[%c3_94, %c0_95, %c0_96] : memref<4x1x8xf32, #tpu.memory_space<vmem>>, vector<1x1x8xf32>
    %150 = vector.shape_cast %149 : vector<1x1x8xf32> to vector<1x8xf32>
    %151 = vector.broadcast %150 : vector<1x8xf32> to vector<16x8xf32>
    %152 = arith.addf %148, %151 : vector<16x8xf32>
    %153 = vector.shape_cast %152 : vector<16x8xf32> to vector<2x8x8xf32>
    %c3_97 = arith.constant 3 : index
    %c0_98 = arith.constant 0 : index
    %c0_99 = arith.constant 0 : index
    %154 = vector.load %arg5[%c3_97, %c0_98, %c0_99] : memref<4x32x8xf32, #tpu.memory_space<vmem>>, vector<1x32x8xf32>
    %155 = vector.shape_cast %154 : vector<1x32x8xf32> to vector<32x8xf32>
    %cst_100 = arith.constant dense<0.000000e+00> : vector<16x8xf32>
    %156 = tpu.matmul %1, %155, %cst_100 {dimension_numbers = #tpu.dot_dimension_numbers<[1], [0], [0], [1], [0, 0, 1, 1], [], []>} : vector<16x32xf32>, vector<32x8xf32>, vector<16x8xf32> -> vector<16x8xf32>
    %c3_101 = arith.constant 3 : index
    %c0_102 = arith.constant 0 : index
    %c0_103 = arith.constant 0 : index
    %157 = vector.load %arg6[%c3_101, %c0_102, %c0_103] : memref<4x1x8xf32, #tpu.memory_space<vmem>>, vector<1x1x8xf32>
    %158 = vector.shape_cast %157 : vector<1x1x8xf32> to vector<1x8xf32>
    %159 = vector.broadcast %158 : vector<1x8xf32> to vector<16x8xf32>
    %160 = arith.addf %156, %159 : vector<16x8xf32>
    %161 = vector.shape_cast %160 : vector<16x8xf32> to vector<2x8x8xf32>
    %c3_104 = arith.constant 3 : index
    %c0_105 = arith.constant 0 : index
    %c0_106 = arith.constant 0 : index
    %162 = vector.load %arg7[%c3_104, %c0_105, %c0_106] : memref<4x32x8xf32, #tpu.memory_space<vmem>>, vector<1x32x8xf32>
    %163 = vector.shape_cast %162 : vector<1x32x8xf32> to vector<32x8xf32>
    %cst_107 = arith.constant dense<0.000000e+00> : vector<16x8xf32>
    %164 = tpu.matmul %1, %163, %cst_107 {dimension_numbers = #tpu.dot_dimension_numbers<[1], [0], [0], [1], [0, 0, 1, 1], [], []>} : vector<16x32xf32>, vector<32x8xf32>, vector<16x8xf32> -> vector<16x8xf32>
    %c3_108 = arith.constant 3 : index
    %c0_109 = arith.constant 0 : index
    %c0_110 = arith.constant 0 : index
    %165 = vector.load %arg8[%c3_108, %c0_109, %c0_110] : memref<4x1x8xf32, #tpu.memory_space<vmem>>, vector<1x1x8xf32>
    %166 = vector.shape_cast %165 : vector<1x1x8xf32> to vector<1x8xf32>
    %167 = vector.broadcast %166 : vector<1x8xf32> to vector<16x8xf32>
    %168 = arith.addf %164, %167 : vector<16x8xf32>
    %169 = vector.shape_cast %168 : vector<16x8xf32> to vector<2x8x8xf32>
    "tpu.trace_start"() <{level = 10 : i32, message = "bqd,bkd->bqk"}> : () -> ()
    %cst_111 = arith.constant dense<0.000000e+00> : vector<2x8x8xf32>
    %170 = tpu.matmul %153, %161, %cst_111 {dimension_numbers = #tpu.dot_dimension_numbers<[2], [2], [1], [1], [0, 0, 0, 1, 1, 1], [0], [0]>} : vector<2x8x8xf32>, vector<2x8x8xf32>, vector<2x8x8xf32> -> vector<2x8x8xf32>
    "tpu.trace_stop"() : () -> ()
    %171 = vector.shape_cast %2 : vector<8x8xf32> to vector<1x8x8xf32>
    %172 = vector.broadcast %171 : vector<1x8x8xf32> to vector<2x8x8xf32>
    %173 = arith.addf %170, %172 : vector<2x8x8xf32>
    %cst_112 = arith.constant dense<0xFF800000> : vector<2x8xf32>
    %174 = vector.multi_reduction <maximumf>, %173, %cst_112 [2] : vector<2x8x8xf32> to vector<2x8xf32>
    %175 = vector.shape_cast %174 : vector<2x8xf32> to vector<2x8x1xf32>
    %176 = vector.broadcast %175 : vector<2x8x1xf32> to vector<2x8x8xf32>
    %177 = arith.subf %173, %176 : vector<2x8x8xf32>
    %178 = math.exp %177 : vector<2x8x8xf32>
    %cst_113 = arith.constant dense<0.000000e+00> : vector<2x8xf32>
    %179 = vector.multi_reduction <add>, %178, %cst_113 [2] : vector<2x8x8xf32> to vector<2x8xf32>
    %180 = vector.shape_cast %179 : vector<2x8xf32> to vector<2x8x1xf32>
    %181 = tpu.reciprocal %180 {approx = true} : vector<2x8x1xf32> -> vector<2x8x1xf32>
    %182 = arith.mulf %180, %181 : vector<2x8x1xf32>
    %cst_114 = arith.constant 2.000000e+00 : f32
    %183 = vector.broadcast %cst_114 : f32 to vector<2x8x1xf32>
    %184 = arith.subf %183, %182 : vector<2x8x1xf32>
    %185 = arith.mulf %181, %184 : vector<2x8x1xf32>
    %186 = vector.broadcast %185 : vector<2x8x1xf32> to vector<2x8x8xf32>
    %187 = arith.mulf %178, %186 : vector<2x8x8xf32>
    "tpu.trace_start"() <{level = 10 : i32, message = "bqk,bkd->bqd"}> : () -> ()
    %cst_115 = arith.constant dense<0.000000e+00> : vector<2x8x8xf32>
    %188 = tpu.matmul %187, %169, %cst_115 {dimension_numbers = #tpu.dot_dimension_numbers<[2], [1], [1], [2], [0, 0, 0, 1, 1, 2], [0], [0]>} : vector<2x8x8xf32>, vector<2x8x8xf32>, vector<2x8x8xf32> -> vector<2x8x8xf32>
    "tpu.trace_stop"() : () -> ()
    %189 = vector.shape_cast %188 : vector<2x8x8xf32> to vector<16x8xf32>
    %c3_116 = arith.constant 3 : index
    %c0_117 = arith.constant 0 : index
    %c0_118 = arith.constant 0 : index
    %190 = vector.load %arg9[%c3_116, %c0_117, %c0_118] : memref<4x8x32xf32, #tpu.memory_space<vmem>>, vector<1x8x32xf32>
    %191 = vector.shape_cast %190 : vector<1x8x32xf32> to vector<8x32xf32>
    %cst_119 = arith.constant dense<0.000000e+00> : vector<16x32xf32>
    %192 = tpu.matmul %189, %191, %cst_119 {dimension_numbers = #tpu.dot_dimension_numbers<[1], [0], [0], [1], [0, 0, 1, 1], [], []>} : vector<16x8xf32>, vector<8x32xf32>, vector<16x32xf32> -> vector<16x32xf32>
    %193 = arith.addf %145, %192 : vector<16x32xf32>
    %c0_120 = arith.constant 0 : index
    %c0_121 = arith.constant 0 : index
    %194 = vector.load %arg10[%c0_120, %c0_121] : memref<1x32xf32, #tpu.memory_space<vmem>>, vector<1x32xf32>
    %195 = vector.broadcast %194 : vector<1x32xf32> to vector<16x32xf32>
    %196 = arith.addf %193, %195 : vector<16x32xf32>
    %197 = arith.addf %1, %196 : vector<16x32xf32>
    %c0_122 = arith.constant 0 : index
    %c0_123 = arith.constant 0 : index
    %198 = vector.load %arg11[%c0_122, %c0_123] : memref<1x32xf32, #tpu.memory_space<vmem>>, vector<1x32xf32>
    %c0_124 = arith.constant 0 : index
    %c0_125 = arith.constant 0 : index
    %199 = vector.load %arg12[%c0_124, %c0_125] : memref<1x32xf32, #tpu.memory_space<vmem>>, vector<1x32xf32>
    %cst_126 = arith.constant dense<0.000000e+00> : vector<16xf32>
    %200 = vector.multi_reduction <add>, %197, %cst_126 [1] : vector<16x32xf32> to vector<16xf32>
    %201 = vector.shape_cast %200 : vector<16xf32> to vector<16x1xf32>
    %cst_127 = arith.constant 3.200000e+01 : f32
    %202 = vector.broadcast %cst_127 : f32 to vector<16x1xf32>
    %203 = arith.divf %201, %202 : vector<16x1xf32>
    %204 = vector.broadcast %203 : vector<16x1xf32> to vector<16x32xf32>
    %205 = arith.subf %197, %204 : vector<16x32xf32>
    %206 = arith.mulf %205, %205 : vector<16x32xf32>
    %cst_128 = arith.constant dense<0.000000e+00> : vector<16xf32>
    %207 = vector.multi_reduction <add>, %206, %cst_128 [1] : vector<16x32xf32> to vector<16xf32>
    %208 = vector.shape_cast %207 : vector<16xf32> to vector<16x1xf32>
    %cst_129 = arith.constant 3.200000e+01 : f32
    %209 = vector.broadcast %cst_129 : f32 to vector<16x1xf32>
    %210 = arith.divf %208, %209 : vector<16x1xf32>
    %211 = vector.broadcast %203 : vector<16x1xf32> to vector<16x32xf32>
    %212 = arith.subf %197, %211 : vector<16x32xf32>
    %cst_130 = arith.constant 9.99999974E-6 : f32
    %213 = vector.broadcast %cst_130 : f32 to vector<16x1xf32>
    %214 = arith.addf %210, %213 : vector<16x1xf32>
    %215 = math.rsqrt %214 : vector<16x1xf32>
    %216 = vector.broadcast %215 : vector<16x1xf32> to vector<16x32xf32>
    %217 = arith.mulf %212, %216 : vector<16x32xf32>
    %218 = vector.broadcast %198 : vector<1x32xf32> to vector<16x32xf32>
    %219 = arith.mulf %217, %218 : vector<16x32xf32>
    %220 = vector.broadcast %199 : vector<1x32xf32> to vector<16x32xf32>
    %221 = arith.addf %219, %220 : vector<16x32xf32>
    %c0_131 = arith.constant 0 : index
    %c0_132 = arith.constant 0 : index
    %222 = vector.load %arg13[%c0_131, %c0_132] : memref<32x32xf32, #tpu.memory_space<vmem>>, vector<32x32xf32>
    %cst_133 = arith.constant dense<0.000000e+00> : vector<16x32xf32>
    %223 = tpu.matmul %221, %222, %cst_133 {dimension_numbers = #tpu.dot_dimension_numbers<[1], [0], [0], [1], [0, 0, 1, 1], [], []>} : vector<16x32xf32>, vector<32x32xf32>, vector<16x32xf32> -> vector<16x32xf32>
    %c0_134 = arith.constant 0 : index
    %c0_135 = arith.constant 0 : index
    %224 = vector.load %arg14[%c0_134, %c0_135] : memref<1x32xf32, #tpu.memory_space<vmem>>, vector<1x32xf32>
    %225 = vector.broadcast %224 : vector<1x32xf32> to vector<16x32xf32>
    %226 = arith.addf %223, %225 : vector<16x32xf32>
    %cst_136 = arith.constant 0.000000e+00 : f32
    %227 = vector.broadcast %cst_136 : f32 to vector<16x32xf32>
    %228 = arith.maximumf %226, %227 : vector<16x32xf32>
    %c0_137 = arith.constant 0 : index
    %c0_138 = arith.constant 0 : index
    %229 = vector.load %arg15[%c0_137, %c0_138] : memref<32x32xf32, #tpu.memory_space<vmem>>, vector<32x32xf32>
    %cst_139 = arith.constant dense<0.000000e+00> : vector<16x32xf32>
    %230 = tpu.matmul %228, %229, %cst_139 {dimension_numbers = #tpu.dot_dimension_numbers<[1], [0], [0], [1], [0, 0, 1, 1], [], []>} : vector<16x32xf32>, vector<32x32xf32>, vector<16x32xf32> -> vector<16x32xf32>
    %c0_140 = arith.constant 0 : index
    %c0_141 = arith.constant 0 : index
    %231 = vector.load %arg16[%c0_140, %c0_141] : memref<1x32xf32, #tpu.memory_space<vmem>>, vector<1x32xf32>
    %232 = vector.broadcast %231 : vector<1x32xf32> to vector<16x32xf32>
    %233 = arith.addf %230, %232 : vector<16x32xf32>
    %234 = arith.addf %221, %233 : vector<16x32xf32>
    %c0_142 = arith.constant 0 : index
    %c0_143 = arith.constant 0 : index
    %235 = vector.load %arg17[%c0_142, %c0_143] : memref<1x32xf32, #tpu.memory_space<vmem>>, vector<1x32xf32>
    %c0_144 = arith.constant 0 : index
    %c0_145 = arith.constant 0 : index
    %236 = vector.load %arg18[%c0_144, %c0_145] : memref<1x32xf32, #tpu.memory_space<vmem>>, vector<1x32xf32>
    %cst_146 = arith.constant dense<0.000000e+00> : vector<16xf32>
    %237 = vector.multi_reduction <add>, %234, %cst_146 [1] : vector<16x32xf32> to vector<16xf32>
    %238 = vector.shape_cast %237 : vector<16xf32> to vector<16x1xf32>
    %cst_147 = arith.constant 3.200000e+01 : f32
    %239 = vector.broadcast %cst_147 : f32 to vector<16x1xf32>
    %240 = arith.divf %238, %239 : vector<16x1xf32>
    %241 = vector.broadcast %240 : vector<16x1xf32> to vector<16x32xf32>
    %242 = arith.subf %234, %241 : vector<16x32xf32>
    %243 = arith.mulf %242, %242 : vector<16x32xf32>
    %cst_148 = arith.constant dense<0.000000e+00> : vector<16xf32>
    %244 = vector.multi_reduction <add>, %243, %cst_148 [1] : vector<16x32xf32> to vector<16xf32>
    %245 = vector.shape_cast %244 : vector<16xf32> to vector<16x1xf32>
    %cst_149 = arith.constant 3.200000e+01 : f32
    %246 = vector.broadcast %cst_149 : f32 to vector<16x1xf32>
    %247 = arith.divf %245, %246 : vector<16x1xf32>
    %248 = vector.broadcast %240 : vector<16x1xf32> to vector<16x32xf32>
    %249 = arith.subf %234, %248 : vector<16x32xf32>
    %cst_150 = arith.constant 9.99999974E-6 : f32
    %250 = vector.broadcast %cst_150 : f32 to vector<16x1xf32>
    %251 = arith.addf %247, %250 : vector<16x1xf32>
    %252 = math.rsqrt %251 : vector<16x1xf32>
    %253 = vector.broadcast %252 : vector<16x1xf32> to vector<16x32xf32>
    %254 = arith.mulf %249, %253 : vector<16x32xf32>
    %255 = vector.broadcast %235 : vector<1x32xf32> to vector<16x32xf32>
    %256 = arith.mulf %254, %255 : vector<16x32xf32>
    %257 = vector.broadcast %236 : vector<1x32xf32> to vector<16x32xf32>
    %258 = arith.addf %256, %257 : vector<16x32xf32>
    %259 = vector.shape_cast %258 : vector<16x32xf32> to vector<2x8x32xf32>
    %c0_151 = arith.constant 0 : index
    %c0_152 = arith.constant 0 : index
    %c0_153 = arith.constant 0 : index
    %260 = vector.load %arg19[%c0_151, %c0_152, %c0_153] : memref<2x8x32xf32, #tpu.memory_space<vmem>>, vector<2x8x32xf32>
    tpu.vector_store %arg19[%c0_151, %c0_152, %c0_153], %259 {strides = array<i32>} : memref<2x8x32xf32, #tpu.memory_space<vmem>>, vector<2x8x32xf32>,
    return
  }
  func.func @transform_0(%arg0: i32) -> (i32, i32, i32) {
    %c0_i32 = arith.constant 0 : i32
    %c0_i32_0 = arith.constant 0 : i32
    %c0_i32_1 = arith.constant 0 : i32
    %c0_i32_2 = arith.constant 0 : i32
    return %c0_i32, %c0_i32_0, %c0_i32_1 : i32, i32, i32
  }
  func.func @transform_1(%arg0: i32) -> (i32, i32) {
    %c0_i32 = arith.constant 0 : i32
    %c0_i32_0 = arith.constant 0 : i32
    %c0_i32_1 = arith.constant 0 : i32
    return %c0_i32, %c0_i32_0 : i32, i32
  }
  func.func @transform_2(%arg0: i32) -> (i32, i32, i32) {
    %c0_i32 = arith.constant 0 : i32
    %c0_i32_0 = arith.constant 0 : i32
    %c0_i32_1 = arith.constant 0 : i32
    %c0_i32_2 = arith.constant 0 : i32
    return %c0_i32, %c0_i32_0, %c0_i32_1 : i32, i32, i32
  }
  func.func @transform_3(%arg0: i32) -> (i32, i32, i32) {
    %c0_i32 = arith.constant 0 : i32
    %c0_i32_0 = arith.constant 0 : i32
    %c0_i32_1 = arith.constant 0 : i32
    %c0_i32_2 = arith.constant 0 : i32
    return %c0_i32, %c0_i32_0, %c0_i32_1 : i32, i32, i32
  }
  func.func @transform_4(%arg0: i32) -> (i32, i32, i32) {
    %c0_i32 = arith.constant 0 : i32
    %c0_i32_0 = arith.constant 0 : i32
    %c0_i32_1 = arith.constant 0 : i32
    %c0_i32_2 = arith.constant 0 : i32
    return %c0_i32, %c0_i32_0, %c0_i32_1 : i32, i32, i32
  }
  func.func @transform_5(%arg0: i32) -> (i32, i32, i32) {
    %c0_i32 = arith.constant 0 : i32
    %c0_i32_0 = arith.constant 0 : i32
    %c0_i32_1 = arith.constant 0 : i32
    %c0_i32_2 = arith.constant 0 : i32
    return %c0_i32, %c0_i32_0, %c0_i32_1 : i32, i32, i32
  }
  func.func @transform_6(%arg0: i32) -> (i32, i32, i32) {
    %c0_i32 = arith.constant 0 : i32
    %c0_i32_0 = arith.constant 0 : i32
    %c0_i32_1 = arith.constant 0 : i32
    %c0_i32_2 = arith.constant 0 : i32
    return %c0_i32, %c0_i32_0, %c0_i32_1 : i32, i32, i32
  }
  func.func @transform_7(%arg0: i32) -> (i32, i32, i32) {
    %c0_i32 = arith.constant 0 : i32
    %c0_i32_0 = arith.constant 0 : i32
    %c0_i32_1 = arith.constant 0 : i32
    %c0_i32_2 = arith.constant 0 : i32
    return %c0_i32, %c0_i32_0, %c0_i32_1 : i32, i32, i32
  }
  func.func @transform_8(%arg0: i32) -> (i32, i32, i32) {
    %c0_i32 = arith.constant 0 : i32
    %c0_i32_0 = arith.constant 0 : i32
    %c0_i32_1 = arith.constant 0 : i32
    %c0_i32_2 = arith.constant 0 : i32
    return %c0_i32, %c0_i32_0, %c0_i32_1 : i32, i32, i32
  }
  func.func @transform_9(%arg0: i32) -> (i32, i32) {
    %c0_i32 = arith.constant 0 : i32
    %c0_i32_0 = arith.constant 0 : i32
    %c0_i32_1 = arith.constant 0 : i32
    return %c0_i32, %c0_i32_0 : i32, i32
  }
  func.func @transform_10(%arg0: i32) -> (i32, i32) {
    %c0_i32 = arith.constant 0 : i32
    %c0_i32_0 = arith.constant 0 : i32
    %c0_i32_1 = arith.constant 0 : i32
    return %c0_i32, %c0_i32_0 : i32, i32
  }
  func.func @transform_11(%arg0: i32) -> (i32, i32) {
    %c0_i32 = arith.constant 0 : i32
    %c0_i32_0 = arith.constant 0 : i32
    %c0_i32_1 = arith.constant 0 : i32
    return %c0_i32, %c0_i32_0 : i32, i32
  }
  func.func @transform_12(%arg0: i32) -> (i32, i32) {
    %c0_i32 = arith.constant 0 : i32
    %c0_i32_0 = arith.constant 0 : i32
    %c0_i32_1 = arith.constant 0 : i32
    return %c0_i32, %c0_i32_0 : i32, i32
  }
  func.func @transform_13(%arg0: i32) -> (i32, i32) {
    %c0_i32 = arith.constant 0 : i32
    %c0_i32_0 = arith.constant 0 : i32
    %c0_i32_1 = arith.constant 0 : i32
    return %c0_i32, %c0_i32_0 : i32, i32
  }
  func.func @transform_14(%arg0: i32) -> (i32, i32) {
    %c0_i32 = arith.constant 0 : i32
    %c0_i32_0 = arith.constant 0 : i32
    %c0_i32_1 = arith.constant 0 : i32
    return %c0_i32, %c0_i32_0 : i32, i32
  }
  func.func @transform_15(%arg0: i32) -> (i32, i32) {
    %c0_i32 = arith.constant 0 : i32
    %c0_i32_0 = arith.constant 0 : i32
    %c0_i32_1 = arith.constant 0 : i32
    return %c0_i32, %c0_i32_0 : i32, i32
  }
  func.func @transform_16(%arg0: i32) -> (i32, i32) {
    %c0_i32 = arith.constant 0 : i32
    %c0_i32_0 = arith.constant 0 : i32
    %c0_i32_1 = arith.constant 0 : i32
    return %c0_i32, %c0_i32_0 : i32, i32
  }
  func.func @transform_17(%arg0: i32) -> (i32, i32) {
    %c0_i32 = arith.constant 0 : i32
    %c0_i32_0 = arith.constant 0 : i32
    %c0_i32_1 = arith.constant 0 : i32
    return %c0_i32, %c0_i32_0 : i32, i32
  }
  func.func @transform_18(%arg0: i32) -> (i32, i32, i32) {
    %c0_i32 = arith.constant 0 : i32
    %c0_i32_0 = arith.constant 0 : i32
    %c0_i32_1 = arith.constant 0 : i32
    %c0_i32_2 = arith.constant 0 : i32
    return %c0_i32, %c0_i32_0, %c0_i32_1 : i32, i32, i32
  }
}

</mosaic_0001>

<llo_original>
// kernel: tpu_custom_call.1
$region0: #{tpu_custom_call.1}
  #allocation0 [shape = 'u32[]', space=smem, size = 0x4, offset = 0x4, fixed_abs, tag = 'smem constant byte address 0x4 - core index']
  #allocation1 [shape = 'u32[144,128]{1,0:T(1,128)}', space=vmem, size = 0x12000, scoped, tag = 'internal scratch']
  %s0 = inlined_call_operand.vmem [shape: f32[2,8,32], index: 0, kind: input, shape index: {}]
  %s1 = inlined_call_operand.vmem [shape: f32[8,8], index: 1, kind: input, shape index: {}]
  %s2 = inlined_call_operand.vmem [shape: f32[4,32,8], index: 2, kind: input, shape index: {}]
  %s3 = inlined_call_operand.vmem [shape: f32[4,1,8], index: 3, kind: input, shape index: {}]
  %s4 = inlined_call_operand.vmem [shape: f32[4,32,8], index: 4, kind: input, shape index: {}]
  %s5 = inlined_call_operand.vmem [shape: f32[4,1,8], index: 5, kind: input, shape index: {}]
  %s6 = inlined_call_operand.vmem [shape: f32[4,32,8], index: 6, kind: input, shape index: {}]
  %s7 = inlined_call_operand.vmem [shape: f32[4,1,8], index: 7, kind: input, shape index: {}]
  %s8 = inlined_call_operand.vmem [shape: f32[4,8,32], index: 8, kind: input, shape index: {}]
  %s9 = inlined_call_operand.vmem [shape: f32[1,32], index: 9, kind: input, shape index: {}]
  %s10 = inlined_call_operand.vmem [shape: f32[1,32], index: 10, kind: input, shape index: {}]
  %s11 = inlined_call_operand.vmem [shape: f32[1,32], index: 11, kind: input, shape index: {}]
  %s12 = inlined_call_operand.vmem [shape: f32[32,32], index: 12, kind: input, shape index: {}]
  %s13 = inlined_call_operand.vmem [shape: f32[1,32], index: 13, kind: input, shape index: {}]
  %s14 = inlined_call_operand.vmem [shape: f32[32,32], index: 14, kind: input, shape index: {}]
  %s15 = inlined_call_operand.vmem [shape: f32[1,32], index: 15, kind: input, shape index: {}]
  %s16 = inlined_call_operand.vmem [shape: f32[1,32], index: 16, kind: input, shape index: {}]
  %s17 = inlined_call_operand.vmem [shape: f32[1,32], index: 17, kind: input, shape index: {}]
  %s18 = inlined_call_operand.hbm [shape: f32[2,8,32], index: 18, kind: output, shape index: {}]
  %s19 = sld [smem:[#allocation0]]
  $region82: #{tpu_custom_call.1} parent=0
    _
  %s21 = ssub.s32 1, %s19
  %s22 = scalar_select 0, %s21, %s19
  $region1: #{tpu_custom_call.1} parent=0
    #allocation2 [shape = 'u8[8192]{0}', space=vmem, size = 0x2000, scoped, tag = 'output window, operand 0, single buffered']
    #allocation3 [shape = 's32[1]{0}', space=sflag, size = 0x4, scoped, tag = 'scoped memory for tpu_custom_call.1']
    %23 = vsyncpa [#allocation3], 0
    // Predicated region
    $region2: #{tpu_custom_call.1} parent=1 // pred_check
      _
    $region3: #{tpu_custom_call.1} parent=1 // pred_check_branch
      %25 = sbr.rel (0) target = $region5
    $region4: #{tpu_custom_call.1} parent=1 // pred_region
      _
    $region5: #{tpu_custom_call.1} parent=1 // pred_fallthru
      _
    // Predicated region
    $region6: #{tpu_custom_call.1} parent=1 // pred_check
      _
    $region7: #{tpu_custom_call.1} parent=1 // pred_check_branch
      %27 = sbr.rel (0) target = $region9
    $region8: #{tpu_custom_call.1} parent=1 // pred_region
      _
    $region9: #{tpu_custom_call.1} parent=1 // pred_fallthru
      _
    // Predicated region
    $region10: #{tpu_custom_call.1} parent=1 // pred_check
      _
    $region11: #{tpu_custom_call.1} parent=1 // pred_check_branch
      %29 = sbr.rel (0) target = $region13
    $region12: #{tpu_custom_call.1} parent=1 // pred_region
      _
    $region13: #{tpu_custom_call.1} parent=1 // pred_fallthru
      _
    // Predicated region
    $region14: #{tpu_custom_call.1} parent=1 // pred_check
      _
    $region15: #{tpu_custom_call.1} parent=1 // pred_check_branch
      %31 = sbr.rel (0) target = $region17
    $region16: #{tpu_custom_call.1} parent=1 // pred_region
      _
    $region17: #{tpu_custom_call.1} parent=1 // pred_fallthru
      _
    // Predicated region
    $region18: #{tpu_custom_call.1} parent=1 // pred_check
      _
    $region19: #{tpu_custom_call.1} parent=1 // pred_check_branch
      %33 = sbr.rel (0) target = $region21
    $region20: #{tpu_custom_call.1} parent=1 // pred_region
      _
    $region21: #{tpu_custom_call.1} parent=1 // pred_fallthru
      _
    // Predicated region
    $region22: #{tpu_custom_call.1} parent=1 // pred_check
      _
    $region23: #{tpu_custom_call.1} parent=1 // pred_check_branch
      %35 = sbr.rel (0) target = $region25
    $region24: #{tpu_custom_call.1} parent=1 // pred_region
      _
    $region25: #{tpu_custom_call.1} parent=1 // pred_fallthru
      _
    // Predicated region
    $region26: #{tpu_custom_call.1} parent=1 // pred_check
      _
    $region27: #{tpu_custom_call.1} parent=1 // pred_check_branch
      %37 = sbr.rel (0) target = $region29
    $region28: #{tpu_custom_call.1} parent=1 // pred_region
      _
    $region29: #{tpu_custom_call.1} parent=1 // pred_fallthru
      _
    // Predicated region
    $region30: #{tpu_custom_call.1} parent=1 // pred_check
      _
    $region31: #{tpu_custom_call.1} parent=1 // pred_check_branch
      %39 = sbr.rel (0) target = $region33
    $region32: #{tpu_custom_call.1} parent=1 // pred_region
      _
    $region33: #{tpu_custom_call.1} parent=1 // pred_fallthru
      _
    // Predicated region
    $region34: #{tpu_custom_call.1} parent=1 // pred_check
      _
    $region35: #{tpu_custom_call.1} parent=1 // pred_check_branch
      %41 = sbr.rel (0) target = $region37
    $region36: #{tpu_custom_call.1} parent=1 // pred_region
      _
    $region37: #{tpu_custom_call.1} parent=1 // pred_fallthru
      _
    // Predicated region
    $region38: #{tpu_custom_call.1} parent=1 // pred_check
      _
    $region39: #{tpu_custom_call.1} parent=1 // pred_check_branch
      %43 = sbr.rel (0) target = $region41
    $region40: #{tpu_custom_call.1} parent=1 // pred_region
      _
    $region41: #{tpu_custom_call.1} parent=1 // pred_fallthru
      _
    // Predicated region
    $region42: #{tpu_custom_call.1} parent=1 // pred_check
      _
    $region43: #{tpu_custom_call.1} parent=1 // pred_check_branch
      %45 = sbr.rel (0) target = $region45
    $region44: #{tpu_custom_call.1} parent=1 // pred_region
      _
    $region45: #{tpu_custom_call.1} parent=1 // pred_fallthru
      _
    // Predicated region
    $region46: #{tpu_custom_call.1} parent=1 // pred_check
      _
    $region47: #{tpu_custom_call.1} parent=1 // pred_check_branch
      %47 = sbr.rel (0) target = $region49
    $region48: #{tpu_custom_call.1} parent=1 // pred_region
      _
    $region49: #{tpu_custom_call.1} parent=1 // pred_fallthru
      _
    // Predicated region
    $region50: #{tpu_custom_call.1} parent=1 // pred_check
      _
    $region51: #{tpu_custom_call.1} parent=1 // pred_check_branch
      %49 = sbr.rel (0) target = $region53
    $region52: #{tpu_custom_call.1} parent=1 // pred_region
      _
    $region53: #{tpu_custom_call.1} parent=1 // pred_fallthru
      _
    // Predicated region
    $region54: #{tpu_custom_call.1} parent=1 // pred_check
      _
    $region55: #{tpu_custom_call.1} parent=1 // pred_check_branch
      %51 = sbr.rel (0) target = $region57
    $region56: #{tpu_custom_call.1} parent=1 // pred_region
      _
    $region57: #{tpu_custom_call.1} parent=1 // pred_fallthru
      _
    // Predicated region
    $region58: #{tpu_custom_call.1} parent=1 // pred_check
      _
    $region59: #{tpu_custom_call.1} parent=1 // pred_check_branch
      %53 = sbr.rel (0) target = $region61
    $region60: #{tpu_custom_call.1} parent=1 // pred_region
      _
    $region61: #{tpu_custom_call.1} parent=1 // pred_fallthru
      _
    // Predicated region
    $region62: #{tpu_custom_call.1} parent=1 // pred_check
      _
    $region63: #{tpu_custom_call.1} parent=1 // pred_check_branch
      %55 = sbr.rel (0) target = $region65
    $region64: #{tpu_custom_call.1} parent=1 // pred_region
      _
    $region65: #{tpu_custom_call.1} parent=1 // pred_fallthru
      _
    // Predicated region
    $region66: #{tpu_custom_call.1} parent=1 // pred_check
      _
    $region67: #{tpu_custom_call.1} parent=1 // pred_check_branch
      %57 = sbr.rel (0) target = $region69
    $region68: #{tpu_custom_call.1} parent=1 // pred_region
      _
    $region69: #{tpu_custom_call.1} parent=1 // pred_fallthru
      _
    // Predicated region
    $region70: #{tpu_custom_call.1} parent=1 // pred_check
      _
    $region71: #{tpu_custom_call.1} parent=1 // pred_check_branch
      %59 = sbr.rel (0) target = $region73
    $region72: #{tpu_custom_call.1} parent=1 // pred_region
      _
    $region73: #{tpu_custom_call.1} parent=1 // pred_fallthru
      _
    %v60 = vld [vmem:[%s0] sm:$0xff]
    %v61 = vld [vmem:[%s0 + $0x8] sm:$0xff]
    %v62 = vld [vmem:[%s1] sm:$0xff]
    %v63 = vld [vmem:[%s2] sm:$0xff]
    %v64 = vld [vmem:[%s2 + $0x8] sm:$0xff]
    %v65 = vld [vmem:[%s2 + $0x10] sm:$0xff]
    %v66 = vld [vmem:[%s2 + $0x18] sm:$0xff]
    %v67 = vld [vmem:[%s3] sm:$0x1]
    %v69 = vlaneseq
    %v70 = vshrl.u32 %v69, 7
    %v71 = vsub.s32 0, %v70
    %v72 = vrot.slane %v67, %v71
    %vm74 = vcmask 261120
    %v76 = vsel %vm74, %v60, 0
    %v79 = vsel %vm74, %v61, 0
    %81 = vmatprep.subr.mxu0 0.0
    %82 = vmatpush1.msra.mxu0 0.0
    %83 = vmatprep.subr.mxu0 0.0
    %84 = vmatpush1.msra.mxu0 0.0
    %85 = vmatprep.subr.mxu0 0.0
    %86 = vmatpush1.msra.mxu0 0.0
    %87 = vmatprep.subr.mxu0 0.0
    %88 = vmatpush1.msra.mxu0 0.0
    %89 = vmatprep.subr.mxu0 0.0
    %90 = vmatpush1.msra.mxu0 0.0
    %91 = vmatprep.subr.mxu0 0.0
    %92 = vmatpush1.msra.mxu0 0.0
    %93 = vmatprep.subr.mxu0 0.0
    %94 = vmatpush1.msra.mxu0 0.0
    %95 = vmatprep.subr.mxu0 0.0
    %96 = vmatpush1.msra.mxu0 0.0
    %97 = vmatprep.subr.mxu0 0.0
    %98 = vmatpush1.msra.mxu0 0.0
    %99 = vmatprep.subr.mxu0 0.0
    %100 = vmatpush1.msra.mxu0 0.0
    %101 = vmatprep.subr.mxu0 0.0
    %102 = vmatpush1.msra.mxu0 0.0
    %103 = vmatprep.subr.mxu0 0.0
    %104 = vmatpush1.msra.mxu0 0.0
    %105 = vmatprep.subr.mxu0 0.0
    %106 = vmatpush1.msra.mxu0 %v66
    %107 = vmatprep.subr.mxu0 0.0
    %108 = vmatpush1.msra.mxu0 %v65
    %109 = vmatprep.subr.mxu0 0.0
    %110 = vmatpush1.msra.mxu0 %v64
    %111 = vmatprep.subr.mxu0 0.0
    %112 = vmatpush1.msra.mxu0 %v63
    %113 = vmatprep.subr.mxu0 0.0
    %114 = vmatpush2.msra.mxu0 0.0
    %115 = vmatprep.subr.mxu0 0.0
    %116 = vmatpush2.msra.mxu0 0.0
    %117 = vmatprep.subr.mxu0 0.0
    %118 = vmatpush2.msra.mxu0 0.0
    %119 = vmatprep.subr.mxu0 0.0
    %120 = vmatpush2.msra.mxu0 0.0
    %121 = vmatprep.subr.mxu0 0.0
    %122 = vmatpush2.msra.mxu0 0.0
    %123 = vmatprep.subr.mxu0 0.0
    %124 = vmatpush2.msra.mxu0 0.0
    %125 = vmatprep.subr.mxu0 0.0
    %126 = vmatpush2.msra.mxu0 0.0
    %127 = vmatprep.subr.mxu0 0.0
    %128 = vmatpush2.msra.mxu0 0.0
    %129 = vmatprep.subr.mxu0 0.0
    %130 = vmatpush2.msra.mxu0 0.0
    %131 = vmatprep.subr.mxu0 0.0
    %132 = vmatpush2.msra.mxu0 0.0
    %133 = vmatprep.subr.mxu0 0.0
    %134 = vmatpush2.msra.mxu0 0.0
    %135 = vmatprep.subr.mxu0 0.0
    %136 = vmatpush2.msra.mxu0 0.0
    %137 = vmatprep.subr.mxu0 0.0
    %138 = vmatpush2.msra.mxu0 0.0
    %139 = vmatprep.subr.mxu0 0.0
    %140 = vmatpush2.msra.mxu0 0.0
    %141 = vmatprep.subr.mxu0 0.0
    %142 = vmatpush2.msra.mxu0 0.0
    %143 = vmatprep.subr.mxu0 0.0
    %144 = vmatpush2.msra.mxu0 0.0
    %145 = vmatprep.mubr.f32.mxu0 0.0
    %146 = vmatmul.mubr.f32.gmra.mxu0 %v76
    %v147 = vpop.f32.mrf.mxu0
    %v148 = vadd.f32 %v72, %v147
    %v149 = vpop.f32.mrf.mxu0
    %150 = vmatprep.mubr.f32.mxu0 0.0
    %151 = vmatmul.mubr.f32.gmra.mxu0 %v79
    %v152 = vpop.f32.mrf.mxu0
    %v153 = vadd.f32 %v72, %v152
    %v154 = vpop.f32.mrf.mxu0
    %155 = vdwg.mxu0
    %v156 = vld [vmem:[%s4] sm:$0xff]
    %v157 = vld [vmem:[%s4 + $0x8] sm:$0xff]
    %v158 = vld [vmem:[%s4 + $0x10] sm:$0xff]
    %v159 = vld [vmem:[%s4 + $0x18] sm:$0xff]
    %v160 = vld [vmem:[%s5] sm:$0x1]
    %v162 = vlaneseq
    %v163 = vshrl.u32 %v162, 7
    %v164 = vsub.s32 0, %v163
    %v165 = vrot.slane %v160, %v164
    %167 = vmatprep.subr.mxu0 0.0
    %168 = vmatpush1.msra.mxu0 0.0
    %169 = vmatprep.subr.mxu0 0.0
    %170 = vmatpush1.msra.mxu0 0.0
    %171 = vmatprep.subr.mxu0 0.0
    %172 = vmatpush1.msra.mxu0 0.0
    %173 = vmatprep.subr.mxu0 0.0
    %174 = vmatpush1.msra.mxu0 0.0
    %175 = vmatprep.subr.mxu0 0.0
    %176 = vmatpush1.msra.mxu0 0.0
    %177 = vmatprep.subr.mxu0 0.0
    %178 = vmatpush1.msra.mxu0 0.0
    %179 = vmatprep.subr.mxu0 0.0
    %180 = vmatpush1.msra.mxu0 0.0
    %181 = vmatprep.subr.mxu0 0.0
    %182 = vmatpush1.msra.mxu0 0.0
    %183 = vmatprep.subr.mxu0 0.0
    %184 = vmatpush1.msra.mxu0 0.0
    %185 = vmatprep.subr.mxu0 0.0
    %186 = vmatpush1.msra.mxu0 0.0
    %187 = vmatprep.subr.mxu0 0.0
    %188 = vmatpush1.msra.mxu0 0.0
    %189 = vmatprep.subr.mxu0 0.0
    %190 = vmatpush1.msra.mxu0 0.0
    %191 = vmatprep.subr.mxu0 0.0
    %192 = vmatpush1.msra.mxu0 %v159
    %193 = vmatprep.subr.mxu0 0.0
    %194 = vmatpush1.msra.mxu0 %v158
    %195 = vmatprep.subr.mxu0 0.0
    %196 = vmatpush1.msra.mxu0 %v157
    %197 = vmatprep.subr.mxu0 0.0
    %198 = vmatpush1.msra.mxu0 %v156
    %199 = vmatprep.subr.mxu0 0.0
    %200 = vmatpush2.msra.mxu0 0.0
    %201 = vmatprep.subr.mxu0 0.0
    %202 = vmatpush2.msra.mxu0 0.0
    %203 = vmatprep.subr.mxu0 0.0
    %204 = vmatpush2.msra.mxu0 0.0
    %205 = vmatprep.subr.mxu0 0.0
    %206 = vmatpush2.msra.mxu0 0.0
    %207 = vmatprep.subr.mxu0 0.0
    %208 = vmatpush2.msra.mxu0 0.0
    %209 = vmatprep.subr.mxu0 0.0
    %210 = vmatpush2.msra.mxu0 0.0
    %211 = vmatprep.subr.mxu0 0.0
    %212 = vmatpush2.msra.mxu0 0.0
    %213 = vmatprep.subr.mxu0 0.0
    %214 = vmatpush2.msra.mxu0 0.0
    %215 = vmatprep.subr.mxu0 0.0
    %216 = vmatpush2.msra.mxu0 0.0
    %217 = vmatprep.subr.mxu0 0.0
    %218 = vmatpush2.msra.mxu0 0.0
    %219 = vmatprep.subr.mxu0 0.0
    %220 = vmatpush2.msra.mxu0 0.0
    %221 = vmatprep.subr.mxu0 0.0
    %222 = vmatpush2.msra.mxu0 0.0
    %223 = vmatprep.subr.mxu0 0.0
    %224 = vmatpush2.msra.mxu0 0.0
    %225 = vmatprep.subr.mxu0 0.0
    %226 = vmatpush2.msra.mxu0 0.0
    %227 = vmatprep.subr.mxu0 0.0
    %228 = vmatpush2.msra.mxu0 0.0
    %229 = vmatprep.subr.mxu0 0.0
    %230 = vmatpush2.msra.mxu0 0.0
    %231 = vmatprep.mubr.f32.mxu0 0.0
    %232 = vmatmul.mubr.f32.gmra.mxu0 %v76
    %v233 = vpop.f32.mrf.mxu0
    %v234 = vadd.f32 %v165, %v233
    %v235 = vpop.f32.mrf.mxu0
    %236 = vmatprep.mubr.f32.mxu0 0.0
    %237 = vmatmul.mubr.f32.gmra.mxu0 %v79
    %v238 = vpop.f32.mrf.mxu0
    %v239 = vadd.f32 %v165, %v238
    %v240 = vpop.f32.mrf.mxu0
    %241 = vdwg.mxu0
    %v242 = vld [vmem:[%s6] sm:$0xff]
    %v243 = vld [vmem:[%s6 + $0x8] sm:$0xff]
    %v244 = vld [vmem:[%s6 + $0x10] sm:$0xff]
    %v245 = vld [vmem:[%s6 + $0x18] sm:$0xff]
    %v246 = vld [vmem:[%s7] sm:$0x1]
    %v248 = vlaneseq
    %v249 = vshrl.u32 %v248, 7
    %v250 = vsub.s32 0, %v249
    %v251 = vrot.slane %v246, %v250
    %253 = vmatprep.subr.mxu0 0.0
    %254 = vmatpush1.msra.mxu0 0.0
    %255 = vmatprep.subr.mxu0 0.0
    %256 = vmatpush1.msra.mxu0 0.0
    %257 = vmatprep.subr.mxu0 0.0
    %258 = vmatpush1.msra.mxu0 0.0
    %259 = vmatprep.subr.mxu0 0.0
    %260 = vmatpush1.msra.mxu0 0.0
    %261 = vmatprep.subr.mxu0 0.0
    %262 = vmatpush1.msra.mxu0 0.0
    %263 = vmatprep.subr.mxu0 0.0
    %264 = vmatpush1.msra.mxu0 0.0
    %265 = vmatprep.subr.mxu0 0.0
    %266 = vmatpush1.msra.mxu0 0.0
    %267 = vmatprep.subr.mxu0 0.0
    %268 = vmatpush1.msra.mxu0 0.0
    %269 = vmatprep.subr.mxu0 0.0
    %270 = vmatpush1.msra.mxu0 0.0
    %271 = vmatprep.subr.mxu0 0.0
    %272 = vmatpush1.msra.mxu0 0.0
    %273 = vmatprep.subr.mxu0 0.0
    %274 = vmatpush1.msra.mxu0 0.0
    %275 = vmatprep.subr.mxu0 0.0
    %276 = vmatpush1.msra.mxu0 0.0
    %277 = vmatprep.subr.mxu0 0.0
    %278 = vmatpush1.msra.mxu0 %v245
    %279 = vmatprep.subr.mxu0 0.0
    %280 = vmatpush1.msra.mxu0 %v244
    %281 = vmatprep.subr.mxu0 0.0
    %282 = vmatpush1.msra.mxu0 %v243
    %283 = vmatprep.subr.mxu0 0.0
    %284 = vmatpush1.msra.mxu0 %v242
    %285 = vmatprep.subr.mxu0 0.0
    %286 = vmatpush2.msra.mxu0 0.0
    %287 = vmatprep.subr.mxu0 0.0
    %288 = vmatpush2.msra.mxu0 0.0
    %289 = vmatprep.subr.mxu0 0.0
    %290 = vmatpush2.msra.mxu0 0.0
    %291 = vmatprep.subr.mxu0 0.0
    %292 = vmatpush2.msra.mxu0 0.0
    %293 = vmatprep.subr.mxu0 0.0
    %294 = vmatpush2.msra.mxu0 0.0
    %295 = vmatprep.subr.mxu0 0.0
    %296 = vmatpush2.msra.mxu0 0.0
    %297 = vmatprep.subr.mxu0 0.0
    %298 = vmatpush2.msra.mxu0 0.0
    %299 = vmatprep.subr.mxu0 0.0
    %300 = vmatpush2.msra.mxu0 0.0
    %301 = vmatprep.subr.mxu0 0.0
    %302 = vmatpush2.msra.mxu0 0.0
    %303 = vmatprep.subr.mxu0 0.0
    %304 = vmatpush2.msra.mxu0 0.0
    %305 = vmatprep.subr.mxu0 0.0
    %306 = vmatpush2.msra.mxu0 0.0
    %307 = vmatprep.subr.mxu0 0.0
    %308 = vmatpush2.msra.mxu0 0.0
    %309 = vmatprep.subr.mxu0 0.0
    %310 = vmatpush2.msra.mxu0 0.0
    %311 = vmatprep.subr.mxu0 0.0
    %312 = vmatpush2.msra.mxu0 0.0
    %313 = vmatprep.subr.mxu0 0.0
    %314 = vmatpush2.msra.mxu0 0.0
    %315 = vmatprep.subr.mxu0 0.0
    %316 = vmatpush2.msra.mxu0 0.0
    %317 = vmatprep.mubr.f32.mxu0 0.0
    %318 = vmatmul.mubr.f32.gmra.mxu0 %v76
    %v319 = vpop.f32.mrf.mxu0
    %v320 = vadd.f32 %v251, %v319
    %v321 = vpop.f32.mrf.mxu0
    %322 = vmatprep.mubr.f32.mxu0 0.0
    %323 = vmatmul.mubr.f32.gmra.mxu0 %v79
    %v324 = vpop.f32.mrf.mxu0
    %v325 = vadd.f32 %v251, %v324
    %v326 = vpop.f32.mrf.mxu0
    %327 = vdwg.mxu0
    %vm328 = vcmask 64512
    %v330 = vsel %vm328, %v148, 0
    %v333 = vsel %vm328, %v234, 0
    %335 = vmatprep.subr.mxu0 0.0
    %336 = vmatpush1.xpose.msra.mxu0 0.0
    %337 = vmatprep.subr.mxu0 0.0
    %338 = vmatpush1.xpose.msra.mxu0 0.0
    %339 = vmatprep.subr.mxu0 0.0
    %340 = vmatpush1.xpose.msra.mxu0 0.0
    %341 = vmatprep.subr.mxu0 0.0
    %342 = vmatpush1.xpose.msra.mxu0 0.0
    %343 = vmatprep.subr.mxu0 0.0
    %344 = vmatpush1.xpose.msra.mxu0 0.0
    %345 = vmatprep.subr.mxu0 0.0
    %346 = vmatpush1.xpose.msra.mxu0 0.0
    %347 = vmatprep.subr.mxu0 0.0
    %348 = vmatpush1.xpose.msra.mxu0 0.0
    %349 = vmatprep.subr.mxu0 0.0
    %350 = vmatpush1.xpose.msra.mxu0 0.0
    %351 = vmatprep.subr.mxu0 0.0
    %352 = vmatpush1.xpose.msra.mxu0 0.0
    %353 = vmatprep.subr.mxu0 0.0
    %354 = vmatpush1.xpose.msra.mxu0 0.0
    %355 = vmatprep.subr.mxu0 0.0
    %356 = vmatpush1.xpose.msra.mxu0 0.0
    %357 = vmatprep.subr.mxu0 0.0
    %358 = vmatpush1.xpose.msra.mxu0 0.0
    %359 = vmatprep.subr.mxu0 0.0
    %360 = vmatpush1.xpose.msra.mxu0 0.0
    %361 = vmatprep.subr.mxu0 0.0
    %362 = vmatpush1.xpose.msra.mxu0 0.0
    %363 = vmatprep.subr.mxu0 0.0
    %364 = vmatpush1.xpose.msra.mxu0 0.0
    %365 = vmatprep.subr.mxu0 0.0
    %366 = vmatpush1.xpose.msra.mxu0 %v333
    %367 = vmatprep.subr.mxu0 0.0
    %368 = vmatpush2.xpose.msra.mxu0 0.0
    %369 = vmatprep.subr.mxu0 0.0
    %370 = vmatpush2.xpose.msra.mxu0 0.0
    %371 = vmatprep.subr.mxu0 0.0
    %372 = vmatpush2.xpose.msra.mxu0 0.0
    %373 = vmatprep.subr.mxu0 0.0
    %374 = vmatpush2.xpose.msra.mxu0 0.0
    %375 = vmatprep.subr.mxu0 0.0
    %376 = vmatpush2.xpose.msra.mxu0 0.0
    %377 = vmatprep.subr.mxu0 0.0
    %378 = vmatpush2.xpose.msra.mxu0 0.0
    %379 = vmatprep.subr.mxu0 0.0
    %380 = vmatpush2.xpose.msra.mxu0 0.0
    %381 = vmatprep.subr.mxu0 0.0
    %382 = vmatpush2.xpose.msra.mxu0 0.0
    %383 = vmatprep.subr.mxu0 0.0
    %384 = vmatpush2.xpose.msra.mxu0 0.0
    %385 = vmatprep.subr.mxu0 0.0
    %386 = vmatpush2.xpose.msra.mxu0 0.0
    %387 = vmatprep.subr.mxu0 0.0
    %388 = vmatpush2.xpose.msra.mxu0 0.0
    %389 = vmatprep.subr.mxu0 0.0
    %390 = vmatpush2.xpose.msra.mxu0 0.0
    %391 = vmatprep.subr.mxu0 0.0
    %392 = vmatpush2.xpose.msra.mxu0 0.0
    %393 = vmatprep.subr.mxu0 0.0
    %394 = vmatpush2.xpose.msra.mxu0 0.0
    %395 = vmatprep.subr.mxu0 0.0
    %396 = vmatpush2.xpose.msra.mxu0 0.0
    %397 = vmatprep.subr.mxu0 0.0
    %398 = vmatpush2.xpose.msra.mxu0 0.0
    %399 = vmatprep.mubr.f32.mxu0 0.0
    %400 = vmatmul.mubr.f32.gmra.mxu0 %v330
    %v401 = vpop.f32.mrf.mxu0
    %v402 = vadd.f32 %v62, %v401
    %v403 = vpop.f32.mrf.mxu0
    %404 = vdwg.mxu0
    %v406 = vsel %vm328, %v153, 0
    %v409 = vsel %vm328, %v239, 0
    %411 = vmatprep.subr.mxu0 0.0
    %412 = vmatpush1.xpose.msra.mxu0 0.0
    %413 = vmatprep.subr.mxu0 0.0
    %414 = vmatpush1.xpose.msra.mxu0 0.0
    %415 = vmatprep.subr.mxu0 0.0
    %416 = vmatpush1.xpose.msra.mxu0 0.0
    %417 = vmatprep.subr.mxu0 0.0
    %418 = vmatpush1.xpose.msra.mxu0 0.0
    %419 = vmatprep.subr.mxu0 0.0
    %420 = vmatpush1.xpose.msra.mxu0 0.0
    %421 = vmatprep.subr.mxu0 0.0
    %422 = vmatpush1.xpose.msra.mxu0 0.0
    %423 = vmatprep.subr.mxu0 0.0
    %424 = vmatpush1.xpose.msra.mxu0 0.0
    %425 = vmatprep.subr.mxu0 0.0
    %426 = vmatpush1.xpose.msra.mxu0 0.0
    %427 = vmatprep.subr.mxu0 0.0
    %428 = vmatpush1.xpose.msra.mxu0 0.0
    %429 = vmatprep.subr.mxu0 0.0
    %430 = vmatpush1.xpose.msra.mxu0 0.0
    %431 = vmatprep.subr.mxu0 0.0
    %432 = vmatpush1.xpose.msra.mxu0 0.0
    %433 = vmatprep.subr.mxu0 0.0
    %434 = vmatpush1.xpose.msra.mxu0 0.0
    %435 = vmatprep.subr.mxu0 0.0
    %436 = vmatpush1.xpose.msra.mxu0 0.0
    %437 = vmatprep.subr.mxu0 0.0
    %438 = vmatpush1.xpose.msra.mxu0 0.0
    %439 = vmatprep.subr.mxu0 0.0
    %440 = vmatpush1.xpose.msra.mxu0 0.0
    %441 = vmatprep.subr.mxu0 0.0
    %442 = vmatpush1.xpose.msra.mxu0 %v409
    %443 = vmatprep.subr.mxu0 0.0
    %444 = vmatpush2.xpose.msra.mxu0 0.0
    %445 = vmatprep.subr.mxu0 0.0
    %446 = vmatpush2.xpose.msra.mxu0 0.0
    %447 = vmatprep.subr.mxu0 0.0
    %448 = vmatpush2.xpose.msra.mxu0 0.0
    %449 = vmatprep.subr.mxu0 0.0
    %450 = vmatpush2.xpose.msra.mxu0 0.0
    %451 = vmatprep.subr.mxu0 0.0
    %452 = vmatpush2.xpose.msra.mxu0 0.0
    %453 = vmatprep.subr.mxu0 0.0
    %454 = vmatpush2.xpose.msra.mxu0 0.0
    %455 = vmatprep.subr.mxu0 0.0
    %456 = vmatpush2.xpose.msra.mxu0 0.0
    %457 = vmatprep.subr.mxu0 0.0
    %458 = vmatpush2.xpose.msra.mxu0 0.0
    %459 = vmatprep.subr.mxu0 0.0
    %460 = vmatpush2.xpose.msra.mxu0 0.0
    %461 = vmatprep.subr.mxu0 0.0
    %462 = vmatpush2.xpose.msra.mxu0 0.0
    %463 = vmatprep.subr.mxu0 0.0
    %464 = vmatpush2.xpose.msra.mxu0 0.0
    %465 = vmatprep.subr.mxu0 0.0
    %466 = vmatpush2.xpose.msra.mxu0 0.0
    %467 = vmatprep.subr.mxu0 0.0
    %468 = vmatpush2.xpose.msra.mxu0 0.0
    %469 = vmatprep.subr.mxu0 0.0
    %470 = vmatpush2.xpose.msra.mxu0 0.0
    %471 = vmatprep.subr.mxu0 0.0
    %472 = vmatpush2.xpose.msra.mxu0 0.0
    %473 = vmatprep.subr.mxu0 0.0
    %474 = vmatpush2.xpose.msra.mxu0 0.0
    %475 = vmatprep.mubr.f32.mxu0 0.0
    %476 = vmatmul.mubr.f32.gmra.mxu0 %v406
    %v477 = vpop.f32.mrf.mxu0
    %v478 = vadd.f32 %v62, %v477
    %v479 = vpop.f32.mrf.mxu0
    %480 = vdwg.mxu0
    %v481 = vsel %vm328, %v402, -inf
    %482 = vmax.xlane.f32.xlu0 %v481
    %v483 = vpop.xlane.xlu0 %482
    %v484 = vsel %vm328, %v478, -inf
    %485 = vmax.xlane.f32.xlu0 %v484
    %v486 = vpop.xlane.xlu0 %485
    %v487 = vsub.f32 %v402, %v483
    %v488 = vsub.f32 %v478, %v486
    %v489 = vmul.f32 %v487, 1.442695
    %v490 = vpow.pop %v489
    %v491 = vmul.f32 %v488, 1.442695
    %v492 = vpow.pop %v491
    %v493 = vsel %vm328, %v490, 0.0
    %494 = vadd.xlane.f32.xlu0 %v493
    %v495 = vpop.xlane.xlu0 %494
    %v496 = vsel %vm328, %v492, 0.0
    %497 = vadd.xlane.f32.xlu0 %v496
    %v498 = vpop.xlane.xlu0 %497
    %v499 = vrcp.pop %v495
    %v500 = vrcp.pop %v498
    %v501 = vmul.f32 %v495, %v499
    %v502 = vmul.f32 %v498, %v500
    %v503 = vsub.f32 2.0, %v501
    %v504 = vsub.f32 2.0, %v502
    %v505 = vmul.f32 %v499, %v503
    %v506 = vmul.f32 %v500, %v504
    %v507 = vmul.f32 %v490, %v505
    %v508 = vmul.f32 %v492, %v506
    %v510 = vsel %vm328, %v507, 0
    %512 = vmatprep.subr.mxu0 0.0
    %513 = vmatpush1.msra.mxu0 0.0
    %514 = vmatprep.subr.mxu0 0.0
    %515 = vmatpush1.msra.mxu0 0.0
    %516 = vmatprep.subr.mxu0 0.0
    %517 = vmatpush1.msra.mxu0 0.0
    %518 = vmatprep.subr.mxu0 0.0
    %519 = vmatpush1.msra.mxu0 0.0
    %520 = vmatprep.subr.mxu0 0.0
    %521 = vmatpush1.msra.mxu0 0.0
    %522 = vmatprep.subr.mxu0 0.0
    %523 = vmatpush1.msra.mxu0 0.0
    %524 = vmatprep.subr.mxu0 0.0
    %525 = vmatpush1.msra.mxu0 0.0
    %526 = vmatprep.subr.mxu0 0.0
    %527 = vmatpush1.msra.mxu0 0.0
    %528 = vmatprep.subr.mxu0 0.0
    %529 = vmatpush1.msra.mxu0 0.0
    %530 = vmatprep.subr.mxu0 0.0
    %531 = vmatpush1.msra.mxu0 0.0
    %532 = vmatprep.subr.mxu0 0.0
    %533 = vmatpush1.msra.mxu0 0.0
    %534 = vmatprep.subr.mxu0 0.0
    %535 = vmatpush1.msra.mxu0 0.0
    %536 = vmatprep.subr.mxu0 0.0
    %537 = vmatpush1.msra.mxu0 0.0
    %538 = vmatprep.subr.mxu0 0.0
    %539 = vmatpush1.msra.mxu0 0.0
    %540 = vmatprep.subr.mxu0 0.0
    %541 = vmatpush1.msra.mxu0 0.0
    %542 = vmatprep.subr.mxu0 0.0
    %543 = vmatpush1.msra.mxu0 %v320
    %544 = vmatprep.subr.mxu0 0.0
    %545 = vmatpush2.msra.mxu0 0.0
    %546 = vmatprep.subr.mxu0 0.0
    %547 = vmatpush2.msra.mxu0 0.0
    %548 = vmatprep.subr.mxu0 0.0
    %549 = vmatpush2.msra.mxu0 0.0
    %550 = vmatprep.subr.mxu0 0.0
    %551 = vmatpush2.msra.mxu0 0.0
    %552 = vmatprep.subr.mxu0 0.0
    %553 = vmatpush2.msra.mxu0 0.0
    %554 = vmatprep.subr.mxu0 0.0
    %555 = vmatpush2.msra.mxu0 0.0
    %556 = vmatprep.subr.mxu0 0.0
    %557 = vmatpush2.msra.mxu0 0.0
    %558 = vmatprep.subr.mxu0 0.0
    %559 = vmatpush2.msra.mxu0 0.0
    %560 = vmatprep.subr.mxu0 0.0
    %561 = vmatpush2.msra.mxu0 0.0
    %562 = vmatprep.subr.mxu0 0.0
    %563 = vmatpush2.msra.mxu0 0.0
    %564 = vmatprep.subr.mxu0 0.0
    %565 = vmatpush2.msra.mxu0 0.0
    %566 = vmatprep.subr.mxu0 0.0
    %567 = vmatpush2.msra.mxu0 0.0
    %568 = vmatprep.subr.mxu0 0.0
    %569 = vmatpush2.msra.mxu0 0.0
    %570 = vmatprep.subr.mxu0 0.0
    %571 = vmatpush2.msra.mxu0 0.0
    %572 = vmatprep.subr.mxu0 0.0
    %573 = vmatpush2.msra.mxu0 0.0
    %574 = vmatprep.subr.mxu0 0.0
    %575 = vmatpush2.msra.mxu0 0.0
    %576 = vmatprep.mubr.f32.mxu0 0.0
    %577 = vmatmul.mubr.f32.gmra.mxu0 %v510
    %v578 = vpop.f32.mrf.mxu0
    %v579 = vadd.f32 0.0, %v578
    %v580 = vpop.f32.mrf.mxu0
    %581 = vdwg.mxu0
    %v583 = vsel %vm328, %v508, 0
    %585 = vmatprep.subr.mxu0 0.0
    %586 = vmatpush1.msra.mxu0 0.0
    %587 = vmatprep.subr.mxu0 0.0
    %588 = vmatpush1.msra.mxu0 0.0
    %589 = vmatprep.subr.mxu0 0.0
    %590 = vmatpush1.msra.mxu0 0.0
    %591 = vmatprep.subr.mxu0 0.0
    %592 = vmatpush1.msra.mxu0 0.0
    %593 = vmatprep.subr.mxu0 0.0
    %594 = vmatpush1.msra.mxu0 0.0
    %595 = vmatprep.subr.mxu0 0.0
    %596 = vmatpush1.msra.mxu0 0.0
    %597 = vmatprep.subr.mxu0 0.0
    %598 = vmatpush1.msra.mxu0 0.0
    %599 = vmatprep.subr.mxu0 0.0
    %600 = vmatpush1.msra.mxu0 0.0
    %601 = vmatprep.subr.mxu0 0.0
    %602 = vmatpush1.msra.mxu0 0.0
    %603 = vmatprep.subr.mxu0 0.0
    %604 = vmatpush1.msra.mxu0 0.0
    %605 = vmatprep.subr.mxu0 0.0
    %606 = vmatpush1.msra.mxu0 0.0
    %607 = vmatprep.subr.mxu0 0.0
    %608 = vmatpush1.msra.mxu0 0.0
    %609 = vmatprep.subr.mxu0 0.0
    %610 = vmatpush1.msra.mxu0 0.0
    %611 = vmatprep.subr.mxu0 0.0
    %612 = vmatpush1.msra.mxu0 0.0
    %613 = vmatprep.subr.mxu0 0.0
    %614 = vmatpush1.msra.mxu0 0.0
    %615 = vmatprep.subr.mxu0 0.0
    %616 = vmatpush1.msra.mxu0 %v325
    %617 = vmatprep.subr.mxu0 0.0
    %618 = vmatpush2.msra.mxu0 0.0
    %619 = vmatprep.subr.mxu0 0.0
    %620 = vmatpush2.msra.mxu0 0.0
    %621 = vmatprep.subr.mxu0 0.0
    %622 = vmatpush2.msra.mxu0 0.0
    %623 = vmatprep.subr.mxu0 0.0
    %624 = vmatpush2.msra.mxu0 0.0
    %625 = vmatprep.subr.mxu0 0.0
    %626 = vmatpush2.msra.mxu0 0.0
    %627 = vmatprep.subr.mxu0 0.0
    %628 = vmatpush2.msra.mxu0 0.0
    %629 = vmatprep.subr.mxu0 0.0
    %630 = vmatpush2.msra.mxu0 0.0
    %631 = vmatprep.subr.mxu0 0.0
    %632 = vmatpush2.msra.mxu0 0.0
    %633 = vmatprep.subr.mxu0 0.0
    %634 = vmatpush2.msra.mxu0 0.0
    %635 = vmatprep.subr.mxu0 0.0
    %636 = vmatpush2.msra.mxu0 0.0
    %637 = vmatprep.subr.mxu0 0.0
    %638 = vmatpush2.msra.mxu0 0.0
    %639 = vmatprep.subr.mxu0 0.0
    %640 = vmatpush2.msra.mxu0 0.0
    %641 = vmatprep.subr.mxu0 0.0
    %642 = vmatpush2.msra.mxu0 0.0
    %643 = vmatprep.subr.mxu0 0.0
    %644 = vmatpush2.msra.mxu0 0.0
    %645 = vmatprep.subr.mxu0 0.0
    %646 = vmatpush2.msra.mxu0 0.0
    %647 = vmatprep.subr.mxu0 0.0
    %648 = vmatpush2.msra.mxu0 0.0
    %649 = vmatprep.mubr.f32.mxu0 0.0
    %650 = vmatmul.mubr.f32.gmra.mxu0 %v583
    %v651 = vpop.f32.mrf.mxu0
    %v652 = vadd.f32 0.0, %v651
    %v653 = vpop.f32.mrf.mxu0
    %654 = vdwg.mxu0
    %v655 = vld [vmem:[%s8] sm:$0xff]
    %s656 = scalar_lea.vmem %s2, 32
    %v657 = vld [vmem:[%s656] sm:$0xff]
    %v658 = vld [vmem:[%s656 + $0x8] sm:$0xff]
    %v659 = vld [vmem:[%s656 + $0x10] sm:$0xff]
    %v660 = vld [vmem:[%s656 + $0x18] sm:$0xff]
    %s661 = scalar_lea.vmem %s3, 1
    %v662 = vld [vmem:[%s661] sm:$0x1]
    %v664 = vlaneseq
    %v665 = vshrl.u32 %v664, 7
    %v666 = vsub.s32 0, %v665
    %v667 = vrot.slane %v662, %v666
    %669 = vmatprep.subr.mxu0 0.0
    %670 = vmatpush1.msra.mxu0 0.0
    %671 = vmatprep.subr.mxu0 0.0
    %672 = vmatpush1.msra.mxu0 0.0
    %673 = vmatprep.subr.mxu0 0.0
    %674 = vmatpush1.msra.mxu0 0.0
    %675 = vmatprep.subr.mxu0 0.0
    %676 = vmatpush1.msra.mxu0 0.0
    %677 = vmatprep.subr.mxu0 0.0
    %678 = vmatpush1.msra.mxu0 0.0
    %679 = vmatprep.subr.mxu0 0.0
    %680 = vmatpush1.msra.mxu0 0.0
    %681 = vmatprep.subr.mxu0 0.0
    %682 = vmatpush1.msra.mxu0 0.0
    %683 = vmatprep.subr.mxu0 0.0
    %684 = vmatpush1.msra.mxu0 0.0
    %685 = vmatprep.subr.mxu0 0.0
    %686 = vmatpush1.msra.mxu0 0.0
    %687 = vmatprep.subr.mxu0 0.0
    %688 = vmatpush1.msra.mxu0 0.0
    %689 = vmatprep.subr.mxu0 0.0
    %690 = vmatpush1.msra.mxu0 0.0
    %691 = vmatprep.subr.mxu0 0.0
    %692 = vmatpush1.msra.mxu0 0.0
    %693 = vmatprep.subr.mxu0 0.0
    %694 = vmatpush1.msra.mxu0 %v660
    %695 = vmatprep.subr.mxu0 0.0
    %696 = vmatpush1.msra.mxu0 %v659
    %697 = vmatprep.subr.mxu0 0.0
    %698 = vmatpush1.msra.mxu0 %v658
    %699 = vmatprep.subr.mxu0 0.0
    %700 = vmatpush1.msra.mxu0 %v657
    %701 = vmatprep.subr.mxu0 0.0
    %702 = vmatpush2.msra.mxu0 0.0
    %703 = vmatprep.subr.mxu0 0.0
    %704 = vmatpush2.msra.mxu0 0.0
    %705 = vmatprep.subr.mxu0 0.0
    %706 = vmatpush2.msra.mxu0 0.0
    %707 = vmatprep.subr.mxu0 0.0
    %708 = vmatpush2.msra.mxu0 0.0
    %709 = vmatprep.subr.mxu0 0.0
    %710 = vmatpush2.msra.mxu0 0.0
    %711 = vmatprep.subr.mxu0 0.0
    %712 = vmatpush2.msra.mxu0 0.0
    %713 = vmatprep.subr.mxu0 0.0
    %714 = vmatpush2.msra.mxu0 0.0
    %715 = vmatprep.subr.mxu0 0.0
    %716 = vmatpush2.msra.mxu0 0.0
    %717 = vmatprep.subr.mxu0 0.0
    %718 = vmatpush2.msra.mxu0 0.0
    %719 = vmatprep.subr.mxu0 0.0
    %720 = vmatpush2.msra.mxu0 0.0
    %721 = vmatprep.subr.mxu0 0.0
    %722 = vmatpush2.msra.mxu0 0.0
    %723 = vmatprep.subr.mxu0 0.0
    %724 = vmatpush2.msra.mxu0 0.0
    %725 = vmatprep.subr.mxu0 0.0
    %726 = vmatpush2.msra.mxu0 0.0
    %727 = vmatprep.subr.mxu0 0.0
    %728 = vmatpush2.msra.mxu0 0.0
    %729 = vmatprep.subr.mxu0 0.0
    %730 = vmatpush2.msra.mxu0 0.0
    %731 = vmatprep.subr.mxu0 0.0
    %732 = vmatpush2.msra.mxu0 0.0
    %733 = vmatprep.mubr.f32.mxu0 0.0
    %734 = vmatmul.mubr.f32.gmra.mxu0 %v76
    %v735 = vpop.f32.mrf.mxu0
    %v736 = vadd.f32 %v667, %v735
    %v737 = vpop.f32.mrf.mxu0
    %738 = vmatprep.mubr.f32.mxu0 0.0
    %739 = vmatmul.mubr.f32.gmra.mxu0 %v79
    %v740 = vpop.f32.mrf.mxu0
    %v741 = vadd.f32 %v667, %v740
    %v742 = vpop.f32.mrf.mxu0
    %743 = vdwg.mxu0
    %s744 = scalar_lea.vmem %s4, 32
    %v745 = vld [vmem:[%s744] sm:$0xff]
    %v746 = vld [vmem:[%s744 + $0x8] sm:$0xff]
    %v747 = vld [vmem:[%s744 + $0x10] sm:$0xff]
    %v748 = vld [vmem:[%s744 + $0x18] sm:$0xff]
    %s749 = scalar_lea.vmem %s5, 1
    %v750 = vld [vmem:[%s749] sm:$0x1]
    %v752 = vlaneseq
    %v753 = vshrl.u32 %v752, 7
    %v754 = vsub.s32 0, %v753
    %v755 = vrot.slane %v750, %v754
    %757 = vmatprep.subr.mxu0 0.0
    %758 = vmatpush1.msra.mxu0 0.0
    %759 = vmatprep.subr.mxu0 0.0
    %760 = vmatpush1.msra.mxu0 0.0
    %761 = vmatprep.subr.mxu0 0.0
    %762 = vmatpush1.msra.mxu0 0.0
    %763 = vmatprep.subr.mxu0 0.0
    %764 = vmatpush1.msra.mxu0 0.0
    %765 = vmatprep.subr.mxu0 0.0
    %766 = vmatpush1.msra.mxu0 0.0
    %767 = vmatprep.subr.mxu0 0.0
    %768 = vmatpush1.msra.mxu0 0.0
    %769 = vmatprep.subr.mxu0 0.0
    %770 = vmatpush1.msra.mxu0 0.0
    %771 = vmatprep.subr.mxu0 0.0
    %772 = vmatpush1.msra.mxu0 0.0
    %773 = vmatprep.subr.mxu0 0.0
    %774 = vmatpush1.msra.mxu0 0.0
    %775 = vmatprep.subr.mxu0 0.0
    %776 = vmatpush1.msra.mxu0 0.0
    %777 = vmatprep.subr.mxu0 0.0
    %778 = vmatpush1.msra.mxu0 0.0
    %779 = vmatprep.subr.mxu0 0.0
    %780 = vmatpush1.msra.mxu0 0.0
    %781 = vmatprep.subr.mxu0 0.0
    %782 = vmatpush1.msra.mxu0 %v748
    %783 = vmatprep.subr.mxu0 0.0
    %784 = vmatpush1.msra.mxu0 %v747
    %785 = vmatprep.subr.mxu0 0.0
    %786 = vmatpush1.msra.mxu0 %v746
    %787 = vmatprep.subr.mxu0 0.0
    %788 = vmatpush1.msra.mxu0 %v745
    %789 = vmatprep.subr.mxu0 0.0
    %790 = vmatpush2.msra.mxu0 0.0
    %791 = vmatprep.subr.mxu0 0.0
    %792 = vmatpush2.msra.mxu0 0.0
    %793 = vmatprep.subr.mxu0 0.0
    %794 = vmatpush2.msra.mxu0 0.0
    %795 = vmatprep.subr.mxu0 0.0
    %796 = vmatpush2.msra.mxu0 0.0
    %797 = vmatprep.subr.mxu0 0.0
    %798 = vmatpush2.msra.mxu0 0.0
    %799 = vmatprep.subr.mxu0 0.0
    %800 = vmatpush2.msra.mxu0 0.0
    %801 = vmatprep.subr.mxu0 0.0
    %802 = vmatpush2.msra.mxu0 0.0
    %803 = vmatprep.subr.mxu0 0.0
    %804 = vmatpush2.msra.mxu0 0.0
    %805 = vmatprep.subr.mxu0 0.0
    %806 = vmatpush2.msra.mxu0 0.0
    %807 = vmatprep.subr.mxu0 0.0
    %808 = vmatpush2.msra.mxu0 0.0
    %809 = vmatprep.subr.mxu0 0.0
    %810 = vmatpush2.msra.mxu0 0.0
    %811 = vmatprep.subr.mxu0 0.0
    %812 = vmatpush2.msra.mxu0 0.0
    %813 = vmatprep.subr.mxu0 0.0
    %814 = vmatpush2.msra.mxu0 0.0
    %815 = vmatprep.subr.mxu0 0.0
    %816 = vmatpush2.msra.mxu0 0.0
    %817 = vmatprep.subr.mxu0 0.0
    %818 = vmatpush2.msra.mxu0 0.0
    %819 = vmatprep.subr.mxu0 0.0
    %820 = vmatpush2.msra.mxu0 0.0
    %821 = vmatprep.mubr.f32.mxu0 0.0
    %822 = vmatmul.mubr.f32.gmra.mxu0 %v76
    %v823 = vpop.f32.mrf.mxu0
    %v824 = vadd.f32 %v755, %v823
    %v825 = vpop.f32.mrf.mxu0
    %826 = vmatprep.mubr.f32.mxu0 0.0
    %827 = vmatmul.mubr.f32.gmra.mxu0 %v79
    %v828 = vpop.f32.mrf.mxu0
    %v829 = vadd.f32 %v755, %v828
    %v830 = vpop.f32.mrf.mxu0
    %831 = vdwg.mxu0
    %s832 = scalar_lea.vmem %s6, 32
    %v833 = vld [vmem:[%s832] sm:$0xff]
    %v834 = vld [vmem:[%s832 + $0x8] sm:$0xff]
    %v835 = vld [vmem:[%s832 + $0x10] sm:$0xff]
    %v836 = vld [vmem:[%s832 + $0x18] sm:$0xff]
    %s837 = scalar_lea.vmem %s7, 1
    %v838 = vld [vmem:[%s837] sm:$0x1]
    %v840 = vlaneseq
    %v841 = vshrl.u32 %v840, 7
    %v842 = vsub.s32 0, %v841
    %v843 = vrot.slane %v838, %v842
    %845 = vmatprep.subr.mxu0 0.0
    %846 = vmatpush1.msra.mxu0 0.0
    %847 = vmatprep.subr.mxu0 0.0
    %848 = vmatpush1.msra.mxu0 0.0
    %849 = vmatprep.subr.mxu0 0.0
    %850 = vmatpush1.msra.mxu0 0.0
    %851 = vmatprep.subr.mxu0 0.0
    %852 = vmatpush1.msra.mxu0 0.0
    %853 = vmatprep.subr.mxu0 0.0
    %854 = vmatpush1.msra.mxu0 0.0
    %855 = vmatprep.subr.mxu0 0.0
    %856 = vmatpush1.msra.mxu0 0.0
    %857 = vmatprep.subr.mxu0 0.0
    %858 = vmatpush1.msra.mxu0 0.0
    %859 = vmatprep.subr.mxu0 0.0
    %860 = vmatpush1.msra.mxu0 0.0
    %861 = vmatprep.subr.mxu0 0.0
    %862 = vmatpush1.msra.mxu0 0.0
    %863 = vmatprep.subr.mxu0 0.0
    %864 = vmatpush1.msra.mxu0 0.0
    %865 = vmatprep.subr.mxu0 0.0
    %866 = vmatpush1.msra.mxu0 0.0
    %867 = vmatprep.subr.mxu0 0.0
    %868 = vmatpush1.msra.mxu0 0.0
    %869 = vmatprep.subr.mxu0 0.0
    %870 = vmatpush1.msra.mxu0 %v836
    %871 = vmatprep.subr.mxu0 0.0
    %872 = vmatpush1.msra.mxu0 %v835
    %873 = vmatprep.subr.mxu0 0.0
    %874 = vmatpush1.msra.mxu0 %v834
    %875 = vmatprep.subr.mxu0 0.0
    %876 = vmatpush1.msra.mxu0 %v833
    %877 = vmatprep.subr.mxu0 0.0
    %878 = vmatpush2.msra.mxu0 0.0
    %879 = vmatprep.subr.mxu0 0.0
    %880 = vmatpush2.msra.mxu0 0.0
    %881 = vmatprep.subr.mxu0 0.0
    %882 = vmatpush2.msra.mxu0 0.0
    %883 = vmatprep.subr.mxu0 0.0
    %884 = vmatpush2.msra.mxu0 0.0
    %885 = vmatprep.subr.mxu0 0.0
    %886 = vmatpush2.msra.mxu0 0.0
    %887 = vmatprep.subr.mxu0 0.0
    %888 = vmatpush2.msra.mxu0 0.0
    %889 = vmatprep.subr.mxu0 0.0
    %890 = vmatpush2.msra.mxu0 0.0
    %891 = vmatprep.subr.mxu0 0.0
    %892 = vmatpush2.msra.mxu0 0.0
    %893 = vmatprep.subr.mxu0 0.0
    %894 = vmatpush2.msra.mxu0 0.0
    %895 = vmatprep.subr.mxu0 0.0
    %896 = vmatpush2.msra.mxu0 0.0
    %897 = vmatprep.subr.mxu0 0.0
    %898 = vmatpush2.msra.mxu0 0.0
    %899 = vmatprep.subr.mxu0 0.0
    %900 = vmatpush2.msra.mxu0 0.0
    %901 = vmatprep.subr.mxu0 0.0
    %902 = vmatpush2.msra.mxu0 0.0
    %903 = vmatprep.subr.mxu0 0.0
    %904 = vmatpush2.msra.mxu0 0.0
    %905 = vmatprep.subr.mxu0 0.0
    %906 = vmatpush2.msra.mxu0 0.0
    %907 = vmatprep.subr.mxu0 0.0
    %908 = vmatpush2.msra.mxu0 0.0
    %909 = vmatprep.mubr.f32.mxu0 0.0
    %910 = vmatmul.mubr.f32.gmra.mxu0 %v76
    %v911 = vpop.f32.mrf.mxu0
    %v912 = vadd.f32 %v843, %v911
    %v913 = vpop.f32.mrf.mxu0
    %914 = vmatprep.mubr.f32.mxu0 0.0
    %915 = vmatmul.mubr.f32.gmra.mxu0 %v79
    %v916 = vpop.f32.mrf.mxu0
    %v917 = vadd.f32 %v843, %v916
    %v918 = vpop.f32.mrf.mxu0
    %919 = vdwg.mxu0
    %v921 = vsel %vm328, %v736, 0
    %v924 = vsel %vm328, %v824, 0
    %926 = vmatprep.subr.mxu0 0.0
    %927 = vmatpush1.xpose.msra.mxu0 0.0
    %928 = vmatprep.subr.mxu0 0.0
    %929 = vmatpush1.xpose.msra.mxu0 0.0
    %930 = vmatprep.subr.mxu0 0.0
    %931 = vmatpush1.xpose.msra.mxu0 0.0
    %932 = vmatprep.subr.mxu0 0.0
    %933 = vmatpush1.xpose.msra.mxu0 0.0
    %934 = vmatprep.subr.mxu0 0.0
    %935 = vmatpush1.xpose.msra.mxu0 0.0
    %936 = vmatprep.subr.mxu0 0.0
    %937 = vmatpush1.xpose.msra.mxu0 0.0
    %938 = vmatprep.subr.mxu0 0.0
    %939 = vmatpush1.xpose.msra.mxu0 0.0
    %940 = vmatprep.subr.mxu0 0.0
    %941 = vmatpush1.xpose.msra.mxu0 0.0
    %942 = vmatprep.subr.mxu0 0.0
    %943 = vmatpush1.xpose.msra.mxu0 0.0
    %944 = vmatprep.subr.mxu0 0.0
    %945 = vmatpush1.xpose.msra.mxu0 0.0
    %946 = vmatprep.subr.mxu0 0.0
    %947 = vmatpush1.xpose.msra.mxu0 0.0
    %948 = vmatprep.subr.mxu0 0.0
    %949 = vmatpush1.xpose.msra.mxu0 0.0
    %950 = vmatprep.subr.mxu0 0.0
    %951 = vmatpush1.xpose.msra.mxu0 0.0
    %952 = vmatprep.subr.mxu0 0.0
    %953 = vmatpush1.xpose.msra.mxu0 0.0
    %954 = vmatprep.subr.mxu0 0.0
    %955 = vmatpush1.xpose.msra.mxu0 0.0
    %956 = vmatprep.subr.mxu0 0.0
    %957 = vmatpush1.xpose.msra.mxu0 %v924
    %958 = vmatprep.subr.mxu0 0.0
    %959 = vmatpush2.xpose.msra.mxu0 0.0
    %960 = vmatprep.subr.mxu0 0.0
    %961 = vmatpush2.xpose.msra.mxu0 0.0
    %962 = vmatprep.subr.mxu0 0.0
    %963 = vmatpush2.xpose.msra.mxu0 0.0
    %964 = vmatprep.subr.mxu0 0.0
    %965 = vmatpush2.xpose.msra.mxu0 0.0
    %966 = vmatprep.subr.mxu0 0.0
    %967 = vmatpush2.xpose.msra.mxu0 0.0
    %968 = vmatprep.subr.mxu0 0.0
    %969 = vmatpush2.xpose.msra.mxu0 0.0
    %970 = vmatprep.subr.mxu0 0.0
    %971 = vmatpush2.xpose.msra.mxu0 0.0
    %972 = vmatprep.subr.mxu0 0.0
    %973 = vmatpush2.xpose.msra.mxu0 0.0
    %974 = vmatprep.subr.mxu0 0.0
    %975 = vmatpush2.xpose.msra.mxu0 0.0
    %976 = vmatprep.subr.mxu0 0.0
    %977 = vmatpush2.xpose.msra.mxu0 0.0
    %978 = vmatprep.subr.mxu0 0.0
    %979 = vmatpush2.xpose.msra.mxu0 0.0
    %980 = vmatprep.subr.mxu0 0.0
    %981 = vmatpush2.xpose.msra.mxu0 0.0
    %982 = vmatprep.subr.mxu0 0.0
    %983 = vmatpush2.xpose.msra.mxu0 0.0
    %984 = vmatprep.subr.mxu0 0.0
    %985 = vmatpush2.xpose.msra.mxu0 0.0
    %986 = vmatprep.subr.mxu0 0.0
    %987 = vmatpush2.xpose.msra.mxu0 0.0
    %988 = vmatprep.subr.mxu0 0.0
    %989 = vmatpush2.xpose.msra.mxu0 0.0
    %990 = vmatprep.mubr.f32.mxu0 0.0
    %991 = vmatmul.mubr.f32.gmra.mxu0 %v921
    %v992 = vpop.f32.mrf.mxu0
    %v993 = vadd.f32 %v62, %v992
    %v994 = vpop.f32.mrf.mxu0
    %995 = vdwg.mxu0
    %v997 = vsel %vm328, %v741, 0
    %v1000 = vsel %vm328, %v829, 0
    %1002 = vmatprep.subr.mxu0 0.0
    %1003 = vmatpush1.xpose.msra.mxu0 0.0
    %1004 = vmatprep.subr.mxu0 0.0
    %1005 = vmatpush1.xpose.msra.mxu0 0.0
    %1006 = vmatprep.subr.mxu0 0.0
    %1007 = vmatpush1.xpose.msra.mxu0 0.0
    %1008 = vmatprep.subr.mxu0 0.0
    %1009 = vmatpush1.xpose.msra.mxu0 0.0
    %1010 = vmatprep.subr.mxu0 0.0
    %1011 = vmatpush1.xpose.msra.mxu0 0.0
    %1012 = vmatprep.subr.mxu0 0.0
    %1013 = vmatpush1.xpose.msra.mxu0 0.0
    %1014 = vmatprep.subr.mxu0 0.0
    %1015 = vmatpush1.xpose.msra.mxu0 0.0
    %1016 = vmatprep.subr.mxu0 0.0
    %1017 = vmatpush1.xpose.msra.mxu0 0.0
    %1018 = vmatprep.subr.mxu0 0.0
    %1019 = vmatpush1.xpose.msra.mxu0 0.0
    %1020 = vmatprep.subr.mxu0 0.0
    %1021 = vmatpush1.xpose.msra.mxu0 0.0
    %1022 = vmatprep.subr.mxu0 0.0
    %1023 = vmatpush1.xpose.msra.mxu0 0.0
    %1024 = vmatprep.subr.mxu0 0.0
    %1025 = vmatpush1.xpose.msra.mxu0 0.0
    %1026 = vmatprep.subr.mxu0 0.0
    %1027 = vmatpush1.xpose.msra.mxu0 0.0
    %1028 = vmatprep.subr.mxu0 0.0
    %1029 = vmatpush1.xpose.msra.mxu0 0.0
    %1030 = vmatprep.subr.mxu0 0.0
    %1031 = vmatpush1.xpose.msra.mxu0 0.0
    %1032 = vmatprep.subr.mxu0 0.0
    %1033 = vmatpush1.xpose.msra.mxu0 %v1000
    %1034 = vmatprep.subr.mxu0 0.0
    %1035 = vmatpush2.xpose.msra.mxu0 0.0
    %1036 = vmatprep.subr.mxu0 0.0
    %1037 = vmatpush2.xpose.msra.mxu0 0.0
    %1038 = vmatprep.subr.mxu0 0.0
    %1039 = vmatpush2.xpose.msra.mxu0 0.0
    %1040 = vmatprep.subr.mxu0 0.0
    %1041 = vmatpush2.xpose.msra.mxu0 0.0
    %1042 = vmatprep.subr.mxu0 0.0
    %1043 = vmatpush2.xpose.msra.mxu0 0.0
    %1044 = vmatprep.subr.mxu0 0.0
    %1045 = vmatpush2.xpose.msra.mxu0 0.0
    %1046 = vmatprep.subr.mxu0 0.0
    %1047 = vmatpush2.xpose.msra.mxu0 0.0
    %1048 = vmatprep.subr.mxu0 0.0
    %1049 = vmatpush2.xpose.msra.mxu0 0.0
    %1050 = vmatprep.subr.mxu0 0.0
    %1051 = vmatpush2.xpose.msra.mxu0 0.0
    %1052 = vmatprep.subr.mxu0 0.0
    %1053 = vmatpush2.xpose.msra.mxu0 0.0
    %1054 = vmatprep.subr.mxu0 0.0
    %1055 = vmatpush2.xpose.msra.mxu0 0.0
    %1056 = vmatprep.subr.mxu0 0.0
    %1057 = vmatpush2.xpose.msra.mxu0 0.0
    %1058 = vmatprep.subr.mxu0 0.0
    %1059 = vmatpush2.xpose.msra.mxu0 0.0
    %1060 = vmatprep.subr.mxu0 0.0
    %1061 = vmatpush2.xpose.msra.mxu0 0.0
    %1062 = vmatprep.subr.mxu0 0.0
    %1063 = vmatpush2.xpose.msra.mxu0 0.0
    %1064 = vmatprep.subr.mxu0 0.0
    %1065 = vmatpush2.xpose.msra.mxu0 0.0
    %1066 = vmatprep.mubr.f32.mxu0 0.0
    %1067 = vmatmul.mubr.f32.gmra.mxu0 %v997
    %v1068 = vpop.f32.mrf.mxu0
    %v1069 = vadd.f32 %v62, %v1068
    %v1070 = vpop.f32.mrf.mxu0
    %1071 = vdwg.mxu0
    %v1072 = vsel %vm328, %v993, -inf
    %1073 = vmax.xlane.f32.xlu0 %v1072
    %v1074 = vpop.xlane.xlu0 %1073
    %v1075 = vsel %vm328, %v1069, -inf
    %1076 = vmax.xlane.f32.xlu0 %v1075
    %v1077 = vpop.xlane.xlu0 %1076
    %v1078 = vsub.f32 %v993, %v1074
    %v1079 = vsub.f32 %v1069, %v1077
    %v1080 = vmul.f32 %v1078, 1.442695
    %v1081 = vpow.pop %v1080
    %v1082 = vmul.f32 %v1079, 1.442695
    %v1083 = vpow.pop %v1082
    %v1084 = vsel %vm328, %v1081, 0.0
    %1085 = vadd.xlane.f32.xlu0 %v1084
    %v1086 = vpop.xlane.xlu0 %1085
    %v1087 = vsel %vm328, %v1083, 0.0
    %1088 = vadd.xlane.f32.xlu0 %v1087
    %v1089 = vpop.xlane.xlu0 %1088
    %v1090 = vrcp.pop %v1086
    %v1091 = vrcp.pop %v1089
    %v1092 = vmul.f32 %v1086, %v1090
    %v1093 = vmul.f32 %v1089, %v1091
    %v1094 = vsub.f32 2.0, %v1092
    %v1095 = vsub.f32 2.0, %v1093
    %v1096 = vmul.f32 %v1090, %v1094
    %v1097 = vmul.f32 %v1091, %v1095
    %v1098 = vmul.f32 %v1081, %v1096
    %v1099 = vmul.f32 %v1083, %v1097
    %v1101 = vsel %vm328, %v1098, 0
    %1103 = vmatprep.subr.mxu0 0.0
    %1104 = vmatpush1.msra.mxu0 0.0
    %1105 = vmatprep.subr.mxu0 0.0
    %1106 = vmatpush1.msra.mxu0 0.0
    %1107 = vmatprep.subr.mxu0 0.0
    %1108 = vmatpush1.msra.mxu0 0.0
    %1109 = vmatprep.subr.mxu0 0.0
    %1110 = vmatpush1.msra.mxu0 0.0
    %1111 = vmatprep.subr.mxu0 0.0
    %1112 = vmatpush1.msra.mxu0 0.0
    %1113 = vmatprep.subr.mxu0 0.0
    %1114 = vmatpush1.msra.mxu0 0.0
    %1115 = vmatprep.subr.mxu0 0.0
    %1116 = vmatpush1.msra.mxu0 0.0
    %1117 = vmatprep.subr.mxu0 0.0
    %1118 = vmatpush1.msra.mxu0 0.0
    %1119 = vmatprep.subr.mxu0 0.0
    %1120 = vmatpush1.msra.mxu0 0.0
    %1121 = vmatprep.subr.mxu0 0.0
    %1122 = vmatpush1.msra.mxu0 0.0
    %1123 = vmatprep.subr.mxu0 0.0
    %1124 = vmatpush1.msra.mxu0 0.0
    %1125 = vmatprep.subr.mxu0 0.0
    %1126 = vmatpush1.msra.mxu0 0.0
    %1127 = vmatprep.subr.mxu0 0.0
    %1128 = vmatpush1.msra.mxu0 0.0
    %1129 = vmatprep.subr.mxu0 0.0
    %1130 = vmatpush1.msra.mxu0 0.0
    %1131 = vmatprep.subr.mxu0 0.0
    %1132 = vmatpush1.msra.mxu0 0.0
    %1133 = vmatprep.subr.mxu0 0.0
    %1134 = vmatpush1.msra.mxu0 %v912
    %1135 = vmatprep.subr.mxu0 0.0
    %1136 = vmatpush2.msra.mxu0 0.0
    %1137 = vmatprep.subr.mxu0 0.0
    %1138 = vmatpush2.msra.mxu0 0.0
    %1139 = vmatprep.subr.mxu0 0.0
    %1140 = vmatpush2.msra.mxu0 0.0
    %1141 = vmatprep.subr.mxu0 0.0
    %1142 = vmatpush2.msra.mxu0 0.0
    %1143 = vmatprep.subr.mxu0 0.0
    %1144 = vmatpush2.msra.mxu0 0.0
    %1145 = vmatprep.subr.mxu0 0.0
    %1146 = vmatpush2.msra.mxu0 0.0
    %1147 = vmatprep.subr.mxu0 0.0
    %1148 = vmatpush2.msra.mxu0 0.0
    %1149 = vmatprep.subr.mxu0 0.0
    %1150 = vmatpush2.msra.mxu0 0.0
    %1151 = vmatprep.subr.mxu0 0.0
    %1152 = vmatpush2.msra.mxu0 0.0
    %1153 = vmatprep.subr.mxu0 0.0
    %1154 = vmatpush2.msra.mxu0 0.0
    %1155 = vmatprep.subr.mxu0 0.0
    %1156 = vmatpush2.msra.mxu0 0.0
    %1157 = vmatprep.subr.mxu0 0.0
    %1158 = vmatpush2.msra.mxu0 0.0
    %1159 = vmatprep.subr.mxu0 0.0
    %1160 = vmatpush2.msra.mxu0 0.0
    %1161 = vmatprep.subr.mxu0 0.0
    %1162 = vmatpush2.msra.mxu0 0.0
    %1163 = vmatprep.subr.mxu0 0.0
    %1164 = vmatpush2.msra.mxu0 0.0
    %1165 = vmatprep.subr.mxu0 0.0
    %1166 = vmatpush2.msra.mxu0 0.0
    %1167 = vmatprep.mubr.f32.mxu0 0.0
    %1168 = vmatmul.mubr.f32.gmra.mxu0 %v1101
    %v1169 = vpop.f32.mrf.mxu0
    %v1170 = vadd.f32 0.0, %v1169
    %v1171 = vpop.f32.mrf.mxu0
    %1172 = vdwg.mxu0
    %v1174 = vsel %vm328, %v1099, 0
    %1176 = vmatprep.subr.mxu0 0.0
    %1177 = vmatpush1.msra.mxu0 0.0
    %1178 = vmatprep.subr.mxu0 0.0
    %1179 = vmatpush1.msra.mxu0 0.0
    %1180 = vmatprep.subr.mxu0 0.0
    %1181 = vmatpush1.msra.mxu0 0.0
    %1182 = vmatprep.subr.mxu0 0.0
    %1183 = vmatpush1.msra.mxu0 0.0
    %1184 = vmatprep.subr.mxu0 0.0
    %1185 = vmatpush1.msra.mxu0 0.0
    %1186 = vmatprep.subr.mxu0 0.0
    %1187 = vmatpush1.msra.mxu0 0.0
    %1188 = vmatprep.subr.mxu0 0.0
    %1189 = vmatpush1.msra.mxu0 0.0
    %1190 = vmatprep.subr.mxu0 0.0
    %1191 = vmatpush1.msra.mxu0 0.0
    %1192 = vmatprep.subr.mxu0 0.0
    %1193 = vmatpush1.msra.mxu0 0.0
    %1194 = vmatprep.subr.mxu0 0.0
    %1195 = vmatpush1.msra.mxu0 0.0
    %1196 = vmatprep.subr.mxu0 0.0
    %1197 = vmatpush1.msra.mxu0 0.0
    %1198 = vmatprep.subr.mxu0 0.0
    %1199 = vmatpush1.msra.mxu0 0.0
    %1200 = vmatprep.subr.mxu0 0.0
    %1201 = vmatpush1.msra.mxu0 0.0
    %1202 = vmatprep.subr.mxu0 0.0
    %1203 = vmatpush1.msra.mxu0 0.0
    %1204 = vmatprep.subr.mxu0 0.0
    %1205 = vmatpush1.msra.mxu0 0.0
    %1206 = vmatprep.subr.mxu0 0.0
    %1207 = vmatpush1.msra.mxu0 %v917
    %1208 = vmatprep.subr.mxu0 0.0
    %1209 = vmatpush2.msra.mxu0 0.0
    %1210 = vmatprep.subr.mxu0 0.0
    %1211 = vmatpush2.msra.mxu0 0.0
    %1212 = vmatprep.subr.mxu0 0.0
    %1213 = vmatpush2.msra.mxu0 0.0
    %1214 = vmatprep.subr.mxu0 0.0
    %1215 = vmatpush2.msra.mxu0 0.0
    %1216 = vmatprep.subr.mxu0 0.0
    %1217 = vmatpush2.msra.mxu0 0.0
    %1218 = vmatprep.subr.mxu0 0.0
    %1219 = vmatpush2.msra.mxu0 0.0
    %1220 = vmatprep.subr.mxu0 0.0
    %1221 = vmatpush2.msra.mxu0 0.0
    %1222 = vmatprep.subr.mxu0 0.0
    %1223 = vmatpush2.msra.mxu0 0.0
    %1224 = vmatprep.subr.mxu0 0.0
    %1225 = vmatpush2.msra.mxu0 0.0
    %1226 = vmatprep.subr.mxu0 0.0
    %1227 = vmatpush2.msra.mxu0 0.0
    %1228 = vmatprep.subr.mxu0 0.0
    %1229 = vmatpush2.msra.mxu0 0.0
    %1230 = vmatprep.subr.mxu0 0.0
    %1231 = vmatpush2.msra.mxu0 0.0
    %1232 = vmatprep.subr.mxu0 0.0
    %1233 = vmatpush2.msra.mxu0 0.0
    %1234 = vmatprep.subr.mxu0 0.0
    %1235 = vmatpush2.msra.mxu0 0.0
    %1236 = vmatprep.subr.mxu0 0.0
    %1237 = vmatpush2.msra.mxu0 0.0
    %1238 = vmatprep.subr.mxu0 0.0
    %1239 = vmatpush2.msra.mxu0 0.0
    %1240 = vmatprep.mubr.f32.mxu0 0.0
    %1241 = vmatmul.mubr.f32.gmra.mxu0 %v1174
    %v1242 = vpop.f32.mrf.mxu0
    %v1243 = vadd.f32 0.0, %v1242
    %v1244 = vpop.f32.mrf.mxu0
    %1245 = vdwg.mxu0
    %s1246 = scalar_lea.vmem %s8, 8
    %v1247 = vld [vmem:[%s1246] sm:$0xff]
    %v1249 = vsel %vm328, %v1170, 0
    %v1252 = vsel %vm328, %v1243, 0
    %1254 = vmatprep.subr.mxu0 0.0
    %1255 = vmatpush1.msra.mxu0 0.0
    %1256 = vmatprep.subr.mxu0 0.0
    %1257 = vmatpush1.msra.mxu0 0.0
    %1258 = vmatprep.subr.mxu0 0.0
    %1259 = vmatpush1.msra.mxu0 0.0
    %1260 = vmatprep.subr.mxu0 0.0
    %1261 = vmatpush1.msra.mxu0 0.0
    %1262 = vmatprep.subr.mxu0 0.0
    %1263 = vmatpush1.msra.mxu0 0.0
    %1264 = vmatprep.subr.mxu0 0.0
    %1265 = vmatpush1.msra.mxu0 0.0
    %1266 = vmatprep.subr.mxu0 0.0
    %1267 = vmatpush1.msra.mxu0 0.0
    %1268 = vmatprep.subr.mxu0 0.0
    %1269 = vmatpush1.msra.mxu0 0.0
    %1270 = vmatprep.subr.mxu0 0.0
    %1271 = vmatpush1.msra.mxu0 0.0
    %1272 = vmatprep.subr.mxu0 0.0
    %1273 = vmatpush1.msra.mxu0 0.0
    %1274 = vmatprep.subr.mxu0 0.0
    %1275 = vmatpush1.msra.mxu0 0.0
    %1276 = vmatprep.subr.mxu0 0.0
    %1277 = vmatpush1.msra.mxu0 0.0
    %1278 = vmatprep.subr.mxu0 0.0
    %1279 = vmatpush1.msra.mxu0 0.0
    %1280 = vmatprep.subr.mxu0 0.0
    %1281 = vmatpush1.msra.mxu0 0.0
    %1282 = vmatprep.subr.mxu0 0.0
    %1283 = vmatpush1.msra.mxu0 0.0
    %1284 = vmatprep.subr.mxu0 0.0
    %1285 = vmatpush1.msra.mxu0 %v1247
    %1286 = vmatprep.subr.mxu0 0.0
    %1287 = vmatpush2.msra.mxu0 0.0
    %1288 = vmatprep.subr.mxu0 0.0
    %1289 = vmatpush2.msra.mxu0 0.0
    %1290 = vmatprep.subr.mxu0 0.0
    %1291 = vmatpush2.msra.mxu0 0.0
    %1292 = vmatprep.subr.mxu0 0.0
    %1293 = vmatpush2.msra.mxu0 0.0
    %1294 = vmatprep.subr.mxu0 0.0
    %1295 = vmatpush2.msra.mxu0 0.0
    %1296 = vmatprep.subr.mxu0 0.0
    %1297 = vmatpush2.msra.mxu0 0.0
    %1298 = vmatprep.subr.mxu0 0.0
    %1299 = vmatpush2.msra.mxu0 0.0
    %1300 = vmatprep.subr.mxu0 0.0
    %1301 = vmatpush2.msra.mxu0 0.0
    %1302 = vmatprep.subr.mxu0 0.0
    %1303 = vmatpush2.msra.mxu0 0.0
    %1304 = vmatprep.subr.mxu0 0.0
    %1305 = vmatpush2.msra.mxu0 0.0
    %1306 = vmatprep.subr.mxu0 0.0
    %1307 = vmatpush2.msra.mxu0 0.0
    %1308 = vmatprep.subr.mxu0 0.0
    %1309 = vmatpush2.msra.mxu0 0.0
    %1310 = vmatprep.subr.mxu0 0.0
    %1311 = vmatpush2.msra.mxu0 0.0
    %1312 = vmatprep.subr.mxu0 0.0
    %1313 = vmatpush2.msra.mxu0 0.0
    %1314 = vmatprep.subr.mxu0 0.0
    %1315 = vmatpush2.msra.mxu0 0.0
    %1316 = vmatprep.subr.mxu0 0.0
    %1317 = vmatpush2.msra.mxu0 0.0
    %1318 = vmatprep.mubr.f32.mxu0 0.0
    %1319 = vmatmul.mubr.f32.gmra.mxu0 %v1249
    %v1320 = vpop.f32.mrf.mxu0
    %v1321 = vadd.f32 0.0, %v1320
    %v1322 = vpop.f32.mrf.mxu0
    %1323 = vmatprep.mubr.f32.mxu0 0.0
    %1324 = vmatmul.mubr.f32.gmra.mxu0 %v1252
    %v1325 = vpop.f32.mrf.mxu0
    %v1326 = vadd.f32 0.0, %v1325
    %v1327 = vpop.f32.mrf.mxu0
    %1328 = vdwg.mxu0
    %v1330 = vsel %vm328, %v579, 0
    %v1333 = vsel %vm328, %v652, 0
    %1335 = vmatprep.subr.mxu0 0.0
    %1336 = vmatpush1.msra.mxu0 0.0
    %1337 = vmatprep.subr.mxu0 0.0
    %1338 = vmatpush1.msra.mxu0 0.0
    %1339 = vmatprep.subr.mxu0 0.0
    %1340 = vmatpush1.msra.mxu0 0.0
    %1341 = vmatprep.subr.mxu0 0.0
    %1342 = vmatpush1.msra.mxu0 0.0
    %1343 = vmatprep.subr.mxu0 0.0
    %1344 = vmatpush1.msra.mxu0 0.0
    %1345 = vmatprep.subr.mxu0 0.0
    %1346 = vmatpush1.msra.mxu0 0.0
    %1347 = vmatprep.subr.mxu0 0.0
    %1348 = vmatpush1.msra.mxu0 0.0
    %1349 = vmatprep.subr.mxu0 0.0
    %1350 = vmatpush1.msra.mxu0 0.0
    %1351 = vmatprep.subr.mxu0 0.0
    %1352 = vmatpush1.msra.mxu0 0.0
    %1353 = vmatprep.subr.mxu0 0.0
    %1354 = vmatpush1.msra.mxu0 0.0
    %1355 = vmatprep.subr.mxu0 0.0
    %1356 = vmatpush1.msra.mxu0 0.0
    %1357 = vmatprep.subr.mxu0 0.0
    %1358 = vmatpush1.msra.mxu0 0.0
    %1359 = vmatprep.subr.mxu0 0.0
    %1360 = vmatpush1.msra.mxu0 0.0
    %1361 = vmatprep.subr.mxu0 0.0
    %1362 = vmatpush1.msra.mxu0 0.0
    %1363 = vmatprep.subr.mxu0 0.0
    %1364 = vmatpush1.msra.mxu0 0.0
    %1365 = vmatprep.subr.mxu0 0.0
    %1366 = vmatpush1.msra.mxu0 %v655
    %1367 = vmatprep.subr.mxu0 0.0
    %1368 = vmatpush2.msra.mxu0 0.0
    %1369 = vmatprep.subr.mxu0 0.0
    %1370 = vmatpush2.msra.mxu0 0.0
    %1371 = vmatprep.subr.mxu0 0.0
    %1372 = vmatpush2.msra.mxu0 0.0
    %1373 = vmatprep.subr.mxu0 0.0
    %1374 = vmatpush2.msra.mxu0 0.0
    %1375 = vmatprep.subr.mxu0 0.0
    %1376 = vmatpush2.msra.mxu0 0.0
    %1377 = vmatprep.subr.mxu0 0.0
    %1378 = vmatpush2.msra.mxu0 0.0
    %1379 = vmatprep.subr.mxu0 0.0
    %1380 = vmatpush2.msra.mxu0 0.0
    %1381 = vmatprep.subr.mxu0 0.0
    %1382 = vmatpush2.msra.mxu0 0.0
    %1383 = vmatprep.subr.mxu0 0.0
    %1384 = vmatpush2.msra.mxu0 0.0
    %1385 = vmatprep.subr.mxu0 0.0
    %1386 = vmatpush2.msra.mxu0 0.0
    %1387 = vmatprep.subr.mxu0 0.0
    %1388 = vmatpush2.msra.mxu0 0.0
    %1389 = vmatprep.subr.mxu0 0.0
    %1390 = vmatpush2.msra.mxu0 0.0
    %1391 = vmatprep.subr.mxu0 0.0
    %1392 = vmatpush2.msra.mxu0 0.0
    %1393 = vmatprep.subr.mxu0 0.0
    %1394 = vmatpush2.msra.mxu0 0.0
    %1395 = vmatprep.subr.mxu0 0.0
    %1396 = vmatpush2.msra.mxu0 0.0
    %1397 = vmatprep.subr.mxu0 0.0
    %1398 = vmatpush2.msra.mxu0 0.0
    %1399 = vmatprep.mubr.f32.mxu0 0.0
    %1400 = vmatmul.mubr.f32.gmra.mxu0 %v1330
    %v1401 = vpop.f32.mrf.mxu0
    %v1402 = vadd.f32 %v1321, %v1401
    %v1403 = vpop.f32.mrf.mxu0
    %1404 = vmatprep.mubr.f32.mxu0 0.0
    %1405 = vmatmul.mubr.f32.gmra.mxu0 %v1333
    %v1406 = vpop.f32.mrf.mxu0
    %v1407 = vadd.f32 %v1326, %v1406
    %v1408 = vpop.f32.mrf.mxu0
    %1409 = vdwg.mxu0
    %s1410 = scalar_lea.vmem %s2, 64
    %v1411 = vld [vmem:[%s1410] sm:$0xff]
    %v1412 = vld [vmem:[%s1410 + $0x8] sm:$0xff]
    %v1413 = vld [vmem:[%s1410 + $0x10] sm:$0xff]
    %v1414 = vld [vmem:[%s1410 + $0x18] sm:$0xff]
    %s1415 = scalar_lea.vmem %s3, 2
    %v1416 = vld [vmem:[%s1415] sm:$0x1]
    %v1418 = vlaneseq
    %v1419 = vshrl.u32 %v1418, 7
    %v1420 = vsub.s32 0, %v1419
    %v1421 = vrot.slane %v1416, %v1420
    %1423 = vmatprep.subr.mxu0 0.0
    %1424 = vmatpush1.msra.mxu0 0.0
    %1425 = vmatprep.subr.mxu0 0.0
    %1426 = vmatpush1.msra.mxu0 0.0
    %1427 = vmatprep.subr.mxu0 0.0
    %1428 = vmatpush1.msra.mxu0 0.0
    %1429 = vmatprep.subr.mxu0 0.0
    %1430 = vmatpush1.msra.mxu0 0.0
    %1431 = vmatprep.subr.mxu0 0.0
    %1432 = vmatpush1.msra.mxu0 0.0
    %1433 = vmatprep.subr.mxu0 0.0
    %1434 = vmatpush1.msra.mxu0 0.0
    %1435 = vmatprep.subr.mxu0 0.0
    %1436 = vmatpush1.msra.mxu0 0.0
    %1437 = vmatprep.subr.mxu0 0.0
    %1438 = vmatpush1.msra.mxu0 0.0
    %1439 = vmatprep.subr.mxu0 0.0
    %1440 = vmatpush1.msra.mxu0 0.0
    %1441 = vmatprep.subr.mxu0 0.0
    %1442 = vmatpush1.msra.mxu0 0.0
    %1443 = vmatprep.subr.mxu0 0.0
    %1444 = vmatpush1.msra.mxu0 0.0
    %1445 = vmatprep.subr.mxu0 0.0
    %1446 = vmatpush1.msra.mxu0 0.0
    %1447 = vmatprep.subr.mxu0 0.0
    %1448 = vmatpush1.msra.mxu0 %v1414
    %1449 = vmatprep.subr.mxu0 0.0
    %1450 = vmatpush1.msra.mxu0 %v1413
    %1451 = vmatprep.subr.mxu0 0.0
    %1452 = vmatpush1.msra.mxu0 %v1412
    %1453 = vmatprep.subr.mxu0 0.0
    %1454 = vmatpush1.msra.mxu0 %v1411
    %1455 = vmatprep.subr.mxu0 0.0
    %1456 = vmatpush2.msra.mxu0 0.0
    %1457 = vmatprep.subr.mxu0 0.0
    %1458 = vmatpush2.msra.mxu0 0.0
    %1459 = vmatprep.subr.mxu0 0.0
    %1460 = vmatpush2.msra.mxu0 0.0
    %1461 = vmatprep.subr.mxu0 0.0
    %1462 = vmatpush2.msra.mxu0 0.0
    %1463 = vmatprep.subr.mxu0 0.0
    %1464 = vmatpush2.msra.mxu0 0.0
    %1465 = vmatprep.subr.mxu0 0.0
    %1466 = vmatpush2.msra.mxu0 0.0
    %1467 = vmatprep.subr.mxu0 0.0
    %1468 = vmatpush2.msra.mxu0 0.0
    %1469 = vmatprep.subr.mxu0 0.0
    %1470 = vmatpush2.msra.mxu0 0.0
    %1471 = vmatprep.subr.mxu0 0.0
    %1472 = vmatpush2.msra.mxu0 0.0
    %1473 = vmatprep.subr.mxu0 0.0
    %1474 = vmatpush2.msra.mxu0 0.0
    %1475 = vmatprep.subr.mxu0 0.0
    %1476 = vmatpush2.msra.mxu0 0.0
    %1477 = vmatprep.subr.mxu0 0.0
    %1478 = vmatpush2.msra.mxu0 0.0
    %1479 = vmatprep.subr.mxu0 0.0
    %1480 = vmatpush2.msra.mxu0 0.0
    %1481 = vmatprep.subr.mxu0 0.0
    %1482 = vmatpush2.msra.mxu0 0.0
    %1483 = vmatprep.subr.mxu0 0.0
    %1484 = vmatpush2.msra.mxu0 0.0
    %1485 = vmatprep.subr.mxu0 0.0
    %1486 = vmatpush2.msra.mxu0 0.0
    %1487 = vmatprep.mubr.f32.mxu0 0.0
    %1488 = vmatmul.mubr.f32.gmra.mxu0 %v76
    %v1489 = vpop.f32.mrf.mxu0
    %v1490 = vadd.f32 %v1421, %v1489
    %v1491 = vpop.f32.mrf.mxu0
    %1492 = vmatprep.mubr.f32.mxu0 0.0
    %1493 = vmatmul.mubr.f32.gmra.mxu0 %v79
    %v1494 = vpop.f32.mrf.mxu0
    %v1495 = vadd.f32 %v1421, %v1494
    %v1496 = vpop.f32.mrf.mxu0
    %1497 = vdwg.mxu0
    %s1498 = scalar_lea.vmem %s4, 64
    %v1499 = vld [vmem:[%s1498] sm:$0xff]
    %v1500 = vld [vmem:[%s1498 + $0x8] sm:$0xff]
    %v1501 = vld [vmem:[%s1498 + $0x10] sm:$0xff]
    %v1502 = vld [vmem:[%s1498 + $0x18] sm:$0xff]
    %s1503 = scalar_lea.vmem %s5, 2
    %v1504 = vld [vmem:[%s1503] sm:$0x1]
    %v1506 = vlaneseq
    %v1507 = vshrl.u32 %v1506, 7
    %v1508 = vsub.s32 0, %v1507
    %v1509 = vrot.slane %v1504, %v1508
    %1511 = vmatprep.subr.mxu0 0.0
    %1512 = vmatpush1.msra.mxu0 0.0
    %1513 = vmatprep.subr.mxu0 0.0
    %1514 = vmatpush1.msra.mxu0 0.0
    %1515 = vmatprep.subr.mxu0 0.0
    %1516 = vmatpush1.msra.mxu0 0.0
    %1517 = vmatprep.subr.mxu0 0.0
    %1518 = vmatpush1.msra.mxu0 0.0
    %1519 = vmatprep.subr.mxu0 0.0
    %1520 = vmatpush1.msra.mxu0 0.0
    %1521 = vmatprep.subr.mxu0 0.0
    %1522 = vmatpush1.msra.mxu0 0.0
    %1523 = vmatprep.subr.mxu0 0.0
    %1524 = vmatpush1.msra.mxu0 0.0
    %1525 = vmatprep.subr.mxu0 0.0
    %1526 = vmatpush1.msra.mxu0 0.0
    %1527 = vmatprep.subr.mxu0 0.0
    %1528 = vmatpush1.msra.mxu0 0.0
    %1529 = vmatprep.subr.mxu0 0.0
    %1530 = vmatpush1.msra.mxu0 0.0
    %1531 = vmatprep.subr.mxu0 0.0
    %1532 = vmatpush1.msra.mxu0 0.0
    %1533 = vmatprep.subr.mxu0 0.0
    %1534 = vmatpush1.msra.mxu0 0.0
    %1535 = vmatprep.subr.mxu0 0.0
    %1536 = vmatpush1.msra.mxu0 %v1502
    %1537 = vmatprep.subr.mxu0 0.0
    %1538 = vmatpush1.msra.mxu0 %v1501
    %1539 = vmatprep.subr.mxu0 0.0
    %1540 = vmatpush1.msra.mxu0 %v1500
    %1541 = vmatprep.subr.mxu0 0.0
    %1542 = vmatpush1.msra.mxu0 %v1499
    %1543 = vmatprep.subr.mxu0 0.0
    %1544 = vmatpush2.msra.mxu0 0.0
    %1545 = vmatprep.subr.mxu0 0.0
    %1546 = vmatpush2.msra.mxu0 0.0
    %1547 = vmatprep.subr.mxu0 0.0
    %1548 = vmatpush2.msra.mxu0 0.0
    %1549 = vmatprep.subr.mxu0 0.0
    %1550 = vmatpush2.msra.mxu0 0.0
    %1551 = vmatprep.subr.mxu0 0.0
    %1552 = vmatpush2.msra.mxu0 0.0
    %1553 = vmatprep.subr.mxu0 0.0
    %1554 = vmatpush2.msra.mxu0 0.0
    %1555 = vmatprep.subr.mxu0 0.0
    %1556 = vmatpush2.msra.mxu0 0.0
    %1557 = vmatprep.subr.mxu0 0.0
    %1558 = vmatpush2.msra.mxu0 0.0
    %1559 = vmatprep.subr.mxu0 0.0
    %1560 = vmatpush2.msra.mxu0 0.0
    %1561 = vmatprep.subr.mxu0 0.0
    %1562 = vmatpush2.msra.mxu0 0.0
    %1563 = vmatprep.subr.mxu0 0.0
    %1564 = vmatpush2.msra.mxu0 0.0
    %1565 = vmatprep.subr.mxu0 0.0
    %1566 = vmatpush2.msra.mxu0 0.0
    %1567 = vmatprep.subr.mxu0 0.0
    %1568 = vmatpush2.msra.mxu0 0.0
    %1569 = vmatprep.subr.mxu0 0.0
    %1570 = vmatpush2.msra.mxu0 0.0
    %1571 = vmatprep.subr.mxu0 0.0
    %1572 = vmatpush2.msra.mxu0 0.0
    %1573 = vmatprep.subr.mxu0 0.0
    %1574 = vmatpush2.msra.mxu0 0.0
    %1575 = vmatprep.mubr.f32.mxu0 0.0
    %1576 = vmatmul.mubr.f32.gmra.mxu0 %v76
    %v1577 = vpop.f32.mrf.mxu0
    %v1578 = vadd.f32 %v1509, %v1577
    %v1579 = vpop.f32.mrf.mxu0
    %1580 = vmatprep.mubr.f32.mxu0 0.0
    %1581 = vmatmul.mubr.f32.gmra.mxu0 %v79
    %v1582 = vpop.f32.mrf.mxu0
    %v1583 = vadd.f32 %v1509, %v1582
    %v1584 = vpop.f32.mrf.mxu0
    %1585 = vdwg.mxu0
    %s1586 = scalar_lea.vmem %s6, 64
    %v1587 = vld [vmem:[%s1586] sm:$0xff]
    %v1588 = vld [vmem:[%s1586 + $0x8] sm:$0xff]
    %v1589 = vld [vmem:[%s1586 + $0x10] sm:$0xff]
    %v1590 = vld [vmem:[%s1586 + $0x18] sm:$0xff]
    %s1591 = scalar_lea.vmem %s7, 2
    %v1592 = vld [vmem:[%s1591] sm:$0x1]
    %v1594 = vlaneseq
    %v1595 = vshrl.u32 %v1594, 7
    %v1596 = vsub.s32 0, %v1595
    %v1597 = vrot.slane %v1592, %v1596
    %1599 = vmatprep.subr.mxu0 0.0
    %1600 = vmatpush1.msra.mxu0 0.0
    %1601 = vmatprep.subr.mxu0 0.0
    %1602 = vmatpush1.msra.mxu0 0.0
    %1603 = vmatprep.subr.mxu0 0.0
    %1604 = vmatpush1.msra.mxu0 0.0
    %1605 = vmatprep.subr.mxu0 0.0
    %1606 = vmatpush1.msra.mxu0 0.0
    %1607 = vmatprep.subr.mxu0 0.0
    %1608 = vmatpush1.msra.mxu0 0.0
    %1609 = vmatprep.subr.mxu0 0.0
    %1610 = vmatpush1.msra.mxu0 0.0
    %1611 = vmatprep.subr.mxu0 0.0
    %1612 = vmatpush1.msra.mxu0 0.0
    %1613 = vmatprep.subr.mxu0 0.0
    %1614 = vmatpush1.msra.mxu0 0.0
    %1615 = vmatprep.subr.mxu0 0.0
    %1616 = vmatpush1.msra.mxu0 0.0
    %1617 = vmatprep.subr.mxu0 0.0
    %1618 = vmatpush1.msra.mxu0 0.0
    %1619 = vmatprep.subr.mxu0 0.0
    %1620 = vmatpush1.msra.mxu0 0.0
    %1621 = vmatprep.subr.mxu0 0.0
    %1622 = vmatpush1.msra.mxu0 0.0
    %1623 = vmatprep.subr.mxu0 0.0
    %1624 = vmatpush1.msra.mxu0 %v1590
    %1625 = vmatprep.subr.mxu0 0.0
    %1626 = vmatpush1.msra.mxu0 %v1589
    %1627 = vmatprep.subr.mxu0 0.0
    %1628 = vmatpush1.msra.mxu0 %v1588
    %1629 = vmatprep.subr.mxu0 0.0
    %1630 = vmatpush1.msra.mxu0 %v1587
    %1631 = vmatprep.subr.mxu0 0.0
    %1632 = vmatpush2.msra.mxu0 0.0
    %1633 = vmatprep.subr.mxu0 0.0
    %1634 = vmatpush2.msra.mxu0 0.0
    %1635 = vmatprep.subr.mxu0 0.0
    %1636 = vmatpush2.msra.mxu0 0.0
    %1637 = vmatprep.subr.mxu0 0.0
    %1638 = vmatpush2.msra.mxu0 0.0
    %1639 = vmatprep.subr.mxu0 0.0
    %1640 = vmatpush2.msra.mxu0 0.0
    %1641 = vmatprep.subr.mxu0 0.0
    %1642 = vmatpush2.msra.mxu0 0.0
    %1643 = vmatprep.subr.mxu0 0.0
    %1644 = vmatpush2.msra.mxu0 0.0
    %1645 = vmatprep.subr.mxu0 0.0
    %1646 = vmatpush2.msra.mxu0 0.0
    %1647 = vmatprep.subr.mxu0 0.0
    %1648 = vmatpush2.msra.mxu0 0.0
    %1649 = vmatprep.subr.mxu0 0.0
    %1650 = vmatpush2.msra.mxu0 0.0
    %1651 = vmatprep.subr.mxu0 0.0
    %1652 = vmatpush2.msra.mxu0 0.0
    %1653 = vmatprep.subr.mxu0 0.0
    %1654 = vmatpush2.msra.mxu0 0.0
    %1655 = vmatprep.subr.mxu0 0.0
    %1656 = vmatpush2.msra.mxu0 0.0
    %1657 = vmatprep.subr.mxu0 0.0
    %1658 = vmatpush2.msra.mxu0 0.0
    %1659 = vmatprep.subr.mxu0 0.0
    %1660 = vmatpush2.msra.mxu0 0.0
    %1661 = vmatprep.subr.mxu0 0.0
    %1662 = vmatpush2.msra.mxu0 0.0
    %1663 = vmatprep.mubr.f32.mxu0 0.0
    %1664 = vmatmul.mubr.f32.gmra.mxu0 %v76
    %v1665 = vpop.f32.mrf.mxu0
    %v1666 = vadd.f32 %v1597, %v1665
    %v1667 = vpop.f32.mrf.mxu0
    %1668 = vmatprep.mubr.f32.mxu0 0.0
    %1669 = vmatmul.mubr.f32.gmra.mxu0 %v79
    %v1670 = vpop.f32.mrf.mxu0
    %v1671 = vadd.f32 %v1597, %v1670
    %v1672 = vpop.f32.mrf.mxu0
    %1673 = vdwg.mxu0
    %v1675 = vsel %vm328, %v1490, 0
    %v1678 = vsel %vm328, %v1578, 0
    %1680 = vmatprep.subr.mxu0 0.0
    %1681 = vmatpush1.xpose.msra.mxu0 0.0
    %1682 = vmatprep.subr.mxu0 0.0
    %1683 = vmatpush1.xpose.msra.mxu0 0.0
    %1684 = vmatprep.subr.mxu0 0.0
    %1685 = vmatpush1.xpose.msra.mxu0 0.0
    %1686 = vmatprep.subr.mxu0 0.0
    %1687 = vmatpush1.xpose.msra.mxu0 0.0
    %1688 = vmatprep.subr.mxu0 0.0
    %1689 = vmatpush1.xpose.msra.mxu0 0.0
    %1690 = vmatprep.subr.mxu0 0.0
    %1691 = vmatpush1.xpose.msra.mxu0 0.0
    %1692 = vmatprep.subr.mxu0 0.0
    %1693 = vmatpush1.xpose.msra.mxu0 0.0
    %1694 = vmatprep.subr.mxu0 0.0
    %1695 = vmatpush1.xpose.msra.mxu0 0.0
    %1696 = vmatprep.subr.mxu0 0.0
    %1697 = vmatpush1.xpose.msra.mxu0 0.0
    %1698 = vmatprep.subr.mxu0 0.0
    %1699 = vmatpush1.xpose.msra.mxu0 0.0
    %1700 = vmatprep.subr.mxu0 0.0
    %1701 = vmatpush1.xpose.msra.mxu0 0.0
    %1702 = vmatprep.subr.mxu0 0.0
    %1703 = vmatpush1.xpose.msra.mxu0 0.0
    %1704 = vmatprep.subr.mxu0 0.0
    %1705 = vmatpush1.xpose.msra.mxu0 0.0
    %1706 = vmatprep.subr.mxu0 0.0
    %1707 = vmatpush1.xpose.msra.mxu0 0.0
    %1708 = vmatprep.subr.mxu0 0.0
    %1709 = vmatpush1.xpose.msra.mxu0 0.0
    %1710 = vmatprep.subr.mxu0 0.0
    %1711 = vmatpush1.xpose.msra.mxu0 %v1678
    %1712 = vmatprep.subr.mxu0 0.0
    %1713 = vmatpush2.xpose.msra.mxu0 0.0
    %1714 = vmatprep.subr.mxu0 0.0
    %1715 = vmatpush2.xpose.msra.mxu0 0.0
    %1716 = vmatprep.subr.mxu0 0.0
    %1717 = vmatpush2.xpose.msra.mxu0 0.0
    %1718 = vmatprep.subr.mxu0 0.0
    %1719 = vmatpush2.xpose.msra.mxu0 0.0
    %1720 = vmatprep.subr.mxu0 0.0
    %1721 = vmatpush2.xpose.msra.mxu0 0.0
    %1722 = vmatprep.subr.mxu0 0.0
    %1723 = vmatpush2.xpose.msra.mxu0 0.0
    %1724 = vmatprep.subr.mxu0 0.0
    %1725 = vmatpush2.xpose.msra.mxu0 0.0
    %1726 = vmatprep.subr.mxu0 0.0
    %1727 = vmatpush2.xpose.msra.mxu0 0.0
    %1728 = vmatprep.subr.mxu0 0.0
    %1729 = vmatpush2.xpose.msra.mxu0 0.0
    %1730 = vmatprep.subr.mxu0 0.0
    %1731 = vmatpush2.xpose.msra.mxu0 0.0
    %1732 = vmatprep.subr.mxu0 0.0
    %1733 = vmatpush2.xpose.msra.mxu0 0.0
    %1734 = vmatprep.subr.mxu0 0.0
    %1735 = vmatpush2.xpose.msra.mxu0 0.0
    %1736 = vmatprep.subr.mxu0 0.0
    %1737 = vmatpush2.xpose.msra.mxu0 0.0
    %1738 = vmatprep.subr.mxu0 0.0
    %1739 = vmatpush2.xpose.msra.mxu0 0.0
    %1740 = vmatprep.subr.mxu0 0.0
    %1741 = vmatpush2.xpose.msra.mxu0 0.0
    %1742 = vmatprep.subr.mxu0 0.0
    %1743 = vmatpush2.xpose.msra.mxu0 0.0
    %1744 = vmatprep.mubr.f32.mxu0 0.0
    %1745 = vmatmul.mubr.f32.gmra.mxu0 %v1675
    %v1746 = vpop.f32.mrf.mxu0
    %v1747 = vadd.f32 %v62, %v1746
    %v1748 = vpop.f32.mrf.mxu0
    %1749 = vdwg.mxu0
    %v1751 = vsel %vm328, %v1495, 0
    %v1754 = vsel %vm328, %v1583, 0
    %1756 = vmatprep.subr.mxu0 0.0
    %1757 = vmatpush1.xpose.msra.mxu0 0.0
    %1758 = vmatprep.subr.mxu0 0.0
    %1759 = vmatpush1.xpose.msra.mxu0 0.0
    %1760 = vmatprep.subr.mxu0 0.0
    %1761 = vmatpush1.xpose.msra.mxu0 0.0
    %1762 = vmatprep.subr.mxu0 0.0
    %1763 = vmatpush1.xpose.msra.mxu0 0.0
    %1764 = vmatprep.subr.mxu0 0.0
    %1765 = vmatpush1.xpose.msra.mxu0 0.0
    %1766 = vmatprep.subr.mxu0 0.0
    %1767 = vmatpush1.xpose.msra.mxu0 0.0
    %1768 = vmatprep.subr.mxu0 0.0
    %1769 = vmatpush1.xpose.msra.mxu0 0.0
    %1770 = vmatprep.subr.mxu0 0.0
    %1771 = vmatpush1.xpose.msra.mxu0 0.0
    %1772 = vmatprep.subr.mxu0 0.0
    %1773 = vmatpush1.xpose.msra.mxu0 0.0
    %1774 = vmatprep.subr.mxu0 0.0
    %1775 = vmatpush1.xpose.msra.mxu0 0.0
    %1776 = vmatprep.subr.mxu0 0.0
    %1777 = vmatpush1.xpose.msra.mxu0 0.0
    %1778 = vmatprep.subr.mxu0 0.0
    %1779 = vmatpush1.xpose.msra.mxu0 0.0
    %1780 = vmatprep.subr.mxu0 0.0
    %1781 = vmatpush1.xpose.msra.mxu0 0.0
    %1782 = vmatprep.subr.mxu0 0.0
    %1783 = vmatpush1.xpose.msra.mxu0 0.0
    %1784 = vmatprep.subr.mxu0 0.0
    %1785 = vmatpush1.xpose.msra.mxu0 0.0
    %1786 = vmatprep.subr.mxu0 0.0
    %1787 = vmatpush1.xpose.msra.mxu0 %v1754
    %1788 = vmatprep.subr.mxu0 0.0
    %1789 = vmatpush2.xpose.msra.mxu0 0.0
    %1790 = vmatprep.subr.mxu0 0.0
    %1791 = vmatpush2.xpose.msra.mxu0 0.0
    %1792 = vmatprep.subr.mxu0 0.0
    %1793 = vmatpush2.xpose.msra.mxu0 0.0
    %1794 = vmatprep.subr.mxu0 0.0
    %1795 = vmatpush2.xpose.msra.mxu0 0.0
    %1796 = vmatprep.subr.mxu0 0.0
    %1797 = vmatpush2.xpose.msra.mxu0 0.0
    %1798 = vmatprep.subr.mxu0 0.0
    %1799 = vmatpush2.xpose.msra.mxu0 0.0
    %1800 = vmatprep.subr.mxu0 0.0
    %1801 = vmatpush2.xpose.msra.mxu0 0.0
    %1802 = vmatprep.subr.mxu0 0.0
    %1803 = vmatpush2.xpose.msra.mxu0 0.0
    %1804 = vmatprep.subr.mxu0 0.0
    %1805 = vmatpush2.xpose.msra.mxu0 0.0
    %1806 = vmatprep.subr.mxu0 0.0
    %1807 = vmatpush2.xpose.msra.mxu0 0.0
    %1808 = vmatprep.subr.mxu0 0.0
    %1809 = vmatpush2.xpose.msra.mxu0 0.0
    %1810 = vmatprep.subr.mxu0 0.0
    %1811 = vmatpush2.xpose.msra.mxu0 0.0
    %1812 = vmatprep.subr.mxu0 0.0
    %1813 = vmatpush2.xpose.msra.mxu0 0.0
    %1814 = vmatprep.subr.mxu0 0.0
    %1815 = vmatpush2.xpose.msra.mxu0 0.0
    %1816 = vmatprep.subr.mxu0 0.0
    %1817 = vmatpush2.xpose.msra.mxu0 0.0
    %1818 = vmatprep.subr.mxu0 0.0
    %1819 = vmatpush2.xpose.msra.mxu0 0.0
    %1820 = vmatprep.mubr.f32.mxu0 0.0
    %1821 = vmatmul.mubr.f32.gmra.mxu0 %v1751
    %v1822 = vpop.f32.mrf.mxu0
    %v1823 = vadd.f32 %v62, %v1822
    %v1824 = vpop.f32.mrf.mxu0
    %1825 = vdwg.mxu0
    %v1826 = vsel %vm328, %v1747, -inf
    %1827 = vmax.xlane.f32.xlu0 %v1826
    %v1828 = vpop.xlane.xlu0 %1827
    %v1829 = vsel %vm328, %v1823, -inf
    %1830 = vmax.xlane.f32.xlu0 %v1829
    %v1831 = vpop.xlane.xlu0 %1830
    %v1832 = vsub.f32 %v1747, %v1828
    %v1833 = vsub.f32 %v1823, %v1831
    %v1834 = vmul.f32 %v1832, 1.442695
    %v1835 = vpow.pop %v1834
    %v1836 = vmul.f32 %v1833, 1.442695
    %v1837 = vpow.pop %v1836
    %v1838 = vsel %vm328, %v1835, 0.0
    %1839 = vadd.xlane.f32.xlu0 %v1838
    %v1840 = vpop.xlane.xlu0 %1839
    %v1841 = vsel %vm328, %v1837, 0.0
    %1842 = vadd.xlane.f32.xlu0 %v1841
    %v1843 = vpop.xlane.xlu0 %1842
    %v1844 = vrcp.pop %v1840
    %v1845 = vrcp.pop %v1843
    %v1846 = vmul.f32 %v1840, %v1844
    %v1847 = vmul.f32 %v1843, %v1845
    %v1848 = vsub.f32 2.0, %v1846
    %v1849 = vsub.f32 2.0, %v1847
    %v1850 = vmul.f32 %v1844, %v1848
    %v1851 = vmul.f32 %v1845, %v1849
    %v1852 = vmul.f32 %v1835, %v1850
    %v1853 = vmul.f32 %v1837, %v1851
    %v1855 = vsel %vm328, %v1852, 0
    %1857 = vmatprep.subr.mxu0 0.0
    %1858 = vmatpush1.msra.mxu0 0.0
    %1859 = vmatprep.subr.mxu0 0.0
    %1860 = vmatpush1.msra.mxu0 0.0
    %1861 = vmatprep.subr.mxu0 0.0
    %1862 = vmatpush1.msra.mxu0 0.0
    %1863 = vmatprep.subr.mxu0 0.0
    %1864 = vmatpush1.msra.mxu0 0.0
    %1865 = vmatprep.subr.mxu0 0.0
    %1866 = vmatpush1.msra.mxu0 0.0
    %1867 = vmatprep.subr.mxu0 0.0
    %1868 = vmatpush1.msra.mxu0 0.0
    %1869 = vmatprep.subr.mxu0 0.0
    %1870 = vmatpush1.msra.mxu0 0.0
    %1871 = vmatprep.subr.mxu0 0.0
    %1872 = vmatpush1.msra.mxu0 0.0
    %1873 = vmatprep.subr.mxu0 0.0
    %1874 = vmatpush1.msra.mxu0 0.0
    %1875 = vmatprep.subr.mxu0 0.0
    %1876 = vmatpush1.msra.mxu0 0.0
    %1877 = vmatprep.subr.mxu0 0.0
    %1878 = vmatpush1.msra.mxu0 0.0
    %1879 = vmatprep.subr.mxu0 0.0
    %1880 = vmatpush1.msra.mxu0 0.0
    %1881 = vmatprep.subr.mxu0 0.0
    %1882 = vmatpush1.msra.mxu0 0.0
    %1883 = vmatprep.subr.mxu0 0.0
    %1884 = vmatpush1.msra.mxu0 0.0
    %1885 = vmatprep.subr.mxu0 0.0
    %1886 = vmatpush1.msra.mxu0 0.0
    %1887 = vmatprep.subr.mxu0 0.0
    %1888 = vmatpush1.msra.mxu0 %v1666
    %1889 = vmatprep.subr.mxu0 0.0
    %1890 = vmatpush2.msra.mxu0 0.0
    %1891 = vmatprep.subr.mxu0 0.0
    %1892 = vmatpush2.msra.mxu0 0.0
    %1893 = vmatprep.subr.mxu0 0.0
    %1894 = vmatpush2.msra.mxu0 0.0
    %1895 = vmatprep.subr.mxu0 0.0
    %1896 = vmatpush2.msra.mxu0 0.0
    %1897 = vmatprep.subr.mxu0 0.0
    %1898 = vmatpush2.msra.mxu0 0.0
    %1899 = vmatprep.subr.mxu0 0.0
    %1900 = vmatpush2.msra.mxu0 0.0
    %1901 = vmatprep.subr.mxu0 0.0
    %1902 = vmatpush2.msra.mxu0 0.0
    %1903 = vmatprep.subr.mxu0 0.0
    %1904 = vmatpush2.msra.mxu0 0.0
    %1905 = vmatprep.subr.mxu0 0.0
    %1906 = vmatpush2.msra.mxu0 0.0
    %1907 = vmatprep.subr.mxu0 0.0
    %1908 = vmatpush2.msra.mxu0 0.0
    %1909 = vmatprep.subr.mxu0 0.0
    %1910 = vmatpush2.msra.mxu0 0.0
    %1911 = vmatprep.subr.mxu0 0.0
    %1912 = vmatpush2.msra.mxu0 0.0
    %1913 = vmatprep.subr.mxu0 0.0
    %1914 = vmatpush2.msra.mxu0 0.0
    %1915 = vmatprep.subr.mxu0 0.0
    %1916 = vmatpush2.msra.mxu0 0.0
    %1917 = vmatprep.subr.mxu0 0.0
    %1918 = vmatpush2.msra.mxu0 0.0
    %1919 = vmatprep.subr.mxu0 0.0
    %1920 = vmatpush2.msra.mxu0 0.0
    %1921 = vmatprep.mubr.f32.mxu0 0.0
    %1922 = vmatmul.mubr.f32.gmra.mxu0 %v1855
    %v1923 = vpop.f32.mrf.mxu0
    %v1924 = vadd.f32 0.0, %v1923
    %v1925 = vpop.f32.mrf.mxu0
    %1926 = vdwg.mxu0
    %v1928 = vsel %vm328, %v1853, 0
    %1930 = vmatprep.subr.mxu0 0.0
    %1931 = vmatpush1.msra.mxu0 0.0
    %1932 = vmatprep.subr.mxu0 0.0
    %1933 = vmatpush1.msra.mxu0 0.0
    %1934 = vmatprep.subr.mxu0 0.0
    %1935 = vmatpush1.msra.mxu0 0.0
    %1936 = vmatprep.subr.mxu0 0.0
    %1937 = vmatpush1.msra.mxu0 0.0
    %1938 = vmatprep.subr.mxu0 0.0
    %1939 = vmatpush1.msra.mxu0 0.0
    %1940 = vmatprep.subr.mxu0 0.0
    %1941 = vmatpush1.msra.mxu0 0.0
    %1942 = vmatprep.subr.mxu0 0.0
    %1943 = vmatpush1.msra.mxu0 0.0
    %1944 = vmatprep.subr.mxu0 0.0
    %1945 = vmatpush1.msra.mxu0 0.0
    %1946 = vmatprep.subr.mxu0 0.0
    %1947 = vmatpush1.msra.mxu0 0.0
    %1948 = vmatprep.subr.mxu0 0.0
    %1949 = vmatpush1.msra.mxu0 0.0
    %1950 = vmatprep.subr.mxu0 0.0
    %1951 = vmatpush1.msra.mxu0 0.0
    %1952 = vmatprep.subr.mxu0 0.0
    %1953 = vmatpush1.msra.mxu0 0.0
    %1954 = vmatprep.subr.mxu0 0.0
    %1955 = vmatpush1.msra.mxu0 0.0
    %1956 = vmatprep.subr.mxu0 0.0
    %1957 = vmatpush1.msra.mxu0 0.0
    %1958 = vmatprep.subr.mxu0 0.0
    %1959 = vmatpush1.msra.mxu0 0.0
    %1960 = vmatprep.subr.mxu0 0.0
    %1961 = vmatpush1.msra.mxu0 %v1671
    %1962 = vmatprep.subr.mxu0 0.0
    %1963 = vmatpush2.msra.mxu0 0.0
    %1964 = vmatprep.subr.mxu0 0.0
    %1965 = vmatpush2.msra.mxu0 0.0
    %1966 = vmatprep.subr.mxu0 0.0
    %1967 = vmatpush2.msra.mxu0 0.0
    %1968 = vmatprep.subr.mxu0 0.0
    %1969 = vmatpush2.msra.mxu0 0.0
    %1970 = vmatprep.subr.mxu0 0.0
    %1971 = vmatpush2.msra.mxu0 0.0
    %1972 = vmatprep.subr.mxu0 0.0
    %1973 = vmatpush2.msra.mxu0 0.0
    %1974 = vmatprep.subr.mxu0 0.0
    %1975 = vmatpush2.msra.mxu0 0.0
    %1976 = vmatprep.subr.mxu0 0.0
    %1977 = vmatpush2.msra.mxu0 0.0
    %1978 = vmatprep.subr.mxu0 0.0
    %1979 = vmatpush2.msra.mxu0 0.0
    %1980 = vmatprep.subr.mxu0 0.0
    %1981 = vmatpush2.msra.mxu0 0.0
    %1982 = vmatprep.subr.mxu0 0.0
    %1983 = vmatpush2.msra.mxu0 0.0
    %1984 = vmatprep.subr.mxu0 0.0
    %1985 = vmatpush2.msra.mxu0 0.0
    %1986 = vmatprep.subr.mxu0 0.0
    %1987 = vmatpush2.msra.mxu0 0.0
    %1988 = vmatprep.subr.mxu0 0.0
    %1989 = vmatpush2.msra.mxu0 0.0
    %1990 = vmatprep.subr.mxu0 0.0
    %1991 = vmatpush2.msra.mxu0 0.0
    %1992 = vmatprep.subr.mxu0 0.0
    %1993 = vmatpush2.msra.mxu0 0.0
    %1994 = vmatprep.mubr.f32.mxu0 0.0
    %1995 = vmatmul.mubr.f32.gmra.mxu0 %v1928
    %v1996 = vpop.f32.mrf.mxu0
    %v1997 = vadd.f32 0.0, %v1996
    %v1998 = vpop.f32.mrf.mxu0
    %1999 = vdwg.mxu0
    %s2000 = scalar_lea.vmem %s8, 16
    %v2001 = vld [vmem:[%s2000] sm:$0xff]
    %v2003 = vsel %vm328, %v1924, 0
    %v2006 = vsel %vm328, %v1997, 0
    %2008 = vmatprep.subr.mxu0 0.0
    %2009 = vmatpush1.msra.mxu0 0.0
    %2010 = vmatprep.subr.mxu0 0.0
    %2011 = vmatpush1.msra.mxu0 0.0
    %2012 = vmatprep.subr.mxu0 0.0
    %2013 = vmatpush1.msra.mxu0 0.0
    %2014 = vmatprep.subr.mxu0 0.0
    %2015 = vmatpush1.msra.mxu0 0.0
    %2016 = vmatprep.subr.mxu0 0.0
    %2017 = vmatpush1.msra.mxu0 0.0
    %2018 = vmatprep.subr.mxu0 0.0
    %2019 = vmatpush1.msra.mxu0 0.0
    %2020 = vmatprep.subr.mxu0 0.0
    %2021 = vmatpush1.msra.mxu0 0.0
    %2022 = vmatprep.subr.mxu0 0.0
    %2023 = vmatpush1.msra.mxu0 0.0
    %2024 = vmatprep.subr.mxu0 0.0
    %2025 = vmatpush1.msra.mxu0 0.0
    %2026 = vmatprep.subr.mxu0 0.0
    %2027 = vmatpush1.msra.mxu0 0.0
    %2028 = vmatprep.subr.mxu0 0.0
    %2029 = vmatpush1.msra.mxu0 0.0
    %2030 = vmatprep.subr.mxu0 0.0
    %2031 = vmatpush1.msra.mxu0 0.0
    %2032 = vmatprep.subr.mxu0 0.0
    %2033 = vmatpush1.msra.mxu0 0.0
    %2034 = vmatprep.subr.mxu0 0.0
    %2035 = vmatpush1.msra.mxu0 0.0
    %2036 = vmatprep.subr.mxu0 0.0
    %2037 = vmatpush1.msra.mxu0 0.0
    %2038 = vmatprep.subr.mxu0 0.0
    %2039 = vmatpush1.msra.mxu0 %v2001
    %2040 = vmatprep.subr.mxu0 0.0
    %2041 = vmatpush2.msra.mxu0 0.0
    %2042 = vmatprep.subr.mxu0 0.0
    %2043 = vmatpush2.msra.mxu0 0.0
    %2044 = vmatprep.subr.mxu0 0.0
    %2045 = vmatpush2.msra.mxu0 0.0
    %2046 = vmatprep.subr.mxu0 0.0
    %2047 = vmatpush2.msra.mxu0 0.0
    %2048 = vmatprep.subr.mxu0 0.0
    %2049 = vmatpush2.msra.mxu0 0.0
    %2050 = vmatprep.subr.mxu0 0.0
    %2051 = vmatpush2.msra.mxu0 0.0
    %2052 = vmatprep.subr.mxu0 0.0
    %2053 = vmatpush2.msra.mxu0 0.0
    %2054 = vmatprep.subr.mxu0 0.0
    %2055 = vmatpush2.msra.mxu0 0.0
    %2056 = vmatprep.subr.mxu0 0.0
    %2057 = vmatpush2.msra.mxu0 0.0
    %2058 = vmatprep.subr.mxu0 0.0
    %2059 = vmatpush2.msra.mxu0 0.0
    %2060 = vmatprep.subr.mxu0 0.0
    %2061 = vmatpush2.msra.mxu0 0.0
    %2062 = vmatprep.subr.mxu0 0.0
    %2063 = vmatpush2.msra.mxu0 0.0
    %2064 = vmatprep.subr.mxu0 0.0
    %2065 = vmatpush2.msra.mxu0 0.0
    %2066 = vmatprep.subr.mxu0 0.0
    %2067 = vmatpush2.msra.mxu0 0.0
    %2068 = vmatprep.subr.mxu0 0.0
    %2069 = vmatpush2.msra.mxu0 0.0
    %2070 = vmatprep.subr.mxu0 0.0
    %2071 = vmatpush2.msra.mxu0 0.0
    %2072 = vmatprep.mubr.f32.mxu0 0.0
    %2073 = vmatmul.mubr.f32.gmra.mxu0 %v2003
    %v2074 = vpop.f32.mrf.mxu0
    %v2075 = vadd.f32 0.0, %v2074
    %v2076 = vpop.f32.mrf.mxu0
    %2077 = vmatprep.mubr.f32.mxu0 0.0
    %2078 = vmatmul.mubr.f32.gmra.mxu0 %v2006
    %v2079 = vpop.f32.mrf.mxu0
    %v2080 = vadd.f32 0.0, %v2079
    %v2081 = vpop.f32.mrf.mxu0
    %2082 = vdwg.mxu0
    %v2083 = vadd.f32 %v1402, %v2075
    %v2084 = vadd.f32 %v1407, %v2080
    %s2085 = scalar_lea.vmem %s2, 96
    %v2086 = vld [vmem:[%s2085] sm:$0xff]
    %v2087 = vld [vmem:[%s2085 + $0x8] sm:$0xff]
    %v2088 = vld [vmem:[%s2085 + $0x10] sm:$0xff]
    %v2089 = vld [vmem:[%s2085 + $0x18] sm:$0xff]
    %s2090 = scalar_lea.vmem %s3, 3
    %v2091 = vld [vmem:[%s2090] sm:$0x1]
    %v2093 = vlaneseq
    %v2094 = vshrl.u32 %v2093, 7
    %v2095 = vsub.s32 0, %v2094
    %v2096 = vrot.slane %v2091, %v2095
    %2098 = vmatprep.subr.mxu0 0.0
    %2099 = vmatpush1.msra.mxu0 0.0
    %2100 = vmatprep.subr.mxu0 0.0
    %2101 = vmatpush1.msra.mxu0 0.0
    %2102 = vmatprep.subr.mxu0 0.0
    %2103 = vmatpush1.msra.mxu0 0.0
    %2104 = vmatprep.subr.mxu0 0.0
    %2105 = vmatpush1.msra.mxu0 0.0
    %2106 = vmatprep.subr.mxu0 0.0
    %2107 = vmatpush1.msra.mxu0 0.0
    %2108 = vmatprep.subr.mxu0 0.0
    %2109 = vmatpush1.msra.mxu0 0.0
    %2110 = vmatprep.subr.mxu0 0.0
    %2111 = vmatpush1.msra.mxu0 0.0
    %2112 = vmatprep.subr.mxu0 0.0
    %2113 = vmatpush1.msra.mxu0 0.0
    %2114 = vmatprep.subr.mxu0 0.0
    %2115 = vmatpush1.msra.mxu0 0.0
    %2116 = vmatprep.subr.mxu0 0.0
    %2117 = vmatpush1.msra.mxu0 0.0
    %2118 = vmatprep.subr.mxu0 0.0
    %2119 = vmatpush1.msra.mxu0 0.0
    %2120 = vmatprep.subr.mxu0 0.0
    %2121 = vmatpush1.msra.mxu0 0.0
    %2122 = vmatprep.subr.mxu0 0.0
    %2123 = vmatpush1.msra.mxu0 %v2089
    %2124 = vmatprep.subr.mxu0 0.0
    %2125 = vmatpush1.msra.mxu0 %v2088
    %2126 = vmatprep.subr.mxu0 0.0
    %2127 = vmatpush1.msra.mxu0 %v2087
    %2128 = vmatprep.subr.mxu0 0.0
    %2129 = vmatpush1.msra.mxu0 %v2086
    %2130 = vmatprep.subr.mxu0 0.0
    %2131 = vmatpush2.msra.mxu0 0.0
    %2132 = vmatprep.subr.mxu0 0.0
    %2133 = vmatpush2.msra.mxu0 0.0
    %2134 = vmatprep.subr.mxu0 0.0
    %2135 = vmatpush2.msra.mxu0 0.0
    %2136 = vmatprep.subr.mxu0 0.0
    %2137 = vmatpush2.msra.mxu0 0.0
    %2138 = vmatprep.subr.mxu0 0.0
    %2139 = vmatpush2.msra.mxu0 0.0
    %2140 = vmatprep.subr.mxu0 0.0
    %2141 = vmatpush2.msra.mxu0 0.0
    %2142 = vmatprep.subr.mxu0 0.0
    %2143 = vmatpush2.msra.mxu0 0.0
    %2144 = vmatprep.subr.mxu0 0.0
    %2145 = vmatpush2.msra.mxu0 0.0
    %2146 = vmatprep.subr.mxu0 0.0
    %2147 = vmatpush2.msra.mxu0 0.0
    %2148 = vmatprep.subr.mxu0 0.0
    %2149 = vmatpush2.msra.mxu0 0.0
    %2150 = vmatprep.subr.mxu0 0.0
    %2151 = vmatpush2.msra.mxu0 0.0
    %2152 = vmatprep.subr.mxu0 0.0
    %2153 = vmatpush2.msra.mxu0 0.0
    %2154 = vmatprep.subr.mxu0 0.0
    %2155 = vmatpush2.msra.mxu0 0.0
    %2156 = vmatprep.subr.mxu0 0.0
    %2157 = vmatpush2.msra.mxu0 0.0
    %2158 = vmatprep.subr.mxu0 0.0
    %2159 = vmatpush2.msra.mxu0 0.0
    %2160 = vmatprep.subr.mxu0 0.0
    %2161 = vmatpush2.msra.mxu0 0.0
    %2162 = vmatprep.mubr.f32.mxu0 0.0
    %2163 = vmatmul.mubr.f32.gmra.mxu0 %v76
    %v2164 = vpop.f32.mrf.mxu0
    %v2165 = vadd.f32 %v2096, %v2164
    %v2166 = vpop.f32.mrf.mxu0
    %2167 = vmatprep.mubr.f32.mxu0 0.0
    %2168 = vmatmul.mubr.f32.gmra.mxu0 %v79
    %v2169 = vpop.f32.mrf.mxu0
    %v2170 = vadd.f32 %v2096, %v2169
    %v2171 = vpop.f32.mrf.mxu0
    %2172 = vdwg.mxu0
    %s2173 = scalar_lea.vmem %s4, 96
    %v2174 = vld [vmem:[%s2173] sm:$0xff]
    %v2175 = vld [vmem:[%s2173 + $0x8] sm:$0xff]
    %v2176 = vld [vmem:[%s2173 + $0x10] sm:$0xff]
    %v2177 = vld [vmem:[%s2173 + $0x18] sm:$0xff]
    %s2178 = scalar_lea.vmem %s5, 3
    %v2179 = vld [vmem:[%s2178] sm:$0x1]
    %v2181 = vlaneseq
    %v2182 = vshrl.u32 %v2181, 7
    %v2183 = vsub.s32 0, %v2182
    %v2184 = vrot.slane %v2179, %v2183
    %2186 = vmatprep.subr.mxu0 0.0
    %2187 = vmatpush1.msra.mxu0 0.0
    %2188 = vmatprep.subr.mxu0 0.0
    %2189 = vmatpush1.msra.mxu0 0.0
    %2190 = vmatprep.subr.mxu0 0.0
    %2191 = vmatpush1.msra.mxu0 0.0
    %2192 = vmatprep.subr.mxu0 0.0
    %2193 = vmatpush1.msra.mxu0 0.0
    %2194 = vmatprep.subr.mxu0 0.0
    %2195 = vmatpush1.msra.mxu0 0.0
    %2196 = vmatprep.subr.mxu0 0.0
    %2197 = vmatpush1.msra.mxu0 0.0
    %2198 = vmatprep.subr.mxu0 0.0
    %2199 = vmatpush1.msra.mxu0 0.0
    %2200 = vmatprep.subr.mxu0 0.0
    %2201 = vmatpush1.msra.mxu0 0.0
    %2202 = vmatprep.subr.mxu0 0.0
    %2203 = vmatpush1.msra.mxu0 0.0
    %2204 = vmatprep.subr.mxu0 0.0
    %2205 = vmatpush1.msra.mxu0 0.0
    %2206 = vmatprep.subr.mxu0 0.0
    %2207 = vmatpush1.msra.mxu0 0.0
    %2208 = vmatprep.subr.mxu0 0.0
    %2209 = vmatpush1.msra.mxu0 0.0
    %2210 = vmatprep.subr.mxu0 0.0
    %2211 = vmatpush1.msra.mxu0 %v2177
    %2212 = vmatprep.subr.mxu0 0.0
    %2213 = vmatpush1.msra.mxu0 %v2176
    %2214 = vmatprep.subr.mxu0 0.0
    %2215 = vmatpush1.msra.mxu0 %v2175
    %2216 = vmatprep.subr.mxu0 0.0
    %2217 = vmatpush1.msra.mxu0 %v2174
    %2218 = vmatprep.subr.mxu0 0.0
    %2219 = vmatpush2.msra.mxu0 0.0
    %2220 = vmatprep.subr.mxu0 0.0
    %2221 = vmatpush2.msra.mxu0 0.0
    %2222 = vmatprep.subr.mxu0 0.0
    %2223 = vmatpush2.msra.mxu0 0.0
    %2224 = vmatprep.subr.mxu0 0.0
    %2225 = vmatpush2.msra.mxu0 0.0
    %2226 = vmatprep.subr.mxu0 0.0
    %2227 = vmatpush2.msra.mxu0 0.0
    %2228 = vmatprep.subr.mxu0 0.0
    %2229 = vmatpush2.msra.mxu0 0.0
    %2230 = vmatprep.subr.mxu0 0.0
    %2231 = vmatpush2.msra.mxu0 0.0
    %2232 = vmatprep.subr.mxu0 0.0
    %2233 = vmatpush2.msra.mxu0 0.0
    %2234 = vmatprep.subr.mxu0 0.0
    %2235 = vmatpush2.msra.mxu0 0.0
    %2236 = vmatprep.subr.mxu0 0.0
    %2237 = vmatpush2.msra.mxu0 0.0
    %2238 = vmatprep.subr.mxu0 0.0
    %2239 = vmatpush2.msra.mxu0 0.0
    %2240 = vmatprep.subr.mxu0 0.0
    %2241 = vmatpush2.msra.mxu0 0.0
    %2242 = vmatprep.subr.mxu0 0.0
    %2243 = vmatpush2.msra.mxu0 0.0
    %2244 = vmatprep.subr.mxu0 0.0
    %2245 = vmatpush2.msra.mxu0 0.0
    %2246 = vmatprep.subr.mxu0 0.0
    %2247 = vmatpush2.msra.mxu0 0.0
    %2248 = vmatprep.subr.mxu0 0.0
    %2249 = vmatpush2.msra.mxu0 0.0
    %2250 = vmatprep.mubr.f32.mxu0 0.0
    %2251 = vmatmul.mubr.f32.gmra.mxu0 %v76
    %v2252 = vpop.f32.mrf.mxu0
    %v2253 = vadd.f32 %v2184, %v2252
    %v2254 = vpop.f32.mrf.mxu0
    %2255 = vmatprep.mubr.f32.mxu0 0.0
    %2256 = vmatmul.mubr.f32.gmra.mxu0 %v79
    %v2257 = vpop.f32.mrf.mxu0
    %v2258 = vadd.f32 %v2184, %v2257
    %v2259 = vpop.f32.mrf.mxu0
    %2260 = vdwg.mxu0
    %s2261 = scalar_lea.vmem %s6, 96
    %v2262 = vld [vmem:[%s2261] sm:$0xff]
    %v2263 = vld [vmem:[%s2261 + $0x8] sm:$0xff]
    %v2264 = vld [vmem:[%s2261 + $0x10] sm:$0xff]
    %v2265 = vld [vmem:[%s2261 + $0x18] sm:$0xff]
    %s2266 = scalar_lea.vmem %s7, 3
    %v2267 = vld [vmem:[%s2266] sm:$0x1]
    %v2269 = vlaneseq
    %v2270 = vshrl.u32 %v2269, 7
    %v2271 = vsub.s32 0, %v2270
    %v2272 = vrot.slane %v2267, %v2271
    %2274 = vmatprep.subr.mxu0 0.0
    %2275 = vmatpush1.msra.mxu0 0.0
    %2276 = vmatprep.subr.mxu0 0.0
    %2277 = vmatpush1.msra.mxu0 0.0
    %2278 = vmatprep.subr.mxu0 0.0
    %2279 = vmatpush1.msra.mxu0 0.0
    %2280 = vmatprep.subr.mxu0 0.0
    %2281 = vmatpush1.msra.mxu0 0.0
    %2282 = vmatprep.subr.mxu0 0.0
    %2283 = vmatpush1.msra.mxu0 0.0
    %2284 = vmatprep.subr.mxu0 0.0
    %2285 = vmatpush1.msra.mxu0 0.0
    %2286 = vmatprep.subr.mxu0 0.0
    %2287 = vmatpush1.msra.mxu0 0.0
    %2288 = vmatprep.subr.mxu0 0.0
    %2289 = vmatpush1.msra.mxu0 0.0
    %2290 = vmatprep.subr.mxu0 0.0
    %2291 = vmatpush1.msra.mxu0 0.0
    %2292 = vmatprep.subr.mxu0 0.0
    %2293 = vmatpush1.msra.mxu0 0.0
    %2294 = vmatprep.subr.mxu0 0.0
    %2295 = vmatpush1.msra.mxu0 0.0
    %2296 = vmatprep.subr.mxu0 0.0
    %2297 = vmatpush1.msra.mxu0 0.0
    %2298 = vmatprep.subr.mxu0 0.0
    %2299 = vmatpush1.msra.mxu0 %v2265
    %2300 = vmatprep.subr.mxu0 0.0
    %2301 = vmatpush1.msra.mxu0 %v2264
    %2302 = vmatprep.subr.mxu0 0.0
    %2303 = vmatpush1.msra.mxu0 %v2263
    %2304 = vmatprep.subr.mxu0 0.0
    %2305 = vmatpush1.msra.mxu0 %v2262
    %2306 = vmatprep.subr.mxu0 0.0
    %2307 = vmatpush2.msra.mxu0 0.0
    %2308 = vmatprep.subr.mxu0 0.0
    %2309 = vmatpush2.msra.mxu0 0.0
    %2310 = vmatprep.subr.mxu0 0.0
    %2311 = vmatpush2.msra.mxu0 0.0
    %2312 = vmatprep.subr.mxu0 0.0
    %2313 = vmatpush2.msra.mxu0 0.0
    %2314 = vmatprep.subr.mxu0 0.0
    %2315 = vmatpush2.msra.mxu0 0.0
    %2316 = vmatprep.subr.mxu0 0.0
    %2317 = vmatpush2.msra.mxu0 0.0
    %2318 = vmatprep.subr.mxu0 0.0
    %2319 = vmatpush2.msra.mxu0 0.0
    %2320 = vmatprep.subr.mxu0 0.0
    %2321 = vmatpush2.msra.mxu0 0.0
    %2322 = vmatprep.subr.mxu0 0.0
    %2323 = vmatpush2.msra.mxu0 0.0
    %2324 = vmatprep.subr.mxu0 0.0
    %2325 = vmatpush2.msra.mxu0 0.0
    %2326 = vmatprep.subr.mxu0 0.0
    %2327 = vmatpush2.msra.mxu0 0.0
    %2328 = vmatprep.subr.mxu0 0.0
    %2329 = vmatpush2.msra.mxu0 0.0
    %2330 = vmatprep.subr.mxu0 0.0
    %2331 = vmatpush2.msra.mxu0 0.0
    %2332 = vmatprep.subr.mxu0 0.0
    %2333 = vmatpush2.msra.mxu0 0.0
    %2334 = vmatprep.subr.mxu0 0.0
    %2335 = vmatpush2.msra.mxu0 0.0
    %2336 = vmatprep.subr.mxu0 0.0
    %2337 = vmatpush2.msra.mxu0 0.0
    %2338 = vmatprep.mubr.f32.mxu0 0.0
    %2339 = vmatmul.mubr.f32.gmra.mxu0 %v76
    %v2340 = vpop.f32.mrf.mxu0
    %v2341 = vadd.f32 %v2272, %v2340
    %v2342 = vpop.f32.mrf.mxu0
    %2343 = vmatprep.mubr.f32.mxu0 0.0
    %2344 = vmatmul.mubr.f32.gmra.mxu0 %v79
    %v2345 = vpop.f32.mrf.mxu0
    %v2346 = vadd.f32 %v2272, %v2345
    %v2347 = vpop.f32.mrf.mxu0
    %2348 = vdwg.mxu0
    %v2350 = vsel %vm328, %v2165, 0
    %v2353 = vsel %vm328, %v2253, 0
    %2355 = vmatprep.subr.mxu0 0.0
    %2356 = vmatpush1.xpose.msra.mxu0 0.0
    %2357 = vmatprep.subr.mxu0 0.0
    %2358 = vmatpush1.xpose.msra.mxu0 0.0
    %2359 = vmatprep.subr.mxu0 0.0
    %2360 = vmatpush1.xpose.msra.mxu0 0.0
    %2361 = vmatprep.subr.mxu0 0.0
    %2362 = vmatpush1.xpose.msra.mxu0 0.0
    %2363 = vmatprep.subr.mxu0 0.0
    %2364 = vmatpush1.xpose.msra.mxu0 0.0
    %2365 = vmatprep.subr.mxu0 0.0
    %2366 = vmatpush1.xpose.msra.mxu0 0.0
    %2367 = vmatprep.subr.mxu0 0.0
    %2368 = vmatpush1.xpose.msra.mxu0 0.0
    %2369 = vmatprep.subr.mxu0 0.0
    %2370 = vmatpush1.xpose.msra.mxu0 0.0
    %2371 = vmatprep.subr.mxu0 0.0
    %2372 = vmatpush1.xpose.msra.mxu0 0.0
    %2373 = vmatprep.subr.mxu0 0.0
    %2374 = vmatpush1.xpose.msra.mxu0 0.0
    %2375 = vmatprep.subr.mxu0 0.0
    %2376 = vmatpush1.xpose.msra.mxu0 0.0
    %2377 = vmatprep.subr.mxu0 0.0
    %2378 = vmatpush1.xpose.msra.mxu0 0.0
    %2379 = vmatprep.subr.mxu0 0.0
    %2380 = vmatpush1.xpose.msra.mxu0 0.0
    %2381 = vmatprep.subr.mxu0 0.0
    %2382 = vmatpush1.xpose.msra.mxu0 0.0
    %2383 = vmatprep.subr.mxu0 0.0
    %2384 = vmatpush1.xpose.msra.mxu0 0.0
    %2385 = vmatprep.subr.mxu0 0.0
    %2386 = vmatpush1.xpose.msra.mxu0 %v2353
    %2387 = vmatprep.subr.mxu0 0.0
    %2388 = vmatpush2.xpose.msra.mxu0 0.0
    %2389 = vmatprep.subr.mxu0 0.0
    %2390 = vmatpush2.xpose.msra.mxu0 0.0
    %2391 = vmatprep.subr.mxu0 0.0
    %2392 = vmatpush2.xpose.msra.mxu0 0.0
    %2393 = vmatprep.subr.mxu0 0.0
    %2394 = vmatpush2.xpose.msra.mxu0 0.0
    %2395 = vmatprep.subr.mxu0 0.0
    %2396 = vmatpush2.xpose.msra.mxu0 0.0
    %2397 = vmatprep.subr.mxu0 0.0
    %2398 = vmatpush2.xpose.msra.mxu0 0.0
    %2399 = vmatprep.subr.mxu0 0.0
    %2400 = vmatpush2.xpose.msra.mxu0 0.0
    %2401 = vmatprep.subr.mxu0 0.0
    %2402 = vmatpush2.xpose.msra.mxu0 0.0
    %2403 = vmatprep.subr.mxu0 0.0
    %2404 = vmatpush2.xpose.msra.mxu0 0.0
    %2405 = vmatprep.subr.mxu0 0.0
    %2406 = vmatpush2.xpose.msra.mxu0 0.0
    %2407 = vmatprep.subr.mxu0 0.0
    %2408 = vmatpush2.xpose.msra.mxu0 0.0
    %2409 = vmatprep.subr.mxu0 0.0
    %2410 = vmatpush2.xpose.msra.mxu0 0.0
    %2411 = vmatprep.subr.mxu0 0.0
    %2412 = vmatpush2.xpose.msra.mxu0 0.0
    %2413 = vmatprep.subr.mxu0 0.0
    %2414 = vmatpush2.xpose.msra.mxu0 0.0
    %2415 = vmatprep.subr.mxu0 0.0
    %2416 = vmatpush2.xpose.msra.mxu0 0.0
    %2417 = vmatprep.subr.mxu0 0.0
    %2418 = vmatpush2.xpose.msra.mxu0 0.0
    %2419 = vmatprep.mubr.f32.mxu0 0.0
    %2420 = vmatmul.mubr.f32.gmra.mxu0 %v2350
    %v2421 = vpop.f32.mrf.mxu0
    %v2422 = vadd.f32 %v62, %v2421
    %v2423 = vpop.f32.mrf.mxu0
    %2424 = vdwg.mxu0
    %v2426 = vsel %vm328, %v2170, 0
    %v2429 = vsel %vm328, %v2258, 0
    %2431 = vmatprep.subr.mxu0 0.0
    %2432 = vmatpush1.xpose.msra.mxu0 0.0
    %2433 = vmatprep.subr.mxu0 0.0
    %2434 = vmatpush1.xpose.msra.mxu0 0.0
    %2435 = vmatprep.subr.mxu0 0.0
    %2436 = vmatpush1.xpose.msra.mxu0 0.0
    %2437 = vmatprep.subr.mxu0 0.0
    %2438 = vmatpush1.xpose.msra.mxu0 0.0
    %2439 = vmatprep.subr.mxu0 0.0
    %2440 = vmatpush1.xpose.msra.mxu0 0.0
    %2441 = vmatprep.subr.mxu0 0.0
    %2442 = vmatpush1.xpose.msra.mxu0 0.0
    %2443 = vmatprep.subr.mxu0 0.0
    %2444 = vmatpush1.xpose.msra.mxu0 0.0
    %2445 = vmatprep.subr.mxu0 0.0
    %2446 = vmatpush1.xpose.msra.mxu0 0.0
    %2447 = vmatprep.subr.mxu0 0.0
    %2448 = vmatpush1.xpose.msra.mxu0 0.0
    %2449 = vmatprep.subr.mxu0 0.0
    %2450 = vmatpush1.xpose.msra.mxu0 0.0
    %2451 = vmatprep.subr.mxu0 0.0
    %2452 = vmatpush1.xpose.msra.mxu0 0.0
    %2453 = vmatprep.subr.mxu0 0.0
    %2454 = vmatpush1.xpose.msra.mxu0 0.0
    %2455 = vmatprep.subr.mxu0 0.0
    %2456 = vmatpush1.xpose.msra.mxu0 0.0
    %2457 = vmatprep.subr.mxu0 0.0
    %2458 = vmatpush1.xpose.msra.mxu0 0.0
    %2459 = vmatprep.subr.mxu0 0.0
    %2460 = vmatpush1.xpose.msra.mxu0 0.0
    %2461 = vmatprep.subr.mxu0 0.0
    %2462 = vmatpush1.xpose.msra.mxu0 %v2429
    %2463 = vmatprep.subr.mxu0 0.0
    %2464 = vmatpush2.xpose.msra.mxu0 0.0
    %2465 = vmatprep.subr.mxu0 0.0
    %2466 = vmatpush2.xpose.msra.mxu0 0.0
    %2467 = vmatprep.subr.mxu0 0.0
    %2468 = vmatpush2.xpose.msra.mxu0 0.0
    %2469 = vmatprep.subr.mxu0 0.0
    %2470 = vmatpush2.xpose.msra.mxu0 0.0
    %2471 = vmatprep.subr.mxu0 0.0
    %2472 = vmatpush2.xpose.msra.mxu0 0.0
    %2473 = vmatprep.subr.mxu0 0.0
    %2474 = vmatpush2.xpose.msra.mxu0 0.0
    %2475 = vmatprep.subr.mxu0 0.0
    %2476 = vmatpush2.xpose.msra.mxu0 0.0
    %2477 = vmatprep.subr.mxu0 0.0
    %2478 = vmatpush2.xpose.msra.mxu0 0.0
    %2479 = vmatprep.subr.mxu0 0.0
    %2480 = vmatpush2.xpose.msra.mxu0 0.0
    %2481 = vmatprep.subr.mxu0 0.0
    %2482 = vmatpush2.xpose.msra.mxu0 0.0
    %2483 = vmatprep.subr.mxu0 0.0
    %2484 = vmatpush2.xpose.msra.mxu0 0.0
    %2485 = vmatprep.subr.mxu0 0.0
    %2486 = vmatpush2.xpose.msra.mxu0 0.0
    %2487 = vmatprep.subr.mxu0 0.0
    %2488 = vmatpush2.xpose.msra.mxu0 0.0
    %2489 = vmatprep.subr.mxu0 0.0
    %2490 = vmatpush2.xpose.msra.mxu0 0.0
    %2491 = vmatprep.subr.mxu0 0.0
    %2492 = vmatpush2.xpose.msra.mxu0 0.0
    %2493 = vmatprep.subr.mxu0 0.0
    %2494 = vmatpush2.xpose.msra.mxu0 0.0
    %2495 = vmatprep.mubr.f32.mxu0 0.0
    %2496 = vmatmul.mubr.f32.gmra.mxu0 %v2426
    %v2497 = vpop.f32.mrf.mxu0
    %v2498 = vadd.f32 %v62, %v2497
    %v2499 = vpop.f32.mrf.mxu0
    %2500 = vdwg.mxu0
    %v2501 = vsel %vm328, %v2422, -inf
    %2502 = vmax.xlane.f32.xlu0 %v2501
    %v2503 = vpop.xlane.xlu0 %2502
    %v2504 = vsel %vm328, %v2498, -inf
    %2505 = vmax.xlane.f32.xlu0 %v2504
    %v2506 = vpop.xlane.xlu0 %2505
    %v2507 = vsub.f32 %v2422, %v2503
    %v2508 = vsub.f32 %v2498, %v2506
    %v2509 = vmul.f32 %v2507, 1.442695
    %v2510 = vpow.pop %v2509
    %v2511 = vmul.f32 %v2508, 1.442695
    %v2512 = vpow.pop %v2511
    %v2513 = vsel %vm328, %v2510, 0.0
    %2514 = vadd.xlane.f32.xlu0 %v2513
    %v2515 = vpop.xlane.xlu0 %2514
    %v2516 = vsel %vm328, %v2512, 0.0
    %2517 = vadd.xlane.f32.xlu0 %v2516
    %v2518 = vpop.xlane.xlu0 %2517
    %v2519 = vrcp.pop %v2515
    %v2520 = vrcp.pop %v2518
    %v2521 = vmul.f32 %v2515, %v2519
    %v2522 = vmul.f32 %v2518, %v2520
    %v2523 = vsub.f32 2.0, %v2521
    %v2524 = vsub.f32 2.0, %v2522
    %v2525 = vmul.f32 %v2519, %v2523
    %v2526 = vmul.f32 %v2520, %v2524
    %v2527 = vmul.f32 %v2510, %v2525
    %v2528 = vmul.f32 %v2512, %v2526
    %v2530 = vsel %vm328, %v2527, 0
    %2532 = vmatprep.subr.mxu0 0.0
    %2533 = vmatpush1.msra.mxu0 0.0
    %2534 = vmatprep.subr.mxu0 0.0
    %2535 = vmatpush1.msra.mxu0 0.0
    %2536 = vmatprep.subr.mxu0 0.0
    %2537 = vmatpush1.msra.mxu0 0.0
    %2538 = vmatprep.subr.mxu0 0.0
    %2539 = vmatpush1.msra.mxu0 0.0
    %2540 = vmatprep.subr.mxu0 0.0
    %2541 = vmatpush1.msra.mxu0 0.0
    %2542 = vmatprep.subr.mxu0 0.0
    %2543 = vmatpush1.msra.mxu0 0.0
    %2544 = vmatprep.subr.mxu0 0.0
    %2545 = vmatpush1.msra.mxu0 0.0
    %2546 = vmatprep.subr.mxu0 0.0
    %2547 = vmatpush1.msra.mxu0 0.0
    %2548 = vmatprep.subr.mxu0 0.0
    %2549 = vmatpush1.msra.mxu0 0.0
    %2550 = vmatprep.subr.mxu0 0.0
    %2551 = vmatpush1.msra.mxu0 0.0
    %2552 = vmatprep.subr.mxu0 0.0
    %2553 = vmatpush1.msra.mxu0 0.0
    %2554 = vmatprep.subr.mxu0 0.0
    %2555 = vmatpush1.msra.mxu0 0.0
    %2556 = vmatprep.subr.mxu0 0.0
    %2557 = vmatpush1.msra.mxu0 0.0
    %2558 = vmatprep.subr.mxu0 0.0
    %2559 = vmatpush1.msra.mxu0 0.0
    %2560 = vmatprep.subr.mxu0 0.0
    %2561 = vmatpush1.msra.mxu0 0.0
    %2562 = vmatprep.subr.mxu0 0.0
    %2563 = vmatpush1.msra.mxu0 %v2341
    %2564 = vmatprep.subr.mxu0 0.0
    %2565 = vmatpush2.msra.mxu0 0.0
    %2566 = vmatprep.subr.mxu0 0.0
    %2567 = vmatpush2.msra.mxu0 0.0
    %2568 = vmatprep.subr.mxu0 0.0
    %2569 = vmatpush2.msra.mxu0 0.0
    %2570 = vmatprep.subr.mxu0 0.0
    %2571 = vmatpush2.msra.mxu0 0.0
    %2572 = vmatprep.subr.mxu0 0.0
    %2573 = vmatpush2.msra.mxu0 0.0
    %2574 = vmatprep.subr.mxu0 0.0
    %2575 = vmatpush2.msra.mxu0 0.0
    %2576 = vmatprep.subr.mxu0 0.0
    %2577 = vmatpush2.msra.mxu0 0.0
    %2578 = vmatprep.subr.mxu0 0.0
    %2579 = vmatpush2.msra.mxu0 0.0
    %2580 = vmatprep.subr.mxu0 0.0
    %2581 = vmatpush2.msra.mxu0 0.0
    %2582 = vmatprep.subr.mxu0 0.0
    %2583 = vmatpush2.msra.mxu0 0.0
    %2584 = vmatprep.subr.mxu0 0.0
    %2585 = vmatpush2.msra.mxu0 0.0
    %2586 = vmatprep.subr.mxu0 0.0
    %2587 = vmatpush2.msra.mxu0 0.0
    %2588 = vmatprep.subr.mxu0 0.0
    %2589 = vmatpush2.msra.mxu0 0.0
    %2590 = vmatprep.subr.mxu0 0.0
    %2591 = vmatpush2.msra.mxu0 0.0
    %2592 = vmatprep.subr.mxu0 0.0
    %2593 = vmatpush2.msra.mxu0 0.0
    %2594 = vmatprep.subr.mxu0 0.0
    %2595 = vmatpush2.msra.mxu0 0.0
    %2596 = vmatprep.mubr.f32.mxu0 0.0
    %2597 = vmatmul.mubr.f32.gmra.mxu0 %v2530
    %v2598 = vpop.f32.mrf.mxu0
    %v2599 = vadd.f32 0.0, %v2598
    %v2600 = vpop.f32.mrf.mxu0
    %2601 = vdwg.mxu0
    %v2603 = vsel %vm328, %v2528, 0
    %2605 = vmatprep.subr.mxu0 0.0
    %2606 = vmatpush1.msra.mxu0 0.0
    %2607 = vmatprep.subr.mxu0 0.0
    %2608 = vmatpush1.msra.mxu0 0.0
    %2609 = vmatprep.subr.mxu0 0.0
    %2610 = vmatpush1.msra.mxu0 0.0
    %2611 = vmatprep.subr.mxu0 0.0
    %2612 = vmatpush1.msra.mxu0 0.0
    %2613 = vmatprep.subr.mxu0 0.0
    %2614 = vmatpush1.msra.mxu0 0.0
    %2615 = vmatprep.subr.mxu0 0.0
    %2616 = vmatpush1.msra.mxu0 0.0
    %2617 = vmatprep.subr.mxu0 0.0
    %2618 = vmatpush1.msra.mxu0 0.0
    %2619 = vmatprep.subr.mxu0 0.0
    %2620 = vmatpush1.msra.mxu0 0.0
    %2621 = vmatprep.subr.mxu0 0.0
    %2622 = vmatpush1.msra.mxu0 0.0
    %2623 = vmatprep.subr.mxu0 0.0
    %2624 = vmatpush1.msra.mxu0 0.0
    %2625 = vmatprep.subr.mxu0 0.0
    %2626 = vmatpush1.msra.mxu0 0.0
    %2627 = vmatprep.subr.mxu0 0.0
    %2628 = vmatpush1.msra.mxu0 0.0
    %2629 = vmatprep.subr.mxu0 0.0
    %2630 = vmatpush1.msra.mxu0 0.0
    %2631 = vmatprep.subr.mxu0 0.0
    %2632 = vmatpush1.msra.mxu0 0.0
    %2633 = vmatprep.subr.mxu0 0.0
    %2634 = vmatpush1.msra.mxu0 0.0
    %2635 = vmatprep.subr.mxu0 0.0
    %2636 = vmatpush1.msra.mxu0 %v2346
    %2637 = vmatprep.subr.mxu0 0.0
    %2638 = vmatpush2.msra.mxu0 0.0
    %2639 = vmatprep.subr.mxu0 0.0
    %2640 = vmatpush2.msra.mxu0 0.0
    %2641 = vmatprep.subr.mxu0 0.0
    %2642 = vmatpush2.msra.mxu0 0.0
    %2643 = vmatprep.subr.mxu0 0.0
    %2644 = vmatpush2.msra.mxu0 0.0
    %2645 = vmatprep.subr.mxu0 0.0
    %2646 = vmatpush2.msra.mxu0 0.0
    %2647 = vmatprep.subr.mxu0 0.0
    %2648 = vmatpush2.msra.mxu0 0.0
    %2649 = vmatprep.subr.mxu0 0.0
    %2650 = vmatpush2.msra.mxu0 0.0
    %2651 = vmatprep.subr.mxu0 0.0
    %2652 = vmatpush2.msra.mxu0 0.0
    %2653 = vmatprep.subr.mxu0 0.0
    %2654 = vmatpush2.msra.mxu0 0.0
    %2655 = vmatprep.subr.mxu0 0.0
    %2656 = vmatpush2.msra.mxu0 0.0
    %2657 = vmatprep.subr.mxu0 0.0
    %2658 = vmatpush2.msra.mxu0 0.0
    %2659 = vmatprep.subr.mxu0 0.0
    %2660 = vmatpush2.msra.mxu0 0.0
    %2661 = vmatprep.subr.mxu0 0.0
    %2662 = vmatpush2.msra.mxu0 0.0
    %2663 = vmatprep.subr.mxu0 0.0
    %2664 = vmatpush2.msra.mxu0 0.0
    %2665 = vmatprep.subr.mxu0 0.0
    %2666 = vmatpush2.msra.mxu0 0.0
    %2667 = vmatprep.subr.mxu0 0.0
    %2668 = vmatpush2.msra.mxu0 0.0
    %2669 = vmatprep.mubr.f32.mxu0 0.0
    %2670 = vmatmul.mubr.f32.gmra.mxu0 %v2603
    %v2671 = vpop.f32.mrf.mxu0
    %v2672 = vadd.f32 0.0, %v2671
    %v2673 = vpop.f32.mrf.mxu0
    %2674 = vdwg.mxu0
    %s2675 = scalar_lea.vmem %s8, 24
    %v2676 = vld [vmem:[%s2675] sm:$0xff]
    %v2678 = vsel %vm328, %v2599, 0
    %v2681 = vsel %vm328, %v2672, 0
    %2683 = vmatprep.subr.mxu0 0.0
    %2684 = vmatpush1.msra.mxu0 0.0
    %2685 = vmatprep.subr.mxu0 0.0
    %2686 = vmatpush1.msra.mxu0 0.0
    %2687 = vmatprep.subr.mxu0 0.0
    %2688 = vmatpush1.msra.mxu0 0.0
    %2689 = vmatprep.subr.mxu0 0.0
    %2690 = vmatpush1.msra.mxu0 0.0
    %2691 = vmatprep.subr.mxu0 0.0
    %2692 = vmatpush1.msra.mxu0 0.0
    %2693 = vmatprep.subr.mxu0 0.0
    %2694 = vmatpush1.msra.mxu0 0.0
    %2695 = vmatprep.subr.mxu0 0.0
    %2696 = vmatpush1.msra.mxu0 0.0
    %2697 = vmatprep.subr.mxu0 0.0
    %2698 = vmatpush1.msra.mxu0 0.0
    %2699 = vmatprep.subr.mxu0 0.0
    %2700 = vmatpush1.msra.mxu0 0.0
    %2701 = vmatprep.subr.mxu0 0.0
    %2702 = vmatpush1.msra.mxu0 0.0
    %2703 = vmatprep.subr.mxu0 0.0
    %2704 = vmatpush1.msra.mxu0 0.0
    %2705 = vmatprep.subr.mxu0 0.0
    %2706 = vmatpush1.msra.mxu0 0.0
    %2707 = vmatprep.subr.mxu0 0.0
    %2708 = vmatpush1.msra.mxu0 0.0
    %2709 = vmatprep.subr.mxu0 0.0
    %2710 = vmatpush1.msra.mxu0 0.0
    %2711 = vmatprep.subr.mxu0 0.0
    %2712 = vmatpush1.msra.mxu0 0.0
    %2713 = vmatprep.subr.mxu0 0.0
    %2714 = vmatpush1.msra.mxu0 %v2676
    %2715 = vmatprep.subr.mxu0 0.0
    %2716 = vmatpush2.msra.mxu0 0.0
    %2717 = vmatprep.subr.mxu0 0.0
    %2718 = vmatpush2.msra.mxu0 0.0
    %2719 = vmatprep.subr.mxu0 0.0
    %2720 = vmatpush2.msra.mxu0 0.0
    %2721 = vmatprep.subr.mxu0 0.0
    %2722 = vmatpush2.msra.mxu0 0.0
    %2723 = vmatprep.subr.mxu0 0.0
    %2724 = vmatpush2.msra.mxu0 0.0
    %2725 = vmatprep.subr.mxu0 0.0
    %2726 = vmatpush2.msra.mxu0 0.0
    %2727 = vmatprep.subr.mxu0 0.0
    %2728 = vmatpush2.msra.mxu0 0.0
    %2729 = vmatprep.subr.mxu0 0.0
    %2730 = vmatpush2.msra.mxu0 0.0
    %2731 = vmatprep.subr.mxu0 0.0
    %2732 = vmatpush2.msra.mxu0 0.0
    %2733 = vmatprep.subr.mxu0 0.0
    %2734 = vmatpush2.msra.mxu0 0.0
    %2735 = vmatprep.subr.mxu0 0.0
    %2736 = vmatpush2.msra.mxu0 0.0
    %2737 = vmatprep.subr.mxu0 0.0
    %2738 = vmatpush2.msra.mxu0 0.0
    %2739 = vmatprep.subr.mxu0 0.0
    %2740 = vmatpush2.msra.mxu0 0.0
    %2741 = vmatprep.subr.mxu0 0.0
    %2742 = vmatpush2.msra.mxu0 0.0
    %2743 = vmatprep.subr.mxu0 0.0
    %2744 = vmatpush2.msra.mxu0 0.0
    %2745 = vmatprep.subr.mxu0 0.0
    %2746 = vmatpush2.msra.mxu0 0.0
    %2747 = vmatprep.mubr.f32.mxu0 0.0
    %2748 = vmatmul.mubr.f32.gmra.mxu0 %v2678
    %v2749 = vpop.f32.mrf.mxu0
    %v2750 = vadd.f32 0.0, %v2749
    %v2751 = vpop.f32.mrf.mxu0
    %2752 = vmatprep.mubr.f32.mxu0 0.0
    %2753 = vmatmul.mubr.f32.gmra.mxu0 %v2681
    %v2754 = vpop.f32.mrf.mxu0
    %v2755 = vadd.f32 0.0, %v2754
    %v2756 = vpop.f32.mrf.mxu0
    %2757 = vdwg.mxu0
    %v2758 = vadd.f32 %v2083, %v2750
    %v2759 = vadd.f32 %v2084, %v2755
    %v2760 = vld [vmem:[%s9] sm:$0x1]
    %v2762 = vlaneseq
    %v2763 = vshrl.u32 %v2762, 7
    %v2764 = vsub.s32 0, %v2763
    %v2765 = vrot.slane %v2760, %v2764
    %v2767 = vadd.f32 %v2758, %v2765
    %v2768 = vadd.f32 %v2759, %v2765
    %v2769 = vadd.f32 %v60, %v2767
    %v2770 = vadd.f32 %v61, %v2768
    %v2771 = vld [vmem:[%s10] sm:$0x1]
    %v2772 = vld [vmem:[%s11] sm:$0x1]
    %v2773 = vsel %vm74, %v2769, 0.0
    %2774 = vadd.xlane.f32.xlu0 %v2773
    %v2775 = vpop.xlane.xlu0 %2774
    %v2776 = vsel %vm74, %v2770, 0.0
    %2777 = vadd.xlane.f32.xlu0 %v2776
    %v2778 = vpop.xlane.xlu0 %2777
    %v2779 = vrcp.pop 32.0
    %v2780 = vmul.f32 %v2775, %v2779
    %v2781 = vmul.f32 %v2778, %v2779
    %v2782 = vsub.f32 %v2769, %v2780
    %v2783 = vsub.f32 %v2770, %v2781
    %v2784 = vmul.f32 %v2782, %v2782
    %v2785 = vmul.f32 %v2783, %v2783
    %v2786 = vsel %vm74, %v2784, 0.0
    %2787 = vadd.xlane.f32.xlu0 %v2786
    %v2788 = vpop.xlane.xlu0 %2787
    %v2789 = vsel %vm74, %v2785, 0.0
    %2790 = vadd.xlane.f32.xlu0 %v2789
    %v2791 = vpop.xlane.xlu0 %2790
    %v2792 = vmul.f32 %v2788, %v2779
    %v2793 = vmul.f32 %v2791, %v2779
    %v2794 = vadd.f32 %v2792, 1e-05
    %v2795 = vadd.f32 %v2793, 1e-05
    %v2796 = vrsqrt.pop %v2794
    %v2797 = vrsqrt.pop %v2795
    %v2798 = vmul.f32 %v2782, %v2796
    %v2799 = vmul.f32 %v2783, %v2797
    %v2801 = vlaneseq
    %v2802 = vshrl.u32 %v2801, 7
    %v2803 = vsub.s32 0, %v2802
    %v2804 = vrot.slane %v2771, %v2803
    %v2806 = vmul.f32 %v2798, %v2804
    %v2807 = vmul.f32 %v2799, %v2804
    %v2809 = vlaneseq
    %v2810 = vshrl.u32 %v2809, 7
    %v2811 = vsub.s32 0, %v2810
    %v2812 = vrot.slane %v2772, %v2811
    %v2814 = vadd.f32 %v2806, %v2812
    %v2815 = vadd.f32 %v2807, %v2812
    %v2816 = vld [vmem:[%s12] sm:$0xff]
    %v2817 = vld [vmem:[%s12 + $0x8] sm:$0xff]
    %v2818 = vld [vmem:[%s12 + $0x10] sm:$0xff]
    %v2819 = vld [vmem:[%s12 + $0x18] sm:$0xff]
    %v2820 = vld [vmem:[%s13] sm:$0x1]
    %v2822 = vlaneseq
    %v2823 = vshrl.u32 %v2822, 7
    %v2824 = vsub.s32 0, %v2823
    %v2825 = vrot.slane %v2820, %v2824
    %v2828 = vsel %vm74, %v2814, 0
    %v2831 = vsel %vm74, %v2815, 0
    %2833 = vmatprep.subr.mxu0 0.0
    %2834 = vmatpush1.msra.mxu0 0.0
    %2835 = vmatprep.subr.mxu0 0.0
    %2836 = vmatpush1.msra.mxu0 0.0
    %2837 = vmatprep.subr.mxu0 0.0
    %2838 = vmatpush1.msra.mxu0 0.0
    %2839 = vmatprep.subr.mxu0 0.0
    %2840 = vmatpush1.msra.mxu0 0.0
    %2841 = vmatprep.subr.mxu0 0.0
    %2842 = vmatpush1.msra.mxu0 0.0
    %2843 = vmatprep.subr.mxu0 0.0
    %2844 = vmatpush1.msra.mxu0 0.0
    %2845 = vmatprep.subr.mxu0 0.0
    %2846 = vmatpush1.msra.mxu0 0.0
    %2847 = vmatprep.subr.mxu0 0.0
    %2848 = vmatpush1.msra.mxu0 0.0
    %2849 = vmatprep.subr.mxu0 0.0
    %2850 = vmatpush1.msra.mxu0 0.0
    %2851 = vmatprep.subr.mxu0 0.0
    %2852 = vmatpush1.msra.mxu0 0.0
    %2853 = vmatprep.subr.mxu0 0.0
    %2854 = vmatpush1.msra.mxu0 0.0
    %2855 = vmatprep.subr.mxu0 0.0
    %2856 = vmatpush1.msra.mxu0 0.0
    %2857 = vmatprep.subr.mxu0 0.0
    %2858 = vmatpush1.msra.mxu0 %v2819
    %2859 = vmatprep.subr.mxu0 0.0
    %2860 = vmatpush1.msra.mxu0 %v2818
    %2861 = vmatprep.subr.mxu0 0.0
    %2862 = vmatpush1.msra.mxu0 %v2817
    %2863 = vmatprep.subr.mxu0 0.0
    %2864 = vmatpush1.msra.mxu0 %v2816
    %2865 = vmatprep.subr.mxu0 0.0
    %2866 = vmatpush2.msra.mxu0 0.0
    %2867 = vmatprep.subr.mxu0 0.0
    %2868 = vmatpush2.msra.mxu0 0.0
    %2869 = vmatprep.subr.mxu0 0.0
    %2870 = vmatpush2.msra.mxu0 0.0
    %2871 = vmatprep.subr.mxu0 0.0
    %2872 = vmatpush2.msra.mxu0 0.0
    %2873 = vmatprep.subr.mxu0 0.0
    %2874 = vmatpush2.msra.mxu0 0.0
    %2875 = vmatprep.subr.mxu0 0.0
    %2876 = vmatpush2.msra.mxu0 0.0
    %2877 = vmatprep.subr.mxu0 0.0
    %2878 = vmatpush2.msra.mxu0 0.0
    %2879 = vmatprep.subr.mxu0 0.0
    %2880 = vmatpush2.msra.mxu0 0.0
    %2881 = vmatprep.subr.mxu0 0.0
    %2882 = vmatpush2.msra.mxu0 0.0
    %2883 = vmatprep.subr.mxu0 0.0
    %2884 = vmatpush2.msra.mxu0 0.0
    %2885 = vmatprep.subr.mxu0 0.0
    %2886 = vmatpush2.msra.mxu0 0.0
    %2887 = vmatprep.subr.mxu0 0.0
    %2888 = vmatpush2.msra.mxu0 0.0
    %2889 = vmatprep.subr.mxu0 0.0
    %2890 = vmatpush2.msra.mxu0 0.0
    %2891 = vmatprep.subr.mxu0 0.0
    %2892 = vmatpush2.msra.mxu0 0.0
    %2893 = vmatprep.subr.mxu0 0.0
    %2894 = vmatpush2.msra.mxu0 0.0
    %2895 = vmatprep.subr.mxu0 0.0
    %2896 = vmatpush2.msra.mxu0 0.0
    %2897 = vmatprep.mubr.f32.mxu0 0.0
    %2898 = vmatmul.mubr.f32.gmra.mxu0 %v2828
    %v2899 = vpop.f32.mrf.mxu0
    %v2900 = vadd.f32 %v2825, %v2899
    %v2901 = vpop.f32.mrf.mxu0
    %2902 = vmatprep.mubr.f32.mxu0 0.0
    %2903 = vmatmul.mubr.f32.gmra.mxu0 %v2831
    %v2904 = vpop.f32.mrf.mxu0
    %v2905 = vadd.f32 %v2825, %v2904
    %v2906 = vpop.f32.mrf.mxu0
    %2907 = vdwg.mxu0
    %v2908 = vmax.f32 %v2900, 0.0
    %v2909 = vmax.f32 %v2905, 0.0
    %v2910 = vld [vmem:[%s14] sm:$0xff]
    %v2911 = vld [vmem:[%s14 + $0x8] sm:$0xff]
    %v2912 = vld [vmem:[%s14 + $0x10] sm:$0xff]
    %v2913 = vld [vmem:[%s14 + $0x18] sm:$0xff]
    %v2914 = vld [vmem:[%s15] sm:$0x1]
    %v2916 = vlaneseq
    %v2917 = vshrl.u32 %v2916, 7
    %v2918 = vsub.s32 0, %v2917
    %v2919 = vrot.slane %v2914, %v2918
    %v2922 = vsel %vm74, %v2908, 0
    %v2925 = vsel %vm74, %v2909, 0
    %2927 = vmatprep.subr.mxu0 0.0
    %2928 = vmatpush1.msra.mxu0 0.0
    %2929 = vmatprep.subr.mxu0 0.0
    %2930 = vmatpush1.msra.mxu0 0.0
    %2931 = vmatprep.subr.mxu0 0.0
    %2932 = vmatpush1.msra.mxu0 0.0
    %2933 = vmatprep.subr.mxu0 0.0
    %2934 = vmatpush1.msra.mxu0 0.0
    %2935 = vmatprep.subr.mxu0 0.0
    %2936 = vmatpush1.msra.mxu0 0.0
    %2937 = vmatprep.subr.mxu0 0.0
    %2938 = vmatpush1.msra.mxu0 0.0
    %2939 = vmatprep.subr.mxu0 0.0
    %2940 = vmatpush1.msra.mxu0 0.0
    %2941 = vmatprep.subr.mxu0 0.0
    %2942 = vmatpush1.msra.mxu0 0.0
    %2943 = vmatprep.subr.mxu0 0.0
    %2944 = vmatpush1.msra.mxu0 0.0
    %2945 = vmatprep.subr.mxu0 0.0
    %2946 = vmatpush1.msra.mxu0 0.0
    %2947 = vmatprep.subr.mxu0 0.0
    %2948 = vmatpush1.msra.mxu0 0.0
    %2949 = vmatprep.subr.mxu0 0.0
    %2950 = vmatpush1.msra.mxu0 0.0
    %2951 = vmatprep.subr.mxu0 0.0
    %2952 = vmatpush1.msra.mxu0 %v2913
    %2953 = vmatprep.subr.mxu0 0.0
    %2954 = vmatpush1.msra.mxu0 %v2912
    %2955 = vmatprep.subr.mxu0 0.0
    %2956 = vmatpush1.msra.mxu0 %v2911
    %2957 = vmatprep.subr.mxu0 0.0
    %2958 = vmatpush1.msra.mxu0 %v2910
    %2959 = vmatprep.subr.mxu0 0.0
    %2960 = vmatpush2.msra.mxu0 0.0
    %2961 = vmatprep.subr.mxu0 0.0
    %2962 = vmatpush2.msra.mxu0 0.0
    %2963 = vmatprep.subr.mxu0 0.0
    %2964 = vmatpush2.msra.mxu0 0.0
    %2965 = vmatprep.subr.mxu0 0.0
    %2966 = vmatpush2.msra.mxu0 0.0
    %2967 = vmatprep.subr.mxu0 0.0
    %2968 = vmatpush2.msra.mxu0 0.0
    %2969 = vmatprep.subr.mxu0 0.0
    %2970 = vmatpush2.msra.mxu0 0.0
    %2971 = vmatprep.subr.mxu0 0.0
    %2972 = vmatpush2.msra.mxu0 0.0
    %2973 = vmatprep.subr.mxu0 0.0
    %2974 = vmatpush2.msra.mxu0 0.0
    %2975 = vmatprep.subr.mxu0 0.0
    %2976 = vmatpush2.msra.mxu0 0.0
    %2977 = vmatprep.subr.mxu0 0.0
    %2978 = vmatpush2.msra.mxu0 0.0
    %2979 = vmatprep.subr.mxu0 0.0
    %2980 = vmatpush2.msra.mxu0 0.0
    %2981 = vmatprep.subr.mxu0 0.0
    %2982 = vmatpush2.msra.mxu0 0.0
    %2983 = vmatprep.subr.mxu0 0.0
    %2984 = vmatpush2.msra.mxu0 0.0
    %2985 = vmatprep.subr.mxu0 0.0
    %2986 = vmatpush2.msra.mxu0 0.0
    %2987 = vmatprep.subr.mxu0 0.0
    %2988 = vmatpush2.msra.mxu0 0.0
    %2989 = vmatprep.subr.mxu0 0.0
    %2990 = vmatpush2.msra.mxu0 0.0
    %2991 = vmatprep.mubr.f32.mxu0 0.0
    %2992 = vmatmul.mubr.f32.gmra.mxu0 %v2922
    %v2993 = vpop.f32.mrf.mxu0
    %v2994 = vadd.f32 %v2919, %v2993
    %v2995 = vpop.f32.mrf.mxu0
    %2996 = vmatprep.mubr.f32.mxu0 0.0
    %2997 = vmatmul.mubr.f32.gmra.mxu0 %v2925
    %v2998 = vpop.f32.mrf.mxu0
    %v2999 = vadd.f32 %v2919, %v2998
    %v3000 = vpop.f32.mrf.mxu0
    %3001 = vdwg.mxu0
    %v3002 = vadd.f32 %v2814, %v2994
    %v3003 = vadd.f32 %v2815, %v2999
    %v3004 = vld [vmem:[%s16] sm:$0x1]
    %v3005 = vld [vmem:[%s17] sm:$0x1]
    %v3006 = vsel %vm74, %v3002, 0.0
    %3007 = vadd.xlane.f32.xlu0 %v3006
    %v3008 = vpop.xlane.xlu0 %3007
    %v3009 = vsel %vm74, %v3003, 0.0
    %3010 = vadd.xlane.f32.xlu0 %v3009
    %v3011 = vpop.xlane.xlu0 %3010
    %v3012 = vmul.f32 %v3008, %v2779
    %v3013 = vmul.f32 %v3011, %v2779
    %v3014 = vsub.f32 %v3002, %v3012
    %v3015 = vsub.f32 %v3003, %v3013
    %v3016 = vmul.f32 %v3014, %v3014
    %v3017 = vmul.f32 %v3015, %v3015
    %v3018 = vsel %vm74, %v3016, 0.0
    %3019 = vadd.xlane.f32.xlu0 %v3018
    %v3020 = vpop.xlane.xlu0 %3019
    %v3021 = vsel %vm74, %v3017, 0.0
    %3022 = vadd.xlane.f32.xlu0 %v3021
    %v3023 = vpop.xlane.xlu0 %3022
    %v3024 = vmul.f32 %v3020, %v2779
    %v3025 = vmul.f32 %v3023, %v2779
    %v3026 = vadd.f32 %v3024, 1e-05
    %v3027 = vadd.f32 %v3025, 1e-05
    %v3028 = vrsqrt.pop %v3026
    %v3029 = vrsqrt.pop %v3027
    %v3030 = vmul.f32 %v3014, %v3028
    %v3031 = vmul.f32 %v3015, %v3029
    %v3033 = vlaneseq
    %v3034 = vshrl.u32 %v3033, 7
    %v3035 = vsub.s32 0, %v3034
    %v3036 = vrot.slane %v3004, %v3035
    %v3038 = vmul.f32 %v3030, %v3036
    %v3039 = vmul.f32 %v3031, %v3036
    %v3041 = vlaneseq
    %v3042 = vshrl.u32 %v3041, 7
    %v3043 = vsub.s32 0, %v3042
    %v3044 = vrot.slane %v3005, %v3043
    %v3046 = vadd.f32 %v3038, %v3044
    %v3047 = vadd.f32 %v3039, %v3044
    %3048 = vst.msk [vmem:[#allocation2] sm:$0xff] %vm74, %v3046
    %3049 = vst.msk [vmem:[#allocation2 + $0x8] sm:$0xff] %vm74, %v3047
    // Predicated region
    $region74: #{tpu_custom_call.1} parent=1 // pred_check
      _
    $region75: #{tpu_custom_call.1} parent=1 // pred_check_branch
      %3051 = sbr.rel (0) target = $region77
    $region76: #{tpu_custom_call.1} parent=1 // pred_region
      %s3053 = ssub.s32 256, 256
      %3054 = vsyncadd [#allocation3], %s3053
      %s3055 = sshll.u32 [#allocation2], 4
      %s3056 = int_to_ptr.vmem [resolvable:$true] %s3055
      %3061 = dma.vmem_to_hbm [thread:$0]  %s3056, 256, %s18, [#allocation3], 128, 128, 8
    $region77: #{tpu_custom_call.1} parent=1 // pred_fallthru
      _
    // Predicated region
    $region78: #{tpu_custom_call.1} parent=1 // pred_check
      _
    $region79: #{tpu_custom_call.1} parent=1 // pred_check_branch
      %3063 = sbr.rel (0) target = $region81
    $region80: #{tpu_custom_call.1} parent=1 // pred_region
      %3064 = dma.done [#allocation3], 256
    $region81: #{tpu_custom_call.1} parent=1 // pred_fallthru
      _
    %3065 = vsyncpa [#allocation3], 1

</llo_original>
